<compile_context>
chip_gen: v7x
topology: tpu7x:2x2x1
jax: 0.10.0
libtpu: 0.0.40
codegen_flags: <defaults>
</compile_context>

<pallas_src>
import jax
import jax.numpy as jnp
from jax import lax
from jax.experimental import pallas as pl
from jax.experimental.pallas import tpu as pltpu

_LANE = 128


def _round_up(x, m):
    return (x + m - 1) // m * m


def _make_resblock_kernel(Ho, Wo, TH, Cin_p, Cout_p, stride, has_proj):
    R = TH + 2                    # conv1 rows computed per tile (1-row halo each side)
    K1 = 3 * Cin_p
    K2 = 3 * Cout_p
    PAD_TOP = 1 + stride          # top padding applied to the input by the wrapper

    def body(x_ref, w1_ref, s1_ref, b1_ref, w2_ref, s2_ref, b2_ref,
             wsc_ref, ssc_ref, bsc_ref, o_ref, h1_scr):
        t = pl.program_id(1)
        r0 = pl.multiple_of(t * TH, TH)       # first output row of this tile

        # ------- conv1 (3x3, stride) + BN1 + ReLU over rows r0-1 .. r0+TH -------
        if stride == 1:
            u = x_ref[pl.ds(r0, R + 2), :, :]            # (R+2, W+2, Cin_p) bf16

            def tap1(dy, dx):
                return u[dy:dy + R, dx:dx + Wo, :]
        else:
            # TODO(synk): stride>1 path (strided pl.ds ref loads) is implemented
            # but not exercised by the harness below.
            def tap1(dy, dx):
                return x_ref[pl.ds(r0 * stride + dy, R, stride=stride),
                             pl.ds(dx, Wo, stride=stride), :]

        acc1 = jnp.zeros((R * Wo, Cout_p), jnp.float32)
        for dy in range(3):
            # fold the 3 dx taps into the contraction dim: K = 3*Cin_p
            patch = jnp.concatenate([tap1(dy, 0), tap1(dy, 1), tap1(dy, 2)], axis=-1)
            acc1 = acc1 + jnp.dot(patch.reshape(R * Wo, K1), w1_ref[dy],
                                  preferred_element_type=jnp.float32)
        h1 = jnp.maximum(acc1 * s1_ref[...] + b1_ref[...], 0.0)
        h1 = h1.reshape(R, Wo, Cout_p)
        # halo rows outside the real conv1 output act as conv2's zero padding
        gy = r0 - 1 + lax.broadcasted_iota(jnp.int32, (R, 1, 1), 0)
        h1 = jnp.where((gy >= 0) & (gy < Ho), h1, 0.0)

        # Stage conv1 output in VMEM (bf16).  Only the two 1-wide W-border
        # columns get zeros; the interior is fully overwritten every step.
        h1_scr[:, 1:Wo + 1, :] = h1.astype(jnp.bfloat16)
        zcol = jnp.zeros((R, 1, Cout_p), jnp.bfloat16)
        h1_scr[:, 0:1, :] = zcol
        h1_scr[:, Wo + 1:Wo + 2, :] = zcol

        # ------------------- conv2 (3x3, stride 1) + BN2 -------------------
        acc2 = jnp.zeros((TH * Wo, Cout_p), jnp.float32)
        for dy in range(3):
            patch = jnp.concatenate(
                [h1_scr[dy:dy + TH, dx:dx + Wo, :] for dx in range(3)], axis=-1)
            acc2 = acc2 + jnp.dot(patch.reshape(TH * Wo, K2), w2_ref[dy],
                                  preferred_element_type=jnp.float32)
        out2 = acc2 * s2_ref[...] + b2_ref[...]

        # ----------------------------- shortcut -----------------------------
        if stride == 1:
            xs = x_ref[pl.ds(r0 + PAD_TOP, TH), pl.ds(1, Wo), :]
        else:
            xs = x_ref[pl.ds(r0 * stride + PAD_TOP, TH, stride=stride),
                       pl.ds(1, Wo, stride=stride), :]
        if has_proj:
            sc = jnp.dot(xs.reshape(TH * Wo, Cin_p), wsc_ref[...],
                         preferred_element_type=jnp.float32)
            sc = sc * ssc_ref[...] + bsc_ref[...]
        else:
            sc = xs.astype(jnp.float32).reshape(TH * Wo, Cout_p)

        o_ref[...] = jnp.maximum(out2 + sc, 0.0).reshape(TH, Wo, Cout_p)

    if has_proj:
        return body

    def body_identity(x_ref, w1_ref, s1_ref, b1_ref, w2_ref, s2_ref, b2_ref,
                      o_ref, h1_scr):
        return body(x_ref, w1_ref, s1_ref, b1_ref, w2_ref, s2_ref, b2_ref,
                    None, None, None, o_ref, h1_scr)

    return body_identity


def residual_block_forward(x_nchw, params, *, stride=1):
    """x_nchw: (N, Cin, H, W) f32 -> (N, Cout, Ho, Wo) f32 (eval-mode BN)."""
    N, Cin, H, W = x_nchw.shape
    Cout = params["w1"].shape[0]
    has_proj = (stride != 1) or (Cin != Cout)
    eps = 1e-5

    Ho = (H + 2 - 3) // stride + 1
    Wo = (W + 2 - 3) // stride + 1
    # Output-row tile: 8 keeps the per-tile working set small and, for the test
    # shapes, exercises the multi-tile halo path.
    TH = 8 if Ho % 8 == 0 else Ho

    Cin_p = _round_up(Cin, _LANE)
    Cout_p = _round_up(Cout, _LANE)

    def bn_fold(name):
        g = params[f"{name}_gamma"].astype(jnp.float32)
        b = params[f"{name}_beta"].astype(jnp.float32)
        m = params[f"{name}_mean"].astype(jnp.float32)
        v = params[f"{name}_var"].astype(jnp.float32)
        s = g / jnp.sqrt(v + eps)
        off = b - m * s
        pad = (0, Cout_p - Cout)
        return jnp.pad(s, pad).reshape(1, Cout_p), jnp.pad(off, pad).reshape(1, Cout_p)

    def prep_w3x3(w, cin, cin_p):
        w = jnp.transpose(w, (2, 3, 1, 0))                       # OIHW -> HWIO
        w = jnp.pad(w, ((0, 0), (0, 0), (0, cin_p - cin), (0, Cout_p - Cout)))
        # fold dx into the contraction dim: (3, 3*cin_p, Cout_p)
        return w.reshape(3, 3 * cin_p, Cout_p).astype(jnp.bfloat16)

    s1, b1 = bn_fold("bn1")
    s2, b2 = bn_fold("bn2")
    w1 = prep_w3x3(params["w1"], Cin, Cin_p)
    w2 = prep_w3x3(params["w2"], Cout, Cout_p)

    # NCHW -> NHWC, pad spatial dims (conv padding + row-tile halo), pad channels
    # to a lane multiple, cast matmul inputs to bf16 (VPU math stays f32).
    pad_top, pad_bot = 1 + stride, 1 + 2 * stride
    x = jnp.transpose(x_nchw, (0, 2, 3, 1)).astype(jnp.float32)
    xpad = jnp.pad(x, ((0, 0), (pad_top, pad_bot), (1, stride), (0, Cin_p - Cin)))
    xpad = xpad.astype(jnp.bfloat16)
    Hp, Wp = H + pad_top + pad_bot, W + 1 + stride

    kernel = _make_resblock_kernel(Ho, Wo, TH, Cin_p, Cout_p, stride, has_proj)

    def full_spec(shape):
        rank = len(shape)
        return pl.BlockSpec(shape, lambda n, t, _r=rank: (0,) * _r)

    in_specs = [
        pl.BlockSpec((None, Hp, Wp, Cin_p), lambda n, t: (n, 0, 0, 0)),
        full_spec((3, 3 * Cin_p, Cout_p)),
        full_spec((1, Cout_p)), full_spec((1, Cout_p)),
        full_spec((3, 3 * Cout_p, Cout_p)),
        full_spec((1, Cout_p)), full_spec((1, Cout_p)),
    ]
    args = [xpad, w1, s1, b1, w2, s2, b2]
    if has_proj:
        wsc = jnp.transpose(params["wsc"], (2, 3, 1, 0))[0, 0]   # (Cin, Cout)
        wsc = jnp.pad(wsc, ((0, Cin_p - Cin), (0, Cout_p - Cout))).astype(jnp.bfloat16)
        ssc, bsc = bn_fold("bnsc")
        in_specs += [full_spec((Cin_p, Cout_p)),
                     full_spec((1, Cout_p)), full_spec((1, Cout_p))]
        args += [wsc, ssc, bsc]

    # Advisory cost hint for XLA scheduling around the custom call.
    flops = 2 * N * Ho * Wo * (9 * Cin_p * Cout_p + 9 * Cout_p * Cout_p
                               + (Cin_p * Cout_p if has_proj else 0))
    bytes_accessed = (xpad.size * 2 + w1.size * 2 + w2.size * 2
                      + N * Ho * Wo * Cout_p * 4)
    cost = pl.CostEstimate(flops=flops, transcendentals=0,
                           bytes_accessed=bytes_accessed)

    out_nhwc = pl.pallas_call(
        kernel,
        out_shape=jax.ShapeDtypeStruct((N, Ho, Wo, Cout_p), jnp.float32),
        grid=(N, Ho // TH),
        in_specs=in_specs,
        out_specs=pl.BlockSpec((None, TH, Wo, Cout_p), lambda n, t: (n, t, 0, 0)),
        scratch_shapes=[pltpu.VMEM((TH + 2, Wo + 2, Cout_p), jnp.bfloat16)],
        compiler_params=pltpu.CompilerParams(
            dimension_semantics=("parallel", "parallel"),
            vmem_limit_bytes=64 * 1024 * 1024),
        cost_estimate=cost,
    )(*args)

    return jnp.transpose(out_nhwc[..., :Cout], (0, 3, 1, 2))


def _reference(x_nchw, params, *, stride=1):
    """Pure-JAX reference (eval-mode BN, bf16 matmul inputs like the kernel)."""
    eps = 1e-5

    def conv(x, w, s):
        pad = (w.shape[2] - 1) // 2
        return lax.conv_general_dilated(
            x.astype(jnp.bfloat16),
            jnp.transpose(w, (2, 3, 1, 0)).astype(jnp.bfloat16),
            (s, s), padding=[(pad, pad), (pad, pad)],
            dimension_numbers=("NHWC", "HWIO", "NHWC"),
            preferred_element_type=jnp.float32)

    def bn(x, name):
        g = params[f"{name}_gamma"]
        b = params[f"{name}_beta"]
        m = params[f"{name}_mean"]
        v = params[f"{name}_var"]
        return (x - m) / jnp.sqrt(v + eps) * g + b

    x = jnp.transpose(x_nchw, (0, 2, 3, 1)).astype(jnp.float32)
    out = jax.nn.relu(bn(conv(x, params["w1"], stride), "bn1"))
    out = bn(conv(out, params["w2"], 1), "bn2")
    Cin, Cout = x.shape[-1], params["w1"].shape[0]
    if stride != 1 or Cin != Cout:
        sc = bn(conv(x, params["wsc"], stride), "bnsc")
    else:
        sc = x.astype(jnp.bfloat16).astype(jnp.float32)
    return jnp.transpose(jax.nn.relu(out + sc), (0, 3, 1, 2))


def init_params(key, Cin, Cout, stride):
    ks = jax.random.split(key, 12)
    p = {
        "w1": jax.random.normal(ks[0], (Cout, Cin, 3, 3), jnp.float32) * 0.1,
        "w2": jax.random.normal(ks[1], (Cout, Cout, 3, 3), jnp.float32) * 0.1,
        "bn1_gamma": jax.random.uniform(ks[2], (Cout,), minval=0.5, maxval=1.5),
        "bn1_beta": jax.random.normal(ks[3], (Cout,)) * 0.1,
        "bn1_mean": jax.random.normal(ks[4], (Cout,)) * 0.1,
        "bn1_var": jax.random.uniform(ks[5], (Cout,), minval=0.5, maxval=1.5),
        "bn2_gamma": jax.random.uniform(ks[6], (Cout,), minval=0.5, maxval=1.5),
        "bn2_beta": jax.random.normal(ks[7], (Cout,)) * 0.1,
        "bn2_mean": jax.random.normal(ks[8], (Cout,)) * 0.1,
        "bn2_var": jax.random.uniform(ks[9], (Cout,), minval=0.5, maxval=1.5),
    }
    if stride != 1 or Cin != Cout:
        kk = jax.random.split(ks[11], 4)
        p["wsc"] = jax.random.normal(ks[10], (Cout, Cin, 1, 1), jnp.float32) * 0.1
        p["bnsc_gamma"] = jax.random.uniform(kk[0], (Cout,), minval=0.5, maxval=1.5)
        p["bnsc_beta"] = jax.random.normal(kk[1], (Cout,)) * 0.1
        p["bnsc_mean"] = jax.random.normal(kk[2], (Cout,)) * 0.1
        p["bnsc_var"] = jax.random.uniform(kk[3], (Cout,), minval=0.5, maxval=1.5)
    return p


if __name__ == "__main__":
    key = jax.random.PRNGKey(0)
    kx, kp1, kp2 = jax.random.split(key, 3)

    x = jax.random.normal(kx, (2, 4, 16, 16), jnp.float32)

    # Case 1: identity shortcut (in_channels == out_channels, stride=1)
    p1 = init_params(kp1, 4, 4, 1)
    y1 = jax.block_until_ready(residual_block_forward(x, p1, stride=1))
    r1 = _reference(x, p1, stride=1)
    assert y1.shape == (2, 4, 16, 16)
    assert jnp.allclose(y1, r1, atol=2e-2, rtol=2e-2), "identity-shortcut mismatch"

    # Case 2: projection shortcut (in_channels != out_channels -> 1x1 conv + BN)
    p2 = init_params(kp2, 4, 8, 1)
    y2 = jax.block_until_ready(residual_block_forward(x, p2, stride=1))
    r2 = _reference(x, p2, stride=1)
    assert y2.shape == (2, 8, 16, 16)
    assert jnp.allclose(y2, r2, atol=2e-2, rtol=2e-2), "projection-shortcut mismatch"

    print("KERNEL_OK")
</pallas_src>

<mosaic_0001>
module attributes {stable_mosaic.version = 11 : i64} {
  func.func @body_identity(%arg0: i32, %arg1: i32, %arg2: memref<1x21x18x128xbf16, #tpu.memory_space<vmem>>, %arg3: memref<3x384x128xbf16, #tpu.memory_space<vmem>>, %arg4: memref<1x128xf32, #tpu.memory_space<vmem>>, %arg5: memref<1x128xf32, #tpu.memory_space<vmem>>, %arg6: memref<3x384x128xbf16, #tpu.memory_space<vmem>>, %arg7: memref<1x128xf32, #tpu.memory_space<vmem>>, %arg8: memref<1x128xf32, #tpu.memory_space<vmem>>, %arg9: memref<1x8x16x128xf32, #tpu.memory_space<vmem>>, %arg10: memref<10x18x128xbf16, #tpu.memory_space<vmem>>) attributes {dimension_semantics = [#tpu.dimension_semantics<parallel>, #tpu.dimension_semantics<parallel>], iteration_bounds = array<i64: 2, 2>, scalar_prefetch = 0 : i64, scratch_operands = 1 : i64, tpu.core_type = #tpu.core_type<tc>, window_params = [{transform_indices = @transform_0, window_bounds = array<i64: 1, 21, 18, 128>}, {pipeline_mode = #tpu.pipeline_mode<synchronous>, transform_indices = @transform_1, window_bounds = array<i64: 3, 384, 128>}, {pipeline_mode = #tpu.pipeline_mode<synchronous>, transform_indices = @transform_2, window_bounds = array<i64: 1, 128>}, {pipeline_mode = #tpu.pipeline_mode<synchronous>, transform_indices = @transform_3, window_bounds = array<i64: 1, 128>}, {pipeline_mode = #tpu.pipeline_mode<synchronous>, transform_indices = @transform_4, window_bounds = array<i64: 3, 384, 128>}, {pipeline_mode = #tpu.pipeline_mode<synchronous>, transform_indices = @transform_5, window_bounds = array<i64: 1, 128>}, {pipeline_mode = #tpu.pipeline_mode<synchronous>, transform_indices = @transform_6, window_bounds = array<i64: 1, 128>}, {transform_indices = @transform_7, window_bounds = array<i64: 1, 8, 16, 128>}]} {
    %c8_i32 = arith.constant 8 : i32
    %0 = arith.muli %arg1, %c8_i32 : i32
    %1 = tpu.assume_multiple %0, 8 : i32
    %c0 = arith.constant 0 : index
    %2 = arith.index_cast %1 : i32 to index
    %c0_0 = arith.constant 0 : index
    %c0_1 = arith.constant 0 : index
    %3 = vector.load %arg2[%c0, %2, %c0_0, %c0_1] : memref<1x21x18x128xbf16, #tpu.memory_space<vmem>>, vector<1x12x18x128xbf16>
    %4 = vector.shape_cast %3 : vector<1x12x18x128xbf16> to vector<12x18x128xbf16>
    %cst = arith.constant 0.000000e+00 : f32
    %5 = vector.broadcast %cst : f32 to vector<160x128xf32>
    %6 = vector.extract_strided_slice %4 {offsets = [0, 0, 0], sizes = [10, 16, 128], strides = [1, 1, 1]} : vector<12x18x128xbf16> to vector<10x16x128xbf16>
    %7 = vector.extract_strided_slice %4 {offsets = [0, 1, 0], sizes = [10, 16, 128], strides = [1, 1, 1]} : vector<12x18x128xbf16> to vector<10x16x128xbf16>
    %8 = vector.extract_strided_slice %4 {offsets = [0, 2, 0], sizes = [10, 16, 128], strides = [1, 1, 1]} : vector<12x18x128xbf16> to vector<10x16x128xbf16>
    %9 = tpu.concatenate %6, %7, %8 in 2 : vector<10x16x128xbf16>, vector<10x16x128xbf16>, vector<10x16x128xbf16> -> vector<10x16x384xbf16>
    %10 = vector.shape_cast %9 : vector<10x16x384xbf16> to vector<160x384xbf16>
    %c0_2 = arith.constant 0 : index
    %c0_3 = arith.constant 0 : index
    %c0_4 = arith.constant 0 : index
    %11 = vector.load %arg3[%c0_2, %c0_3, %c0_4] : memref<3x384x128xbf16, #tpu.memory_space<vmem>>, vector<1x384x128xbf16>
    %12 = vector.shape_cast %11 : vector<1x384x128xbf16> to vector<384x128xbf16>
    %cst_5 = arith.constant dense<0.000000e+00> : vector<160x128xf32>
    %13 = tpu.matmul %10, %12, %cst_5 {dimension_numbers = #tpu.dot_dimension_numbers<[1], [0], [0], [1], [0, 0, 1, 1], [], []>} : vector<160x384xbf16>, vector<384x128xbf16>, vector<160x128xf32> -> vector<160x128xf32>
    %14 = arith.addf %5, %13 : vector<160x128xf32>
    %15 = vector.extract_strided_slice %4 {offsets = [1, 0, 0], sizes = [10, 16, 128], strides = [1, 1, 1]} : vector<12x18x128xbf16> to vector<10x16x128xbf16>
    %16 = vector.extract_strided_slice %4 {offsets = [1, 1, 0], sizes = [10, 16, 128], strides = [1, 1, 1]} : vector<12x18x128xbf16> to vector<10x16x128xbf16>
    %17 = vector.extract_strided_slice %4 {offsets = [1, 2, 0], sizes = [10, 16, 128], strides = [1, 1, 1]} : vector<12x18x128xbf16> to vector<10x16x128xbf16>
    %18 = tpu.concatenate %15, %16, %17 in 2 : vector<10x16x128xbf16>, vector<10x16x128xbf16>, vector<10x16x128xbf16> -> vector<10x16x384xbf16>
    %19 = vector.shape_cast %18 : vector<10x16x384xbf16> to vector<160x384xbf16>
    %c1 = arith.constant 1 : index
    %c0_6 = arith.constant 0 : index
    %c0_7 = arith.constant 0 : index
    %20 = vector.load %arg3[%c1, %c0_6, %c0_7] : memref<3x384x128xbf16, #tpu.memory_space<vmem>>, vector<1x384x128xbf16>
    %21 = vector.shape_cast %20 : vector<1x384x128xbf16> to vector<384x128xbf16>
    %cst_8 = arith.constant dense<0.000000e+00> : vector<160x128xf32>
    %22 = tpu.matmul %19, %21, %cst_8 {dimension_numbers = #tpu.dot_dimension_numbers<[1], [0], [0], [1], [0, 0, 1, 1], [], []>} : vector<160x384xbf16>, vector<384x128xbf16>, vector<160x128xf32> -> vector<160x128xf32>
    %23 = arith.addf %14, %22 : vector<160x128xf32>
    %24 = vector.extract_strided_slice %4 {offsets = [2, 0, 0], sizes = [10, 16, 128], strides = [1, 1, 1]} : vector<12x18x128xbf16> to vector<10x16x128xbf16>
    %25 = vector.extract_strided_slice %4 {offsets = [2, 1, 0], sizes = [10, 16, 128], strides = [1, 1, 1]} : vector<12x18x128xbf16> to vector<10x16x128xbf16>
    %26 = vector.extract_strided_slice %4 {offsets = [2, 2, 0], sizes = [10, 16, 128], strides = [1, 1, 1]} : vector<12x18x128xbf16> to vector<10x16x128xbf16>
    %27 = tpu.concatenate %24, %25, %26 in 2 : vector<10x16x128xbf16>, vector<10x16x128xbf16>, vector<10x16x128xbf16> -> vector<10x16x384xbf16>
    %28 = vector.shape_cast %27 : vector<10x16x384xbf16> to vector<160x384xbf16>
    %c2 = arith.constant 2 : index
    %c0_9 = arith.constant 0 : index
    %c0_10 = arith.constant 0 : index
    %29 = vector.load %arg3[%c2, %c0_9, %c0_10] : memref<3x384x128xbf16, #tpu.memory_space<vmem>>, vector<1x384x128xbf16>
    %30 = vector.shape_cast %29 : vector<1x384x128xbf16> to vector<384x128xbf16>
    %cst_11 = arith.constant dense<0.000000e+00> : vector<160x128xf32>
    %31 = tpu.matmul %28, %30, %cst_11 {dimension_numbers = #tpu.dot_dimension_numbers<[1], [0], [0], [1], [0, 0, 1, 1], [], []>} : vector<160x384xbf16>, vector<384x128xbf16>, vector<160x128xf32> -> vector<160x128xf32>
    %32 = arith.addf %23, %31 : vector<160x128xf32>
    %c0_12 = arith.constant 0 : index
    %c0_13 = arith.constant 0 : index
    %33 = vector.load %arg4[%c0_12, %c0_13] : memref<1x128xf32, #tpu.memory_space<vmem>>, vector<1x128xf32>
    %34 = vector.broadcast %33 : vector<1x128xf32> to vector<160x128xf32>
    %35 = arith.mulf %32, %34 : vector<160x128xf32>
    %c0_14 = arith.constant 0 : index
    %c0_15 = arith.constant 0 : index
    %36 = vector.load %arg5[%c0_14, %c0_15] : memref<1x128xf32, #tpu.memory_space<vmem>>, vector<1x128xf32>
    %37 = vector.broadcast %36 : vector<1x128xf32> to vector<160x128xf32>
    %38 = arith.addf %35, %37 : vector<160x128xf32>
    %cst_16 = arith.constant 0.000000e+00 : f32
    %39 = vector.broadcast %cst_16 : f32 to vector<160x128xf32>
    %40 = arith.maximumf %38, %39 : vector<160x128xf32>
    %41 = vector.shape_cast %40 : vector<160x128xf32> to vector<10x16x128xf32>
    %c1_i32 = arith.constant 1 : i32
    %42 = arith.subi %1, %c1_i32 : i32
    %43 = tpu.iota {dimensions = array<i32: 0>} : vector<10x1x1xi32>
    %44 = vector.broadcast %42 : i32 to vector<10x1x1xi32>
    %45 = arith.addi %44, %43 : vector<10x1x1xi32>
    %c0_i32 = arith.constant 0 : i32
    %46 = vector.broadcast %c0_i32 : i32 to vector<10x1x1xi32>
    %47 = arith.cmpi sge, %45, %46 : vector<10x1x1xi32>
    %c16_i32 = arith.constant 16 : i32
    %48 = vector.broadcast %c16_i32 : i32 to vector<10x1x1xi32>
    %49 = arith.cmpi slt, %45, %48 : vector<10x1x1xi32>
    %50 = arith.andi %47, %49 : vector<10x1x1xi1>
    %cst_17 = arith.constant 0.000000e+00 : f32
    %51 = vector.shape_cast %50 : vector<10x1x1xi1> to vector<10x1x1xi1>
    %52 = vector.broadcast %51 : vector<10x1x1xi1> to vector<10x16x128xi1>
    %53 = vector.broadcast %cst_17 : f32 to vector<10x16x128xf32>
    %54 = arith.select %52, %41, %53 : vector<10x16x128xi1>, vector<10x16x128xf32>
    %55 = arith.truncf %54 : vector<10x16x128xf32> to vector<10x16x128xbf16>
    %c0_18 = arith.constant 0 : index
    %c1_19 = arith.constant 1 : index
    %c0_20 = arith.constant 0 : index
    %56 = vector.load %arg10[%c0_18, %c1_19, %c0_20] : memref<10x18x128xbf16, #tpu.memory_space<vmem>>, vector<10x16x128xbf16>
    tpu.vector_store %arg10[%c0_18, %c1_19, %c0_20], %55 {strides = array<i32>} : memref<10x18x128xbf16, #tpu.memory_space<vmem>>, vector<10x16x128xbf16>,
    %cst_21 = arith.constant 0.000000e+00 : bf16
    %57 = vector.broadcast %cst_21 : bf16 to vector<10x1x128xbf16>
    %c0_22 = arith.constant 0 : index
    %c0_23 = arith.constant 0 : index
    %c0_24 = arith.constant 0 : index
    %58 = vector.load %arg10[%c0_22, %c0_23, %c0_24] : memref<10x18x128xbf16, #tpu.memory_space<vmem>>, vector<10x1x128xbf16>
    tpu.vector_store %arg10[%c0_22, %c0_23, %c0_24], %57 {strides = array<i32>} : memref<10x18x128xbf16, #tpu.memory_space<vmem>>, vector<10x1x128xbf16>,
    %c0_25 = arith.constant 0 : index
    %c17 = arith.constant 17 : index
    %c0_26 = arith.constant 0 : index
    %59 = vector.load %arg10[%c0_25, %c17, %c0_26] : memref<10x18x128xbf16, #tpu.memory_space<vmem>>, vector<10x1x128xbf16>
    tpu.vector_store %arg10[%c0_25, %c17, %c0_26], %57 {strides = array<i32>} : memref<10x18x128xbf16, #tpu.memory_space<vmem>>, vector<10x1x128xbf16>,
    %cst_27 = arith.constant 0.000000e+00 : f32
    %60 = vector.broadcast %cst_27 : f32 to vector<128x128xf32>
    %c0_28 = arith.constant 0 : index
    %c0_29 = arith.constant 0 : index
    %c0_30 = arith.constant 0 : index
    %61 = vector.load %arg10[%c0_28, %c0_29, %c0_30] : memref<10x18x128xbf16, #tpu.memory_space<vmem>>, vector<8x16x128xbf16>
    %c0_31 = arith.constant 0 : index
    %c1_32 = arith.constant 1 : index
    %c0_33 = arith.constant 0 : index
    %62 = vector.load %arg10[%c0_31, %c1_32, %c0_33] : memref<10x18x128xbf16, #tpu.memory_space<vmem>>, vector<8x16x128xbf16>
    %c0_34 = arith.constant 0 : index
    %c2_35 = arith.constant 2 : index
    %c0_36 = arith.constant 0 : index
    %63 = vector.load %arg10[%c0_34, %c2_35, %c0_36] : memref<10x18x128xbf16, #tpu.memory_space<vmem>>, vector<8x16x128xbf16>
    %64 = tpu.concatenate %61, %62, %63 in 2 : vector<8x16x128xbf16>, vector<8x16x128xbf16>, vector<8x16x128xbf16> -> vector<8x16x384xbf16>
    %65 = vector.shape_cast %64 : vector<8x16x384xbf16> to vector<128x384xbf16>
    %c0_37 = arith.constant 0 : index
    %c0_38 = arith.constant 0 : index
    %c0_39 = arith.constant 0 : index
    %66 = vector.load %arg6[%c0_37, %c0_38, %c0_39] : memref<3x384x128xbf16, #tpu.memory_space<vmem>>, vector<1x384x128xbf16>
    %67 = vector.shape_cast %66 : vector<1x384x128xbf16> to vector<384x128xbf16>
    %cst_40 = arith.constant dense<0.000000e+00> : vector<128x128xf32>
    %68 = tpu.matmul %65, %67, %cst_40 {dimension_numbers = #tpu.dot_dimension_numbers<[1], [0], [0], [1], [0, 0, 1, 1], [], []>} : vector<128x384xbf16>, vector<384x128xbf16>, vector<128x128xf32> -> vector<128x128xf32>
    %69 = arith.addf %60, %68 : vector<128x128xf32>
    %c1_41 = arith.constant 1 : index
    %c0_42 = arith.constant 0 : index
    %c0_43 = arith.constant 0 : index
    %70 = vector.load %arg10[%c1_41, %c0_42, %c0_43] : memref<10x18x128xbf16, #tpu.memory_space<vmem>>, vector<8x16x128xbf16>
    %c1_44 = arith.constant 1 : index
    %c1_45 = arith.constant 1 : index
    %c0_46 = arith.constant 0 : index
    %71 = vector.load %arg10[%c1_44, %c1_45, %c0_46] : memref<10x18x128xbf16, #tpu.memory_space<vmem>>, vector<8x16x128xbf16>
    %c1_47 = arith.constant 1 : index
    %c2_48 = arith.constant 2 : index
    %c0_49 = arith.constant 0 : index
    %72 = vector.load %arg10[%c1_47, %c2_48, %c0_49] : memref<10x18x128xbf16, #tpu.memory_space<vmem>>, vector<8x16x128xbf16>
    %73 = tpu.concatenate %70, %71, %72 in 2 : vector<8x16x128xbf16>, vector<8x16x128xbf16>, vector<8x16x128xbf16> -> vector<8x16x384xbf16>
    %74 = vector.shape_cast %73 : vector<8x16x384xbf16> to vector<128x384xbf16>
    %c1_50 = arith.constant 1 : index
    %c0_51 = arith.constant 0 : index
    %c0_52 = arith.constant 0 : index
    %75 = vector.load %arg6[%c1_50, %c0_51, %c0_52] : memref<3x384x128xbf16, #tpu.memory_space<vmem>>, vector<1x384x128xbf16>
    %76 = vector.shape_cast %75 : vector<1x384x128xbf16> to vector<384x128xbf16>
    %cst_53 = arith.constant dense<0.000000e+00> : vector<128x128xf32>
    %77 = tpu.matmul %74, %76, %cst_53 {dimension_numbers = #tpu.dot_dimension_numbers<[1], [0], [0], [1], [0, 0, 1, 1], [], []>} : vector<128x384xbf16>, vector<384x128xbf16>, vector<128x128xf32> -> vector<128x128xf32>
    %78 = arith.addf %69, %77 : vector<128x128xf32>
    %c2_54 = arith.constant 2 : index
    %c0_55 = arith.constant 0 : index
    %c0_56 = arith.constant 0 : index
    %79 = vector.load %arg10[%c2_54, %c0_55, %c0_56] : memref<10x18x128xbf16, #tpu.memory_space<vmem>>, vector<8x16x128xbf16>
    %c2_57 = arith.constant 2 : index
    %c1_58 = arith.constant 1 : index
    %c0_59 = arith.constant 0 : index
    %80 = vector.load %arg10[%c2_57, %c1_58, %c0_59] : memref<10x18x128xbf16, #tpu.memory_space<vmem>>, vector<8x16x128xbf16>
    %c2_60 = arith.constant 2 : index
    %c2_61 = arith.constant 2 : index
    %c0_62 = arith.constant 0 : index
    %81 = vector.load %arg10[%c2_60, %c2_61, %c0_62] : memref<10x18x128xbf16, #tpu.memory_space<vmem>>, vector<8x16x128xbf16>
    %82 = tpu.concatenate %79, %80, %81 in 2 : vector<8x16x128xbf16>, vector<8x16x128xbf16>, vector<8x16x128xbf16> -> vector<8x16x384xbf16>
    %83 = vector.shape_cast %82 : vector<8x16x384xbf16> to vector<128x384xbf16>
    %c2_63 = arith.constant 2 : index
    %c0_64 = arith.constant 0 : index
    %c0_65 = arith.constant 0 : index
    %84 = vector.load %arg6[%c2_63, %c0_64, %c0_65] : memref<3x384x128xbf16, #tpu.memory_space<vmem>>, vector<1x384x128xbf16>
    %85 = vector.shape_cast %84 : vector<1x384x128xbf16> to vector<384x128xbf16>
    %cst_66 = arith.constant dense<0.000000e+00> : vector<128x128xf32>
    %86 = tpu.matmul %83, %85, %cst_66 {dimension_numbers = #tpu.dot_dimension_numbers<[1], [0], [0], [1], [0, 0, 1, 1], [], []>} : vector<128x384xbf16>, vector<384x128xbf16>, vector<128x128xf32> -> vector<128x128xf32>
    %87 = arith.addf %78, %86 : vector<128x128xf32>
    %c0_67 = arith.constant 0 : index
    %c0_68 = arith.constant 0 : index
    %88 = vector.load %arg7[%c0_67, %c0_68] : memref<1x128xf32, #tpu.memory_space<vmem>>, vector<1x128xf32>
    %89 = vector.broadcast %88 : vector<1x128xf32> to vector<128x128xf32>
    %90 = arith.mulf %87, %89 : vector<128x128xf32>
    %c0_69 = arith.constant 0 : index
    %c0_70 = arith.constant 0 : index
    %91 = vector.load %arg8[%c0_69, %c0_70] : memref<1x128xf32, #tpu.memory_space<vmem>>, vector<1x128xf32>
    %92 = vector.broadcast %91 : vector<1x128xf32> to vector<128x128xf32>
    %93 = arith.addf %90, %92 : vector<128x128xf32>
    %c2_i32 = arith.constant 2 : i32
    %94 = arith.addi %1, %c2_i32 : i32
    %c0_71 = arith.constant 0 : index
    %95 = arith.index_cast %94 : i32 to index
    %c1_72 = arith.constant 1 : index
    %c0_73 = arith.constant 0 : index
    %96 = vector.load %arg2[%c0_71, %95, %c1_72, %c0_73] : memref<1x21x18x128xbf16, #tpu.memory_space<vmem>>, vector<1x8x16x128xbf16>
    %97 = vector.shape_cast %96 : vector<1x8x16x128xbf16> to vector<8x16x128xbf16>
    %98 = arith.extf %97 : vector<8x16x128xbf16> to vector<8x16x128xf32>
    %99 = vector.shape_cast %98 : vector<8x16x128xf32> to vector<128x128xf32>
    %100 = arith.addf %93, %99 : vector<128x128xf32>
    %cst_74 = arith.constant 0.000000e+00 : f32
    %101 = vector.broadcast %cst_74 : f32 to vector<128x128xf32>
    %102 = arith.maximumf %100, %101 : vector<128x128xf32>
    %103 = vector.shape_cast %102 : vector<128x128xf32> to vector<8x16x128xf32>
    %c0_75 = arith.constant 0 : index
    %c0_76 = arith.constant 0 : index
    %c0_77 = arith.constant 0 : index
    %c0_78 = arith.constant 0 : index
    %104 = vector.load %arg9[%c0_75, %c0_76, %c0_77, %c0_78] : memref<1x8x16x128xf32, #tpu.memory_space<vmem>>, vector<1x8x16x128xf32>
    %105 = vector.shape_cast %104 : vector<1x8x16x128xf32> to vector<8x16x128xf32>
    %106 = vector.shape_cast %103 : vector<8x16x128xf32> to vector<1x8x16x128xf32>
    tpu.vector_store %arg9[%c0_75, %c0_76, %c0_77, %c0_78], %106 {strides = array<i32>} : memref<1x8x16x128xf32, #tpu.memory_space<vmem>>, vector<1x8x16x128xf32>,
    return
  }
  func.func @transform_0(%arg0: i32, %arg1: i32) -> (i32, i32, i32, i32) {
    %c0_i32 = arith.constant 0 : i32
    %c0_i32_0 = arith.constant 0 : i32
    %c0_i32_1 = arith.constant 0 : i32
    %c0_i32_2 = arith.constant 0 : i32
    return %arg0, %c0_i32, %c0_i32_0, %c0_i32_1 : i32, i32, i32, i32
  }
  func.func @transform_1(%arg0: i32, %arg1: i32) -> (i32, i32, i32) {
    %c0_i32 = arith.constant 0 : i32
    %c0_i32_0 = arith.constant 0 : i32
    %c0_i32_1 = arith.constant 0 : i32
    %c0_i32_2 = arith.constant 0 : i32
    return %c0_i32, %c0_i32_0, %c0_i32_1 : i32, i32, i32
  }
  func.func @transform_2(%arg0: i32, %arg1: i32) -> (i32, i32) {
    %c0_i32 = arith.constant 0 : i32
    %c0_i32_0 = arith.constant 0 : i32
    %c0_i32_1 = arith.constant 0 : i32
    return %c0_i32, %c0_i32_0 : i32, i32
  }
  func.func @transform_3(%arg0: i32, %arg1: i32) -> (i32, i32) {
    %c0_i32 = arith.constant 0 : i32
    %c0_i32_0 = arith.constant 0 : i32
    %c0_i32_1 = arith.constant 0 : i32
    return %c0_i32, %c0_i32_0 : i32, i32
  }
  func.func @transform_4(%arg0: i32, %arg1: i32) -> (i32, i32, i32) {
    %c0_i32 = arith.constant 0 : i32
    %c0_i32_0 = arith.constant 0 : i32
    %c0_i32_1 = arith.constant 0 : i32
    %c0_i32_2 = arith.constant 0 : i32
    return %c0_i32, %c0_i32_0, %c0_i32_1 : i32, i32, i32
  }
  func.func @transform_5(%arg0: i32, %arg1: i32) -> (i32, i32) {
    %c0_i32 = arith.constant 0 : i32
    %c0_i32_0 = arith.constant 0 : i32
    %c0_i32_1 = arith.constant 0 : i32
    return %c0_i32, %c0_i32_0 : i32, i32
  }
  func.func @transform_6(%arg0: i32, %arg1: i32) -> (i32, i32) {
    %c0_i32 = arith.constant 0 : i32
    %c0_i32_0 = arith.constant 0 : i32
    %c0_i32_1 = arith.constant 0 : i32
    return %c0_i32, %c0_i32_0 : i32, i32
  }
  func.func @transform_7(%arg0: i32, %arg1: i32) -> (i32, i32, i32, i32) {
    %c0_i32 = arith.constant 0 : i32
    %c0_i32_0 = arith.constant 0 : i32
    %c0_i32_1 = arith.constant 0 : i32
    return %arg0, %arg1, %c0_i32, %c0_i32_0 : i32, i32, i32, i32
  }
}

</mosaic_0001>

<llo_original>
// kernel: tpu_custom_call.1
$region0: #{tpu_custom_call.1}
  #allocation0 [shape = 'u32[]', space=smem, size = 0x4, offset = 0x4, fixed_abs, tag = 'smem constant byte address 0x4 - core index']
  #allocation1 [shape = 'u32[144,128]{1,0:T(1,128)}', space=vmem, size = 0x12000, scoped, tag = 'internal scratch']
  #allocation2 [shape = 'bf16[10,18,128]{2,1,0:T(8,128)(2,1)}', space=vmem, size = 0xf000, scoped, tag = 'scratch operand']
  %s0 = inlined_call_operand.hbm [shape: bf16[2,21,18,128], index: 0, kind: input, shape index: {}]
  %s1 = inlined_call_operand.hbm [shape: bf16[3,384,128], index: 1, kind: input, shape index: {}]
  %s2 = inlined_call_operand.hbm [shape: f32[1,128], index: 2, kind: input, shape index: {}]
  %s3 = inlined_call_operand.hbm [shape: f32[1,128], index: 3, kind: input, shape index: {}]
  %s4 = inlined_call_operand.hbm [shape: bf16[3,384,128], index: 4, kind: input, shape index: {}]
  %s5 = inlined_call_operand.hbm [shape: f32[1,128], index: 5, kind: input, shape index: {}]
  %s6 = inlined_call_operand.hbm [shape: f32[1,128], index: 6, kind: input, shape index: {}]
  %s7 = inlined_call_operand.hbm [shape: f32[2,16,16,128], index: 7, kind: output, shape index: {}]
  %s8 = sld [smem:[#allocation0]]
  $region89: #{tpu_custom_call.1} parent=0
    _
  %s10 = ssub.s32 1, %s8
  %s11 = scalar_select 0, %s10, %s8
  $region1: #{tpu_custom_call.1} parent=0
    #allocation3 [shape = 'u8[258048]{0}', space=vmem, size = 0x3f000, scoped, tag = 'input window, operand 0']
    #allocation4 [shape = 's32[2]{0}', space=sflag, size = 0x8, scoped, tag = 'scoped memory for tpu_custom_call.1']
    #allocation5 [shape = 's32[2]{0}', space=sflag, size = 0x8, scoped, tag = 'scoped memory for tpu_custom_call.1']
    #allocation6 [shape = 'u8[294912]{0}', space=vmem, size = 0x48000, scoped, tag = 'input window, operand 1, single buffered']
    #allocation7 [shape = 's32[1]{0}', space=sflag, size = 0x4, scoped, tag = 'scoped memory for tpu_custom_call.1']
    #allocation8 [shape = 'u8[512]{0}', space=vmem, size = 0x400, scoped, tag = 'input window, operand 2, single buffered']
    #allocation9 [shape = 'u8[512]{0}', space=vmem, size = 0x400, scoped, tag = 'input window, operand 3, single buffered']
    #allocation10 [shape = 's32[1]{0}', space=sflag, size = 0x4, scoped, tag = 'scoped memory for tpu_custom_call.1']
    #allocation11 [shape = 'u8[294912]{0}', space=vmem, size = 0x48000, scoped, tag = 'input window, operand 4, single buffered']
    #allocation12 [shape = 'u8[512]{0}', space=vmem, size = 0x400, scoped, tag = 'input window, operand 5, single buffered']
    #allocation13 [shape = 's32[1]{0}', space=sflag, size = 0x4, scoped, tag = 'scoped memory for tpu_custom_call.1']
    #allocation14 [shape = 'u8[512]{0}', space=vmem, size = 0x400, scoped, tag = 'input window, operand 6, single buffered']
    #allocation15 [shape = 'u8[131072]{0}', space=vmem, size = 0x20000, scoped, tag = 'output window, operand 0']
    %12 = vsyncpa [#allocation4], 0
    %s13 = scalar_lea.sflag [#allocation4], 1
    %14 = vsyncpa %s13, 0
    %15 = vsyncpa [#allocation7], 0
    %16 = vsyncpa [#allocation10], 0
    %17 = vsyncpa [#allocation13], 0
    %18 = vsyncpa [#allocation5], 0
    %s19 = scalar_lea.sflag [#allocation5], 1
    %20 = vsyncpa %s19, 0
    loop: start=0, step=1, limit=6
    $region2: #{tpu_custom_call.1} parent=1 // loop_pre_header
      _
    $region3: #{tpu_custom_call.1} parent=1 // loop_header
      %s22 = sphi 0, %s26
      %p23 = scmp.ge.s32.totalorder %s22, 6
      %s29 = sphi 0, %s41
      %s30 = sphi 0, %s37
      %s31 = sphi 0, %s29
      %s32 = sphi 0, %s30
      %s33 = sphi 0, %s31
      %s34 = sphi 0, %s32
      %s44 = sphi 0, %s46
      %s47 = sphi 0, %s44
      %s48 = sphi 0, %s47
      %s64 = sphi 0, %s48
      %s68 = sphi 0, %s68
      %s70 = sphi 0, %s68
      %s71 = sphi 0, %s70
      %s85 = sphi 0, %s71
      %s89 = sphi 0, %s89
      %s91 = sphi 0, %s89
      %s92 = sphi 0, %s91
      %s106 = sphi 0, %s92
      %s110 = sphi 0, %s110
      %s112 = sphi 0, %s110
      %s113 = sphi 0, %s112
      %s127 = sphi 0, %s113
      %s131 = sphi 0, %s131
      %s133 = sphi 0, %s131
      %s134 = sphi 0, %s133
      %s148 = sphi 0, %s134
      %s152 = sphi 0, %s152
      %s154 = sphi 0, %s152
      %s155 = sphi 0, %s154
      %s169 = sphi 0, %s155
      %s173 = sphi 0, %s173
      %s175 = sphi 0, %s173
      %s176 = sphi 0, %s175
      %s190 = sphi 0, %s176
      %s198 = sphi 0, %s200
      %s201 = sphi 0, %s198
      %s202 = sphi 0, %s201
      %s218 = sphi 0, %s202
    $region4: #{tpu_custom_call.1} parent=1 // loop_header_branch
      %25 = sbr.rel (%p23) target = $region8
    $region5: #{tpu_custom_call.1} parent=1 // loop_body
      %s27 = ssub.s32 %s22, 1
      %s28 = ssub.s32 %s22, 2
      %s35 = sadd.s32 1, %s30
      %p36 = scmp.ge.s32.totalorder %s35, 2
      %s37 = scalar_select %p36, 0, %s35
      %s38 = sadd.s32 1, %s29
      %s39 = scalar_select %p36, %s38, %s29
      %p40 = scmp.ge.s32.totalorder %s39, 2
      %s41 = scalar_select %p40, 0, %s39
      %s42 = ssub.s32 %s29, %s41
      %p43 = scmp.eq.s32.totalorder %s42, 0
      %s45 = sadd.s32 %s44, 1
      %s46 = scalar_select %p43, %s44, %s45
      %p49 = pneg %p43
      %p50 = scmp.eq.s32.totalorder %s22, 3
      %p51 = por %p49, %p50
      %p52 = scmp.ne.s32.totalorder %s44, %s47
      %p53 = scmp.eq.s32.totalorder %s22, 0
      %p54 = por %p52, %p53
      %p55 = scmp.ne.s32.totalorder %s44, %s47
      %p56 = scmp.eq.s32.totalorder %s27, 3
      %p57 = por %p55, %p56
      %p58 = scmp.ne.s32.totalorder %s47, %s48
      %p59 = scmp.eq.s32.totalorder %s27, 0
      %p60 = por %p58, %p59
      %p61 = scmp.ne.s32.totalorder %s47, %s48
      %p62 = scmp.eq.s32.totalorder %s28, 3
      %p63 = por %p61, %p62
      %p65 = scmp.ne.s32.totalorder %s48, %s64
      %p66 = scmp.eq.s32.totalorder %s28, 0
      %p67 = por %p65, %p66
      %s69 = sadd.s32 %s68, 1
      %p72 = scmp.eq.s32.totalorder %s22, 3
      %p73 = scmp.ne.s32.totalorder %s68, %s70
      %p74 = scmp.eq.s32.totalorder %s22, 0
      %p75 = por %p73, %p74
      %p76 = scmp.ne.s32.totalorder %s68, %s70
      %p77 = scmp.eq.s32.totalorder %s27, 3
      %p78 = por %p76, %p77
      %p79 = scmp.ne.s32.totalorder %s70, %s71
      %p80 = scmp.eq.s32.totalorder %s27, 0
      %p81 = por %p79, %p80
      %p82 = scmp.ne.s32.totalorder %s70, %s71
      %p83 = scmp.eq.s32.totalorder %s28, 3
      %p84 = por %p82, %p83
      %p86 = scmp.ne.s32.totalorder %s71, %s85
      %p87 = scmp.eq.s32.totalorder %s28, 0
      %p88 = por %p86, %p87
      %s90 = sadd.s32 %s89, 1
      %p93 = scmp.eq.s32.totalorder %s22, 3
      %p94 = scmp.ne.s32.totalorder %s89, %s91
      %p95 = scmp.eq.s32.totalorder %s22, 0
      %p96 = por %p94, %p95
      %p97 = scmp.ne.s32.totalorder %s89, %s91
      %p98 = scmp.eq.s32.totalorder %s27, 3
      %p99 = por %p97, %p98
      %p100 = scmp.ne.s32.totalorder %s91, %s92
      %p101 = scmp.eq.s32.totalorder %s27, 0
      %p102 = por %p100, %p101
      %p103 = scmp.ne.s32.totalorder %s91, %s92
      %p104 = scmp.eq.s32.totalorder %s28, 3
      %p105 = por %p103, %p104
      %p107 = scmp.ne.s32.totalorder %s92, %s106
      %p108 = scmp.eq.s32.totalorder %s28, 0
      %p109 = por %p107, %p108
      %s111 = sadd.s32 %s110, 1
      %p114 = scmp.eq.s32.totalorder %s22, 3
      %p115 = scmp.ne.s32.totalorder %s110, %s112
      %p116 = scmp.eq.s32.totalorder %s22, 0
      %p117 = por %p115, %p116
      %p118 = scmp.ne.s32.totalorder %s110, %s112
      %p119 = scmp.eq.s32.totalorder %s27, 3
      %p120 = por %p118, %p119
      %p121 = scmp.ne.s32.totalorder %s112, %s113
      %p122 = scmp.eq.s32.totalorder %s27, 0
      %p123 = por %p121, %p122
      %p124 = scmp.ne.s32.totalorder %s112, %s113
      %p125 = scmp.eq.s32.totalorder %s28, 3
      %p126 = por %p124, %p125
      %p128 = scmp.ne.s32.totalorder %s113, %s127
      %p129 = scmp.eq.s32.totalorder %s28, 0
      %p130 = por %p128, %p129
      %s132 = sadd.s32 %s131, 1
      %p135 = scmp.eq.s32.totalorder %s22, 3
      %p136 = scmp.ne.s32.totalorder %s131, %s133
      %p137 = scmp.eq.s32.totalorder %s22, 0
      %p138 = por %p136, %p137
      %p139 = scmp.ne.s32.totalorder %s131, %s133
      %p140 = scmp.eq.s32.totalorder %s27, 3
      %p141 = por %p139, %p140
      %p142 = scmp.ne.s32.totalorder %s133, %s134
      %p143 = scmp.eq.s32.totalorder %s27, 0
      %p144 = por %p142, %p143
      %p145 = scmp.ne.s32.totalorder %s133, %s134
      %p146 = scmp.eq.s32.totalorder %s28, 3
      %p147 = por %p145, %p146
      %p149 = scmp.ne.s32.totalorder %s134, %s148
      %p150 = scmp.eq.s32.totalorder %s28, 0
      %p151 = por %p149, %p150
      %s153 = sadd.s32 %s152, 1
      %p156 = scmp.eq.s32.totalorder %s22, 3
      %p157 = scmp.ne.s32.totalorder %s152, %s154
      %p158 = scmp.eq.s32.totalorder %s22, 0
      %p159 = por %p157, %p158
      %p160 = scmp.ne.s32.totalorder %s152, %s154
      %p161 = scmp.eq.s32.totalorder %s27, 3
      %p162 = por %p160, %p161
      %p163 = scmp.ne.s32.totalorder %s154, %s155
      %p164 = scmp.eq.s32.totalorder %s27, 0
      %p165 = por %p163, %p164
      %p166 = scmp.ne.s32.totalorder %s154, %s155
      %p167 = scmp.eq.s32.totalorder %s28, 3
      %p168 = por %p166, %p167
      %p170 = scmp.ne.s32.totalorder %s155, %s169
      %p171 = scmp.eq.s32.totalorder %s28, 0
      %p172 = por %p170, %p171
      %s174 = sadd.s32 %s173, 1
      %p177 = scmp.eq.s32.totalorder %s22, 3
      %p178 = scmp.ne.s32.totalorder %s173, %s175
      %p179 = scmp.eq.s32.totalorder %s22, 0
      %p180 = por %p178, %p179
      %p181 = scmp.ne.s32.totalorder %s173, %s175
      %p182 = scmp.eq.s32.totalorder %s27, 3
      %p183 = por %p181, %p182
      %p184 = scmp.ne.s32.totalorder %s175, %s176
      %p185 = scmp.eq.s32.totalorder %s27, 0
      %p186 = por %p184, %p185
      %p187 = scmp.ne.s32.totalorder %s175, %s176
      %p188 = scmp.eq.s32.totalorder %s28, 3
      %p189 = por %p187, %p188
      %p191 = scmp.ne.s32.totalorder %s176, %s190
      %p192 = scmp.eq.s32.totalorder %s28, 0
      %p193 = por %p191, %p192
      %s194 = ssub.s32 %s29, %s41
      %s195 = ssub.s32 %s30, %s37
      %s196 = sor.u32 %s194, %s195
      %p197 = scmp.eq.s32.totalorder %s196, 0
      %s199 = sadd.s32 %s198, 1
      %s200 = scalar_select %p197, %s198, %s199
      %p203 = pneg %p197
      %p204 = scmp.eq.s32.totalorder %s22, 3
      %p205 = por %p203, %p204
      %p206 = scmp.ne.s32.totalorder %s198, %s201
      %p207 = scmp.eq.s32.totalorder %s22, 0
      %p208 = por %p206, %p207
      %p209 = scmp.ne.s32.totalorder %s198, %s201
      %p210 = scmp.eq.s32.totalorder %s27, 3
      %p211 = por %p209, %p210
      %p212 = scmp.ne.s32.totalorder %s201, %s202
      %p213 = scmp.eq.s32.totalorder %s27, 0
      %p214 = por %p212, %p213
      %p215 = scmp.ne.s32.totalorder %s201, %s202
      %p216 = scmp.eq.s32.totalorder %s28, 3
      %p217 = por %p215, %p216
      %p219 = scmp.ne.s32.totalorder %s202, %s218
      %p220 = scmp.eq.s32.totalorder %s28, 0
      %p221 = por %p219, %p220
      %p222 = scmp.le.s32.totalorder 1, %s22
      %p223 = scmp.lt.s32.totalorder %s22, 5
      %p224 = pnand %p222, %p223
      %p225 = pneg %p224
      // Predicated region
      $region9: #{tpu_custom_call.1} parent=5 // pred_check
        _
      $region10: #{tpu_custom_call.1} parent=5 // pred_check_branch
        %227 = sbr.rel (%p224) target = $region12
      $region11: #{tpu_custom_call.1} parent=5 // pred_region
        %s228 = ssub.s32 %s22, 1
        // Predicated region
        $region13: #{tpu_custom_call.1} parent=11 // pred_check
          %p229 = pneg %p81
        $region14: #{tpu_custom_call.1} parent=11 // pred_check_branch
          %231 = sbr.rel (%p229) target = $region16
        $region15: #{tpu_custom_call.1} parent=11 // pred_region
          %s233 = ssub.s32 9216, 9216
          %234 = vsyncadd [#allocation7], %s233
          %s235 = sshll.u32 [#allocation6], 4
          %s236 = int_to_ptr.vmem [resolvable:$true] %s235
          %241 = dma.hbm_to_vmem [thread:$0]  %s1, 9216, %s236, [#allocation7], 64, 64, 4
        $region16: #{tpu_custom_call.1} parent=11 // pred_fallthru
          _
        // Predicated region
        $region17: #{tpu_custom_call.1} parent=11 // pred_check
          %p242 = pneg %p102
        $region18: #{tpu_custom_call.1} parent=11 // pred_check_branch
          %244 = sbr.rel (%p242) target = $region20
        $region19: #{tpu_custom_call.1} parent=11 // pred_region
          %s246 = ssub.s32 16, 16
          %247 = vsyncadd [#allocation7], %s246
          %s249 = sshll.u32 [#allocation8], 4
          %s250 = int_to_ptr.vmem [resolvable:$true] %s249
          %252 = dma.hbm_to_vmem [thread:$0]  %s2, 16, %s250, [#allocation7]
        $region20: #{tpu_custom_call.1} parent=11 // pred_fallthru
          _
        // Predicated region
        $region21: #{tpu_custom_call.1} parent=11 // pred_check
          %p253 = pneg %p123
        $region22: #{tpu_custom_call.1} parent=11 // pred_check_branch
          %255 = sbr.rel (%p253) target = $region24
        $region23: #{tpu_custom_call.1} parent=11 // pred_region
          %s257 = ssub.s32 16, 16
          %258 = vsyncadd [#allocation10], %s257
          %s260 = sshll.u32 [#allocation9], 4
          %s261 = int_to_ptr.vmem [resolvable:$true] %s260
          %263 = dma.hbm_to_vmem [thread:$0]  %s3, 16, %s261, [#allocation10]
        $region24: #{tpu_custom_call.1} parent=11 // pred_fallthru
          _
        // Predicated region
        $region25: #{tpu_custom_call.1} parent=11 // pred_check
          %p264 = pneg %p144
        $region26: #{tpu_custom_call.1} parent=11 // pred_check_branch
          %266 = sbr.rel (%p264) target = $region28
        $region27: #{tpu_custom_call.1} parent=11 // pred_region
          %s268 = ssub.s32 9216, 9216
          %269 = vsyncadd [#allocation10], %s268
          %s270 = sshll.u32 [#allocation11], 4
          %s271 = int_to_ptr.vmem [resolvable:$true] %s270
          %276 = dma.hbm_to_vmem [thread:$0]  %s4, 9216, %s271, [#allocation10], 64, 64, 4
        $region28: #{tpu_custom_call.1} parent=11 // pred_fallthru
          _
        // Predicated region
        $region29: #{tpu_custom_call.1} parent=11 // pred_check
          %p277 = pneg %p165
        $region30: #{tpu_custom_call.1} parent=11 // pred_check_branch
          %279 = sbr.rel (%p277) target = $region32
        $region31: #{tpu_custom_call.1} parent=11 // pred_region
          %s281 = ssub.s32 16, 16
          %282 = vsyncadd [#allocation13], %s281
          %s284 = sshll.u32 [#allocation12], 4
          %s285 = int_to_ptr.vmem [resolvable:$true] %s284
          %287 = dma.hbm_to_vmem [thread:$0]  %s5, 16, %s285, [#allocation13]
        $region32: #{tpu_custom_call.1} parent=11 // pred_fallthru
          _
        // Predicated region
        $region33: #{tpu_custom_call.1} parent=11 // pred_check
          %p288 = pneg %p186
        $region34: #{tpu_custom_call.1} parent=11 // pred_check_branch
          %290 = sbr.rel (%p288) target = $region36
        $region35: #{tpu_custom_call.1} parent=11 // pred_region
          %s292 = ssub.s32 16, 16
          %293 = vsyncadd [#allocation13], %s292
          %s295 = sshll.u32 [#allocation14], 4
          %s296 = int_to_ptr.vmem [resolvable:$true] %s295
          %298 = dma.hbm_to_vmem [thread:$0]  %s6, 16, %s296, [#allocation13]
        $region36: #{tpu_custom_call.1} parent=11 // pred_fallthru
          _
      $region12: #{tpu_custom_call.1} parent=5 // pred_fallthru
        _
      %p299 = scmp.lt.s32.totalorder %s22, 4
      // Predicated region
      $region37: #{tpu_custom_call.1} parent=5 // pred_check
        %p300 = pneg %p299
      $region38: #{tpu_custom_call.1} parent=5 // pred_check_branch
        %302 = sbr.rel (%p300) target = $region40
      $region39: #{tpu_custom_call.1} parent=5 // pred_region
        // Predicated region
        $region41: #{tpu_custom_call.1} parent=39 // pred_check
          %p303 = pneg %p54
        $region42: #{tpu_custom_call.1} parent=39 // pred_check_branch
          %305 = sbr.rel (%p303) target = $region44
        $region43: #{tpu_custom_call.1} parent=39 // pred_region
          %s306 = sand.u32 %s44, 1
          %s307 = scalar_lea.sflag [#allocation4], %s306
          %s308 = sand.u32 %s44, 1
          %s309 = smul.addr %s308, 252
          %s310 = scalar_lea.vmem [#allocation3], %s309
          %s312 = ssub.s32 4032, 4032
          %313 = vsyncadd %s307, %s312
          %s314 = smul.addr %s29, 63
          %s315 = smul.addr %s314, 64
          %s316 = scalar_lea.hbm %s0, %s315
          %s317 = sshll.u32 %s310, 4
          %s318 = int_to_ptr.vmem [resolvable:$true] %s317
          %323 = dma.hbm_to_vmem [thread:$0]  %s316, 4032, %s318, %s307, 64, 64, 4
        $region44: #{tpu_custom_call.1} parent=39 // pred_fallthru
          _
      $region40: #{tpu_custom_call.1} parent=5 // pred_fallthru
        _
      %p324 = scmp.le.s32.totalorder 1, %s22
      %p325 = scmp.lt.s32.totalorder %s22, 5
      %p326 = pnand %p324, %p325
      %p327 = pneg %p326
      // Predicated region
      $region45: #{tpu_custom_call.1} parent=5 // pred_check
        _
      $region46: #{tpu_custom_call.1} parent=5 // pred_check_branch
        %329 = sbr.rel (%p326) target = $region48
      $region47: #{tpu_custom_call.1} parent=5 // pred_region
        %s330 = ssub.s32 %s22, 1
        %s331 = sand.u32 %s47, 1
        %s332 = scalar_lea.sflag [#allocation4], %s331
        %s333 = sand.u32 %s47, 1
        %s334 = smul.addr %s333, 252
        %s335 = scalar_lea.vmem [#allocation3], %s334
        // Predicated region
        $region49: #{tpu_custom_call.1} parent=47 // pred_check
          %p336 = pneg %p60
        $region50: #{tpu_custom_call.1} parent=47 // pred_check_branch
          %338 = sbr.rel (%p336) target = $region52
        $region51: #{tpu_custom_call.1} parent=47 // pred_region
          %339 = dma.done %s332, 4032
        $region52: #{tpu_custom_call.1} parent=47 // pred_fallthru
          _
        // Predicated region
        $region53: #{tpu_custom_call.1} parent=47 // pred_check
          %p340 = pneg %p81
        $region54: #{tpu_custom_call.1} parent=47 // pred_check_branch
          %342 = sbr.rel (%p340) target = $region56
        $region55: #{tpu_custom_call.1} parent=47 // pred_region
          %343 = dma.done [#allocation7], 9216
        $region56: #{tpu_custom_call.1} parent=47 // pred_fallthru
          _
        // Predicated region
        $region57: #{tpu_custom_call.1} parent=47 // pred_check
          %p344 = pneg %p102
        $region58: #{tpu_custom_call.1} parent=47 // pred_check_branch
          %346 = sbr.rel (%p344) target = $region60
        $region59: #{tpu_custom_call.1} parent=47 // pred_region
          %347 = dma.done [#allocation7], 16
        $region60: #{tpu_custom_call.1} parent=47 // pred_fallthru
          _
        // Predicated region
        $region61: #{tpu_custom_call.1} parent=47 // pred_check
          %p348 = pneg %p123
        $region62: #{tpu_custom_call.1} parent=47 // pred_check_branch
          %350 = sbr.rel (%p348) target = $region64
        $region63: #{tpu_custom_call.1} parent=47 // pred_region
          %351 = dma.done [#allocation10], 16
        $region64: #{tpu_custom_call.1} parent=47 // pred_fallthru
          _
        // Predicated region
        $region65: #{tpu_custom_call.1} parent=47 // pred_check
          %p352 = pneg %p144
        $region66: #{tpu_custom_call.1} parent=47 // pred_check_branch
          %354 = sbr.rel (%p352) target = $region68
        $region67: #{tpu_custom_call.1} parent=47 // pred_region
          %355 = dma.done [#allocation10], 9216
        $region68: #{tpu_custom_call.1} parent=47 // pred_fallthru
          _
        // Predicated region
        $region69: #{tpu_custom_call.1} parent=47 // pred_check
          %p356 = pneg %p165
        $region70: #{tpu_custom_call.1} parent=47 // pred_check_branch
          %358 = sbr.rel (%p356) target = $region72
        $region71: #{tpu_custom_call.1} parent=47 // pred_region
          %359 = dma.done [#allocation13], 16
        $region72: #{tpu_custom_call.1} parent=47 // pred_fallthru
          _
        // Predicated region
        $region73: #{tpu_custom_call.1} parent=47 // pred_check
          %p360 = pneg %p186
        $region74: #{tpu_custom_call.1} parent=47 // pred_check_branch
          %362 = sbr.rel (%p360) target = $region76
        $region75: #{tpu_custom_call.1} parent=47 // pred_region
          %363 = dma.done [#allocation13], 16
        $region76: #{tpu_custom_call.1} parent=47 // pred_fallthru
          _
        %s364 = sand.u32 %s47, 1
        %s365 = scalar_lea.sflag [#allocation4], %s364
        %s366 = sand.u32 %s47, 1
        %s367 = smul.addr %s366, 252
        %s368 = scalar_lea.vmem [#allocation3], %s367
        %p369 = pneg %p60
        %p370 = pneg %p57
        %p371 = pneg %p81
        %p372 = pneg %p78
        %p373 = pneg %p102
        %p374 = pneg %p99
        %p375 = pneg %p123
        %p376 = pneg %p120
        %p377 = pneg %p144
        %p378 = pneg %p141
        %p379 = pneg %p165
        %p380 = pneg %p162
        %p381 = pneg %p186
        %p382 = pneg %p183
        %p383 = pneg %p214
        %p384 = pneg %p211
        %s385 = sand.u32 %s201, 1
        %s386 = scalar_lea.sflag [#allocation5], %s385
        %s387 = sand.u32 %s201, 1
        %s388 = smul.addr %s387, 128
        %s389 = scalar_lea.vmem [#allocation15], %s388
        %s390 = smul.u32 8, %s32
        %s392 = smul.u32 %s32, 8
        %s393 = smul.u32 %s392, 3
        %s394 = smul.addr %s393, 4
        %s395 = scalar_lea.vmem %s335, %s394 [#allocation3]
        %v396 = vld [vmem:[%s395] sm:$0xf]
        %v397 = vld [vmem:[%s395 + $0x4] sm:$0xf]
        %v398 = vld [vmem:[%s395 + $0x8] sm:$0x1]
        %v399 = vld [vmem:[%s395 + $0xc] sm:$0xf]
        %v400 = vld [vmem:[%s395 + $0x10] sm:$0xf]
        %v401 = vld [vmem:[%s395 + $0x14] sm:$0x1]
        %v402 = vld [vmem:[%s395 + $0x18] sm:$0xf]
        %v403 = vld [vmem:[%s395 + $0x1c] sm:$0xf]
        %v404 = vld [vmem:[%s395 + $0x20] sm:$0x1]
        %v405 = vld [vmem:[%s395 + $0x24] sm:$0xf]
        %v406 = vld [vmem:[%s395 + $0x28] sm:$0xf]
        %v407 = vld [vmem:[%s395 + $0x2c] sm:$0x1]
        %v408 = vld [vmem:[%s395 + $0x30] sm:$0xf]
        %v409 = vld [vmem:[%s395 + $0x34] sm:$0xf]
        %v410 = vld [vmem:[%s395 + $0x38] sm:$0x1]
        %v411 = vld [vmem:[%s395 + $0x3c] sm:$0xf]
        %v412 = vld [vmem:[%s395 + $0x40] sm:$0xf]
        %v413 = vld [vmem:[%s395 + $0x44] sm:$0x1]
        %v414 = vld [vmem:[%s395 + $0x48] sm:$0xf]
        %v415 = vld [vmem:[%s395 + $0x4c] sm:$0xf]
        %v416 = vld [vmem:[%s395 + $0x50] sm:$0x1]
        %v417 = vld [vmem:[%s395 + $0x54] sm:$0xf]
        %v418 = vld [vmem:[%s395 + $0x58] sm:$0xf]
        %v419 = vld [vmem:[%s395 + $0x5c] sm:$0x1]
        %v420 = vld [vmem:[%s395 + $0x60] sm:$0xf]
        %v421 = vld [vmem:[%s395 + $0x64] sm:$0xf]
        %v422 = vld [vmem:[%s395 + $0x68] sm:$0x1]
        %v423 = vld [vmem:[%s395 + $0x6c] sm:$0xf]
        %v424 = vld [vmem:[%s395 + $0x70] sm:$0xf]
        %v425 = vld [vmem:[%s395 + $0x74] sm:$0x1]
        %v426 = vld [vmem:[%s395 + $0x78] sm:$0xf]
        %v427 = vld [vmem:[%s395 + $0x7c] sm:$0xf]
        %v428 = vld [vmem:[%s395 + $0x80] sm:$0x1]
        %v429 = vld [vmem:[%s395 + $0x84] sm:$0xf]
        %v430 = vld [vmem:[%s395 + $0x88] sm:$0xf]
        %v431 = vld [vmem:[%s395 + $0x8c] sm:$0x1]
        %v452 = vunpack.c.l.b16 %v396
        %v453 = vunpack.c.l.b16 %v397
        %v454 = vunpack.c.l.b16 %v399
        %v455 = vunpack.c.l.b16 %v400
        %v456 = vunpack.c.l.b16 %v402
        %v457 = vunpack.c.l.b16 %v403
        %v458 = vunpack.c.l.b16 %v405
        %v459 = vunpack.c.l.b16 %v406
        %v460 = vunpack.c.l.b16 %v408
        %v461 = vunpack.c.l.b16 %v409
        %v462 = vunpack.c.l.b16 %v411
        %v463 = vunpack.c.l.b16 %v412
        %v464 = vunpack.c.l.b16 %v414
        %v465 = vunpack.c.l.b16 %v415
        %v466 = vunpack.c.l.b16 %v417
        %v467 = vunpack.c.l.b16 %v418
        %v468 = vunpack.c.l.b16 %v420
        %v469 = vunpack.c.l.b16 %v421
        %v470 = vunpack.c.l.b16 %v423
        %v471 = vunpack.c.l.b16 %v424
        %v472 = vpack.c.b16 %v453, %v452
        %v473 = vpack.c.b16 %v455, %v454
        %v474 = vpack.c.b16 %v457, %v456
        %v475 = vpack.c.b16 %v459, %v458
        %v476 = vpack.c.b16 %v461, %v460
        %v477 = vpack.c.b16 %v463, %v462
        %v478 = vpack.c.b16 %v465, %v464
        %v479 = vpack.c.b16 %v467, %v466
        %v480 = vpack.c.b16 %v469, %v468
        %v481 = vpack.c.b16 %v471, %v470
        %v502 = vunpack.c.l.b16 %v398
        %v503 = vunpack.c.l.b16 %v401
        %v504 = vunpack.c.l.b16 %v404
        %v505 = vunpack.c.l.b16 %v407
        %v506 = vunpack.c.l.b16 %v410
        %v507 = vunpack.c.l.b16 %v413
        %v508 = vunpack.c.l.b16 %v416
        %v509 = vunpack.c.l.b16 %v419
        %v510 = vunpack.c.l.b16 %v422
        %v511 = vunpack.c.l.b16 %v425
        %v512 = vpack.c.b16 %v502, %v502
        %v513 = vpack.c.b16 %v503, %v503
        %v514 = vpack.c.b16 %v504, %v504
        %v515 = vpack.c.b16 %v505, %v505
        %v516 = vpack.c.b16 %v506, %v506
        %v517 = vpack.c.b16 %v507, %v507
        %v518 = vpack.c.b16 %v508, %v508
        %v519 = vpack.c.b16 %v509, %v509
        %v520 = vpack.c.b16 %v510, %v510
        %v521 = vpack.c.b16 %v511, %v511
        %vm522 = vsmask.f32 7424
        %v524 = vshrl.u32 %v472, 16
        %v526 = vshll.u32 %v472, 16
        %v528 = vrot.slane %v526, 1
        %v529 = vor.u32 %v524, %v528
        %v531 = vshll.u32 %v512, 16
        %v533 = vrot.slane %v531, 1
        %v534 = vsel %vm522, %v529, %v533
        %v536 = vshrl.u32 %v473, 16
        %v538 = vshll.u32 %v473, 16
        %v540 = vrot.slane %v538, 1
        %v541 = vor.u32 %v536, %v540
        %v543 = vshll.u32 %v513, 16
        %v545 = vrot.slane %v543, 1
        %v546 = vsel %vm522, %v541, %v545
        %v548 = vshrl.u32 %v474, 16
        %v550 = vshll.u32 %v474, 16
        %v552 = vrot.slane %v550, 1
        %v553 = vor.u32 %v548, %v552
        %v555 = vshll.u32 %v514, 16
        %v557 = vrot.slane %v555, 1
        %v558 = vsel %vm522, %v553, %v557
        %v560 = vshrl.u32 %v475, 16
        %v562 = vshll.u32 %v475, 16
        %v564 = vrot.slane %v562, 1
        %v565 = vor.u32 %v560, %v564
        %v567 = vshll.u32 %v515, 16
        %v569 = vrot.slane %v567, 1
        %v570 = vsel %vm522, %v565, %v569
        %v572 = vshrl.u32 %v476, 16
        %v574 = vshll.u32 %v476, 16
        %v576 = vrot.slane %v574, 1
        %v577 = vor.u32 %v572, %v576
        %v579 = vshll.u32 %v516, 16
        %v581 = vrot.slane %v579, 1
        %v582 = vsel %vm522, %v577, %v581
        %v584 = vshrl.u32 %v477, 16
        %v586 = vshll.u32 %v477, 16
        %v588 = vrot.slane %v586, 1
        %v589 = vor.u32 %v584, %v588
        %v591 = vshll.u32 %v517, 16
        %v593 = vrot.slane %v591, 1
        %v594 = vsel %vm522, %v589, %v593
        %v596 = vshrl.u32 %v478, 16
        %v598 = vshll.u32 %v478, 16
        %v600 = vrot.slane %v598, 1
        %v601 = vor.u32 %v596, %v600
        %v603 = vshll.u32 %v518, 16
        %v605 = vrot.slane %v603, 1
        %v606 = vsel %vm522, %v601, %v605
        %v608 = vshrl.u32 %v479, 16
        %v610 = vshll.u32 %v479, 16
        %v612 = vrot.slane %v610, 1
        %v613 = vor.u32 %v608, %v612
        %v615 = vshll.u32 %v519, 16
        %v617 = vrot.slane %v615, 1
        %v618 = vsel %vm522, %v613, %v617
        %v620 = vshrl.u32 %v480, 16
        %v622 = vshll.u32 %v480, 16
        %v624 = vrot.slane %v622, 1
        %v625 = vor.u32 %v620, %v624
        %v627 = vshll.u32 %v520, 16
        %v629 = vrot.slane %v627, 1
        %v630 = vsel %vm522, %v625, %v629
        %v632 = vshrl.u32 %v481, 16
        %v634 = vshll.u32 %v481, 16
        %v636 = vrot.slane %v634, 1
        %v637 = vor.u32 %v632, %v636
        %v639 = vshll.u32 %v521, 16
        %v641 = vrot.slane %v639, 1
        %v642 = vsel %vm522, %v637, %v641
        %vm653 = vcmask 1046528
        %v654 = vrot.slane %v472, 1
        %v655 = vrot.slane %v512, 1
        %v656 = vsel %vm653, %v654, %v655
        %v657 = vrot.slane %v473, 1
        %v658 = vrot.slane %v513, 1
        %v659 = vsel %vm653, %v657, %v658
        %v660 = vrot.slane %v474, 1
        %v661 = vrot.slane %v514, 1
        %v662 = vsel %vm653, %v660, %v661
        %v663 = vrot.slane %v475, 1
        %v664 = vrot.slane %v515, 1
        %v665 = vsel %vm653, %v663, %v664
        %v666 = vrot.slane %v476, 1
        %v667 = vrot.slane %v516, 1
        %v668 = vsel %vm653, %v666, %v667
        %v669 = vrot.slane %v477, 1
        %v670 = vrot.slane %v517, 1
        %v671 = vsel %vm653, %v669, %v670
        %v672 = vrot.slane %v478, 1
        %v673 = vrot.slane %v518, 1
        %v674 = vsel %vm653, %v672, %v673
        %v675 = vrot.slane %v479, 1
        %v676 = vrot.slane %v519, 1
        %v677 = vsel %vm653, %v675, %v676
        %v678 = vrot.slane %v480, 1
        %v679 = vrot.slane %v520, 1
        %v680 = vsel %vm653, %v678, %v679
        %v681 = vrot.slane %v481, 1
        %v682 = vrot.slane %v521, 1
        %v683 = vsel %vm653, %v681, %v682
        %v694 = vld [vmem:[#allocation6] sm:$0xf]
        %v695 = vld [vmem:[#allocation6 + $0x4] sm:$0xf]
        %v696 = vld [vmem:[#allocation6 + $0x8] sm:$0xf]
        %v697 = vld [vmem:[#allocation6 + $0xc] sm:$0xf]
        %v698 = vld [vmem:[#allocation6 + $0x10] sm:$0xf]
        %v699 = vld [vmem:[#allocation6 + $0x14] sm:$0xf]
        %v700 = vld [vmem:[#allocation6 + $0x18] sm:$0xf]
        %v701 = vld [vmem:[#allocation6 + $0x1c] sm:$0xf]
        %v702 = vld [vmem:[#allocation6 + $0x20] sm:$0xf]
        %v703 = vld [vmem:[#allocation6 + $0x24] sm:$0xf]
        %v704 = vld [vmem:[#allocation6 + $0x28] sm:$0xf]
        %v705 = vld [vmem:[#allocation6 + $0x2c] sm:$0xf]
        %v706 = vld [vmem:[#allocation6 + $0x30] sm:$0xf]
        %v707 = vld [vmem:[#allocation6 + $0x34] sm:$0xf]
        %v708 = vld [vmem:[#allocation6 + $0x38] sm:$0xf]
        %v709 = vld [vmem:[#allocation6 + $0x3c] sm:$0xf]
        %v710 = vld [vmem:[#allocation6 + $0x40] sm:$0xf]
        %v711 = vld [vmem:[#allocation6 + $0x44] sm:$0xf]
        %v712 = vld [vmem:[#allocation6 + $0x48] sm:$0xf]
        %v713 = vld [vmem:[#allocation6 + $0x4c] sm:$0xf]
        %v714 = vld [vmem:[#allocation6 + $0x50] sm:$0xf]
        %v715 = vld [vmem:[#allocation6 + $0x54] sm:$0xf]
        %v716 = vld [vmem:[#allocation6 + $0x58] sm:$0xf]
        %v717 = vld [vmem:[#allocation6 + $0x5c] sm:$0xf]
        %v718 = vld [vmem:[#allocation6 + $0x60] sm:$0xf]
        %v719 = vld [vmem:[#allocation6 + $0x64] sm:$0xf]
        %v720 = vld [vmem:[#allocation6 + $0x68] sm:$0xf]
        %v721 = vld [vmem:[#allocation6 + $0x6c] sm:$0xf]
        %v722 = vld [vmem:[#allocation6 + $0x70] sm:$0xf]
        %v723 = vld [vmem:[#allocation6 + $0x74] sm:$0xf]
        %v724 = vld [vmem:[#allocation6 + $0x78] sm:$0xf]
        %v725 = vld [vmem:[#allocation6 + $0x7c] sm:$0xf]
        %v726 = vld [vmem:[#allocation6 + $0x80] sm:$0xf]
        %v727 = vld [vmem:[#allocation6 + $0x84] sm:$0xf]
        %v728 = vld [vmem:[#allocation6 + $0x88] sm:$0xf]
        %v729 = vld [vmem:[#allocation6 + $0x8c] sm:$0xf]
        %v730 = vld [vmem:[#allocation6 + $0x90] sm:$0xf]
        %v731 = vld [vmem:[#allocation6 + $0x94] sm:$0xf]
        %v732 = vld [vmem:[#allocation6 + $0x98] sm:$0xf]
        %v733 = vld [vmem:[#allocation6 + $0x9c] sm:$0xf]
        %v734 = vld [vmem:[#allocation6 + $0xa0] sm:$0xf]
        %v735 = vld [vmem:[#allocation6 + $0xa4] sm:$0xf]
        %v736 = vld [vmem:[#allocation6 + $0xa8] sm:$0xf]
        %v737 = vld [vmem:[#allocation6 + $0xac] sm:$0xf]
        %v738 = vld [vmem:[#allocation6 + $0xb0] sm:$0xf]
        %v739 = vld [vmem:[#allocation6 + $0xb4] sm:$0xf]
        %v740 = vld [vmem:[#allocation6 + $0xb8] sm:$0xf]
        %v741 = vld [vmem:[#allocation6 + $0xbc] sm:$0xf]
        %v744 = vunpack.c.l.b16 %v426
        %v745 = vunpack.c.l.b16 %v427
        %v746 = vpack.c.b16 %v745, %v744
        %v749 = vunpack.c.l.b16 %v428
        %v750 = vpack.c.b16 %v749, %v749
        %v752 = vshrl.u32 %v746, 16
        %v754 = vshll.u32 %v746, 16
        %v756 = vrot.slane %v754, 1
        %v757 = vor.u32 %v752, %v756
        %v759 = vshll.u32 %v750, 16
        %v761 = vrot.slane %v759, 1
        %v762 = vsel %vm522, %v757, %v761
        %v764 = vrot.slane %v746, 1
        %v765 = vrot.slane %v750, 1
        %v766 = vsel %vm653, %v764, %v765
        %s768 = scalar_lea.vmem [#allocation6], 192
        %v769 = vld [vmem:[%s768] sm:$0xf]
        %v770 = vld [vmem:[%s768 + $0x4] sm:$0xf]
        %v771 = vld [vmem:[%s768 + $0x8] sm:$0xf]
        %v772 = vld [vmem:[%s768 + $0xc] sm:$0xf]
        %v773 = vld [vmem:[%s768 + $0x10] sm:$0xf]
        %v774 = vld [vmem:[%s768 + $0x14] sm:$0xf]
        %v775 = vld [vmem:[%s768 + $0x18] sm:$0xf]
        %v776 = vld [vmem:[%s768 + $0x1c] sm:$0xf]
        %v777 = vld [vmem:[%s768 + $0x20] sm:$0xf]
        %v778 = vld [vmem:[%s768 + $0x24] sm:$0xf]
        %v779 = vld [vmem:[%s768 + $0x28] sm:$0xf]
        %v780 = vld [vmem:[%s768 + $0x2c] sm:$0xf]
        %v781 = vld [vmem:[%s768 + $0x30] sm:$0xf]
        %v782 = vld [vmem:[%s768 + $0x34] sm:$0xf]
        %v783 = vld [vmem:[%s768 + $0x38] sm:$0xf]
        %v784 = vld [vmem:[%s768 + $0x3c] sm:$0xf]
        %v785 = vld [vmem:[%s768 + $0x40] sm:$0xf]
        %v786 = vld [vmem:[%s768 + $0x44] sm:$0xf]
        %v787 = vld [vmem:[%s768 + $0x48] sm:$0xf]
        %v788 = vld [vmem:[%s768 + $0x4c] sm:$0xf]
        %v789 = vld [vmem:[%s768 + $0x50] sm:$0xf]
        %v790 = vld [vmem:[%s768 + $0x54] sm:$0xf]
        %v791 = vld [vmem:[%s768 + $0x58] sm:$0xf]
        %v792 = vld [vmem:[%s768 + $0x5c] sm:$0xf]
        %v793 = vld [vmem:[%s768 + $0x60] sm:$0xf]
        %v794 = vld [vmem:[%s768 + $0x64] sm:$0xf]
        %v795 = vld [vmem:[%s768 + $0x68] sm:$0xf]
        %v796 = vld [vmem:[%s768 + $0x6c] sm:$0xf]
        %v797 = vld [vmem:[%s768 + $0x70] sm:$0xf]
        %v798 = vld [vmem:[%s768 + $0x74] sm:$0xf]
        %v799 = vld [vmem:[%s768 + $0x78] sm:$0xf]
        %v800 = vld [vmem:[%s768 + $0x7c] sm:$0xf]
        %v801 = vld [vmem:[%s768 + $0x80] sm:$0xf]
        %v802 = vld [vmem:[%s768 + $0x84] sm:$0xf]
        %v803 = vld [vmem:[%s768 + $0x88] sm:$0xf]
        %v804 = vld [vmem:[%s768 + $0x8c] sm:$0xf]
        %v805 = vld [vmem:[%s768 + $0x90] sm:$0xf]
        %v806 = vld [vmem:[%s768 + $0x94] sm:$0xf]
        %v807 = vld [vmem:[%s768 + $0x98] sm:$0xf]
        %v808 = vld [vmem:[%s768 + $0x9c] sm:$0xf]
        %v809 = vld [vmem:[%s768 + $0xa0] sm:$0xf]
        %v810 = vld [vmem:[%s768 + $0xa4] sm:$0xf]
        %v811 = vld [vmem:[%s768 + $0xa8] sm:$0xf]
        %v812 = vld [vmem:[%s768 + $0xac] sm:$0xf]
        %v813 = vld [vmem:[%s768 + $0xb0] sm:$0xf]
        %v814 = vld [vmem:[%s768 + $0xb4] sm:$0xf]
        %v815 = vld [vmem:[%s768 + $0xb8] sm:$0xf]
        %v816 = vld [vmem:[%s768 + $0xbc] sm:$0xf]
        %v865 = vunpack.c.l.b16 %v769
        %v866 = vunpack.c.l.b16 %v770
        %v867 = vunpack.c.l.b16 %v771
        %v868 = vunpack.c.l.b16 %v772
        %v869 = vunpack.c.l.b16 %v773
        %v870 = vunpack.c.l.b16 %v774
        %v871 = vunpack.c.l.b16 %v775
        %v872 = vunpack.c.l.b16 %v776
        %v873 = vunpack.c.l.b16 %v777
        %v874 = vunpack.c.l.b16 %v778
        %v875 = vunpack.c.l.b16 %v779
        %v876 = vunpack.c.l.b16 %v780
        %v877 = vunpack.c.l.b16 %v781
        %v878 = vunpack.c.l.b16 %v782
        %v879 = vunpack.c.l.b16 %v783
        %v880 = vunpack.c.l.b16 %v784
        %v881 = vunpack.c.l.b16 %v785
        %v882 = vunpack.c.l.b16 %v786
        %v883 = vunpack.c.l.b16 %v787
        %v884 = vunpack.c.l.b16 %v788
        %v885 = vunpack.c.l.b16 %v789
        %v886 = vunpack.c.l.b16 %v790
        %v887 = vunpack.c.l.b16 %v791
        %v888 = vunpack.c.l.b16 %v792
        %v889 = vunpack.c.l.b16 %v793
        %v890 = vunpack.c.l.b16 %v794
        %v891 = vunpack.c.l.b16 %v795
        %v892 = vunpack.c.l.b16 %v796
        %v893 = vunpack.c.l.b16 %v797
        %v894 = vunpack.c.l.b16 %v798
        %v895 = vunpack.c.l.b16 %v799
        %v896 = vunpack.c.l.b16 %v800
        %v897 = vunpack.c.l.b16 %v801
        %v898 = vunpack.c.l.b16 %v802
        %v899 = vunpack.c.l.b16 %v803
        %v900 = vunpack.c.l.b16 %v804
        %v901 = vunpack.c.l.b16 %v805
        %v902 = vunpack.c.l.b16 %v806
        %v903 = vunpack.c.l.b16 %v807
        %v904 = vunpack.c.l.b16 %v808
        %v905 = vunpack.c.l.b16 %v809
        %v906 = vunpack.c.l.b16 %v810
        %v907 = vunpack.c.l.b16 %v811
        %v908 = vunpack.c.l.b16 %v812
        %v909 = vunpack.c.l.b16 %v813
        %v910 = vunpack.c.l.b16 %v814
        %v911 = vunpack.c.l.b16 %v815
        %v912 = vunpack.c.l.b16 %v816
        %v913 = vpack.c.b16 %v866, %v865
        %v914 = vpack.c.b16 %v868, %v867
        %v915 = vpack.c.b16 %v870, %v869
        %v916 = vpack.c.b16 %v872, %v871
        %v917 = vpack.c.b16 %v874, %v873
        %v918 = vpack.c.b16 %v876, %v875
        %v919 = vpack.c.b16 %v878, %v877
        %v920 = vpack.c.b16 %v880, %v879
        %v921 = vpack.c.b16 %v882, %v881
        %v922 = vpack.c.b16 %v884, %v883
        %v923 = vpack.c.b16 %v886, %v885
        %v924 = vpack.c.b16 %v888, %v887
        %v925 = vpack.c.b16 %v890, %v889
        %v926 = vpack.c.b16 %v892, %v891
        %v927 = vpack.c.b16 %v894, %v893
        %v928 = vpack.c.b16 %v896, %v895
        %v929 = vpack.c.b16 %v898, %v897
        %v930 = vpack.c.b16 %v900, %v899
        %v931 = vpack.c.b16 %v902, %v901
        %v932 = vpack.c.b16 %v904, %v903
        %v933 = vpack.c.b16 %v906, %v905
        %v934 = vpack.c.b16 %v908, %v907
        %v935 = vpack.c.b16 %v910, %v909
        %v936 = vpack.c.b16 %v912, %v911
        %961 = vmatprep.subr.bf16.mxu0 0
        %962 = vmatpush1.bf16.msra.mxu0 %v913
        %963 = vmatprep.subr.bf16.mxu0 0
        %964 = vmatpush1.bf16.msra.mxu0 %v914
        %965 = vmatprep.subr.bf16.mxu0 0
        %966 = vmatpush1.bf16.msra.mxu0 %v915
        %967 = vmatprep.subr.bf16.mxu0 0
        %968 = vmatpush1.bf16.msra.mxu0 %v916
        %969 = vmatprep.subr.bf16.mxu0 0
        %970 = vmatpush1.bf16.msra.mxu0 %v917
        %971 = vmatprep.subr.bf16.mxu0 0
        %972 = vmatpush1.bf16.msra.mxu0 %v918
        %973 = vmatprep.subr.bf16.mxu0 0
        %974 = vmatpush1.bf16.msra.mxu0 %v919
        %975 = vmatprep.subr.bf16.mxu0 0
        %976 = vmatpush1.bf16.msra.mxu0 %v920
        %977 = vmatprep.subr.bf16.mxu0 0
        %978 = vmatpush1.bf16.msra.mxu0 %v921
        %979 = vmatprep.subr.bf16.mxu0 0
        %980 = vmatpush1.bf16.msra.mxu0 %v922
        %981 = vmatprep.subr.bf16.mxu0 0
        %982 = vmatpush1.bf16.msra.mxu0 %v923
        %983 = vmatprep.subr.bf16.mxu0 0
        %984 = vmatpush1.bf16.msra.mxu0 %v924
        %985 = vmatprep.subr.bf16.mxu0 0
        %986 = vmatpush1.bf16.msra.mxu0 %v925
        %987 = vmatprep.subr.bf16.mxu0 0
        %988 = vmatpush1.bf16.msra.mxu0 %v926
        %989 = vmatprep.subr.bf16.mxu0 0
        %990 = vmatpush1.bf16.msra.mxu0 %v927
        %991 = vmatprep.subr.bf16.mxu0 0
        %992 = vmatpush1.bf16.msra.mxu0 %v928
        %993 = vmatprep.mubr.bf16.mxu0 %v546
        %994 = vmatmul.mubr.bf16.gmra.mrb[0].mxu0 %v473
        %v995 = vpop.f32.mrb[0].mxu0
        %v996 = vadd.f32 0.0, %v995
        %v997 = vpop.f32.mrb[0].mxu0
        %v998 = vpop.f32.mrb[0].mxu0
        %v999 = vadd.f32 0.0, %v998
        %v1000 = vpop.f32.mrb[0].mxu0
        %1001 = vmatprep.mubr.bf16.mxu0 %v558
        %1002 = vmatmul.mubr.bf16.gmra.mrb[0].mxu0 %v474
        %v1003 = vpop.f32.mrb[0].mxu0
        %v1004 = vadd.f32 0.0, %v1003
        %v1005 = vpop.f32.mrb[0].mxu0
        %v1006 = vpop.f32.mrb[0].mxu0
        %v1007 = vadd.f32 0.0, %v1006
        %v1008 = vpop.f32.mrb[0].mxu0
        %1009 = vmatprep.mubr.bf16.mxu0 %v570
        %1010 = vmatmul.mubr.bf16.gmra.mrb[0].mxu0 %v475
        %v1011 = vpop.f32.mrb[0].mxu0
        %v1012 = vadd.f32 0.0, %v1011
        %v1013 = vpop.f32.mrb[0].mxu0
        %v1014 = vpop.f32.mrb[0].mxu0
        %v1015 = vadd.f32 0.0, %v1014
        %v1016 = vpop.f32.mrb[0].mxu0
        %1017 = vmatprep.mubr.bf16.mxu0 %v582
        %1018 = vmatmul.mubr.bf16.gmra.mrb[0].mxu0 %v476
        %v1019 = vpop.f32.mrb[0].mxu0
        %v1020 = vadd.f32 0.0, %v1019
        %v1021 = vpop.f32.mrb[0].mxu0
        %v1022 = vpop.f32.mrb[0].mxu0
        %v1023 = vadd.f32 0.0, %v1022
        %v1024 = vpop.f32.mrb[0].mxu0
        %1025 = vmatprep.mubr.bf16.mxu0 %v594
        %1026 = vmatmul.mubr.bf16.gmra.mrb[0].mxu0 %v477
        %v1027 = vpop.f32.mrb[0].mxu0
        %v1028 = vadd.f32 0.0, %v1027
        %v1029 = vpop.f32.mrb[0].mxu0
        %v1030 = vpop.f32.mrb[0].mxu0
        %v1031 = vadd.f32 0.0, %v1030
        %v1032 = vpop.f32.mrb[0].mxu0
        %1033 = vmatprep.mubr.bf16.mxu0 %v606
        %1034 = vmatmul.mubr.bf16.gmra.mrb[0].mxu0 %v478
        %v1035 = vpop.f32.mrb[0].mxu0
        %v1036 = vadd.f32 0.0, %v1035
        %v1037 = vpop.f32.mrb[0].mxu0
        %v1038 = vpop.f32.mrb[0].mxu0
        %v1039 = vadd.f32 0.0, %v1038
        %v1040 = vpop.f32.mrb[0].mxu0
        %1041 = vmatprep.mubr.bf16.mxu0 %v618
        %1042 = vmatmul.mubr.bf16.gmra.mrb[0].mxu0 %v479
        %v1043 = vpop.f32.mrb[0].mxu0
        %v1044 = vadd.f32 0.0, %v1043
        %v1045 = vpop.f32.mrb[0].mxu0
        %v1046 = vpop.f32.mrb[0].mxu0
        %v1047 = vadd.f32 0.0, %v1046
        %v1048 = vpop.f32.mrb[0].mxu0
        %1049 = vmatprep.mubr.bf16.mxu0 %v630
        %1050 = vmatmul.mubr.bf16.gmra.mrb[0].mxu0 %v480
        %v1051 = vpop.f32.mrb[0].mxu0
        %v1052 = vadd.f32 0.0, %v1051
        %v1053 = vpop.f32.mrb[0].mxu0
        %v1054 = vpop.f32.mrb[0].mxu0
        %v1055 = vadd.f32 0.0, %v1054
        %v1056 = vpop.f32.mrb[0].mxu0
        %1057 = vmatprep.mubr.bf16.mxu0 %v642
        %1058 = vmatmul.mubr.bf16.gmra.mrb[0].mxu0 %v481
        %v1059 = vpop.f32.mrb[0].mxu0
        %v1060 = vadd.f32 0.0, %v1059
        %v1061 = vpop.f32.mrb[0].mxu0
        %v1062 = vpop.f32.mrb[0].mxu0
        %v1063 = vadd.f32 0.0, %v1062
        %v1064 = vpop.f32.mrb[0].mxu0
        %1065 = vmatprep.mubr.bf16.mxu0 %v762
        %1066 = vmatmul.mubr.bf16.gmra.mrb[0].mxu0 %v746
        %v1067 = vpop.f32.mrb[0].mxu0
        %v1068 = vadd.f32 0.0, %v1067
        %v1069 = vpop.f32.mrb[0].mxu0
        %v1070 = vpop.f32.mrb[0].mxu0
        %v1071 = vadd.f32 0.0, %v1070
        %v1072 = vpop.f32.mrb[0].mxu0
        %1073 = vdwg.mxu0
        %1074 = vmatprep.subr.bf16.mxu0 0
        %1075 = vmatpush1.bf16.msra.mxu0 %v929
        %1076 = vmatprep.subr.bf16.mxu0 0
        %1077 = vmatpush1.bf16.msra.mxu0 %v930
        %1078 = vmatprep.subr.bf16.mxu0 0
        %1079 = vmatpush1.bf16.msra.mxu0 %v931
        %1080 = vmatprep.subr.bf16.mxu0 0
        %1081 = vmatpush1.bf16.msra.mxu0 %v932
        %1082 = vmatprep.subr.bf16.mxu0 0
        %1083 = vmatpush1.bf16.msra.mxu0 %v933
        %1084 = vmatprep.subr.bf16.mxu0 0
        %1085 = vmatpush1.bf16.msra.mxu0 %v934
        %1086 = vmatprep.subr.bf16.mxu0 0
        %1087 = vmatpush1.bf16.msra.mxu0 %v935
        %1088 = vmatprep.subr.bf16.mxu0 0
        %1089 = vmatpush1.bf16.msra.mxu0 %v936
        %1090 = vmatprep.subr.bf16.mxu0 0
        %1091 = vmatpush1.bf16.msra.mxu0 0
        %1092 = vmatprep.subr.bf16.mxu0 0
        %1093 = vmatpush1.bf16.msra.mxu0 0
        %1094 = vmatprep.subr.bf16.mxu0 0
        %1095 = vmatpush1.bf16.msra.mxu0 0
        %1096 = vmatprep.subr.bf16.mxu0 0
        %1097 = vmatpush1.bf16.msra.mxu0 0
        %1098 = vmatprep.subr.bf16.mxu0 0
        %1099 = vmatpush1.bf16.msra.mxu0 0
        %1100 = vmatprep.subr.bf16.mxu0 0
        %1101 = vmatpush1.bf16.msra.mxu0 0
        %1102 = vmatprep.subr.bf16.mxu0 0
        %1103 = vmatpush1.bf16.msra.mxu0 0
        %1104 = vmatprep.subr.bf16.mxu0 0
        %1105 = vmatpush1.bf16.msra.mxu0 0
        %1106 = vmatprep.mubr.bf16.mxu0 0
        %1107 = vmatmul.mubr.bf16.gmra.mrb[0].mxu0 %v659
        %v1108 = vpop.f32.mrb[0].mxu0
        %v1109 = vadd.f32 %v996, %v1108
        %v1110 = vpop.f32.mrb[0].mxu0
        %v1111 = vpop.f32.mrb[0].mxu0
        %v1112 = vadd.f32 %v999, %v1111
        %v1113 = vpop.f32.mrb[0].mxu0
        %1114 = vmatprep.mubr.bf16.mxu0 0
        %1115 = vmatmul.mubr.bf16.gmra.mrb[0].mxu0 %v662
        %v1116 = vpop.f32.mrb[0].mxu0
        %v1117 = vadd.f32 %v1004, %v1116
        %v1118 = vpop.f32.mrb[0].mxu0
        %v1119 = vpop.f32.mrb[0].mxu0
        %v1120 = vadd.f32 %v1007, %v1119
        %v1121 = vpop.f32.mrb[0].mxu0
        %1122 = vmatprep.mubr.bf16.mxu0 0
        %1123 = vmatmul.mubr.bf16.gmra.mrb[0].mxu0 %v665
        %v1124 = vpop.f32.mrb[0].mxu0
        %v1125 = vadd.f32 %v1012, %v1124
        %v1126 = vpop.f32.mrb[0].mxu0
        %v1127 = vpop.f32.mrb[0].mxu0
        %v1128 = vadd.f32 %v1015, %v1127
        %v1129 = vpop.f32.mrb[0].mxu0
        %1130 = vmatprep.mubr.bf16.mxu0 0
        %1131 = vmatmul.mubr.bf16.gmra.mrb[0].mxu0 %v668
        %v1132 = vpop.f32.mrb[0].mxu0
        %v1133 = vadd.f32 %v1020, %v1132
        %v1134 = vpop.f32.mrb[0].mxu0
        %v1135 = vpop.f32.mrb[0].mxu0
        %v1136 = vadd.f32 %v1023, %v1135
        %v1137 = vpop.f32.mrb[0].mxu0
        %1138 = vmatprep.mubr.bf16.mxu0 0
        %1139 = vmatmul.mubr.bf16.gmra.mrb[0].mxu0 %v671
        %v1140 = vpop.f32.mrb[0].mxu0
        %v1141 = vadd.f32 %v1028, %v1140
        %v1142 = vpop.f32.mrb[0].mxu0
        %v1143 = vpop.f32.mrb[0].mxu0
        %v1144 = vadd.f32 %v1031, %v1143
        %v1145 = vpop.f32.mrb[0].mxu0
        %1146 = vmatprep.mubr.bf16.mxu0 0
        %1147 = vmatmul.mubr.bf16.gmra.mrb[0].mxu0 %v674
        %v1148 = vpop.f32.mrb[0].mxu0
        %v1149 = vadd.f32 %v1036, %v1148
        %v1150 = vpop.f32.mrb[0].mxu0
        %v1151 = vpop.f32.mrb[0].mxu0
        %v1152 = vadd.f32 %v1039, %v1151
        %v1153 = vpop.f32.mrb[0].mxu0
        %1154 = vmatprep.mubr.bf16.mxu0 0
        %1155 = vmatmul.mubr.bf16.gmra.mrb[0].mxu0 %v677
        %v1156 = vpop.f32.mrb[0].mxu0
        %v1157 = vadd.f32 %v1044, %v1156
        %v1158 = vpop.f32.mrb[0].mxu0
        %v1159 = vpop.f32.mrb[0].mxu0
        %v1160 = vadd.f32 %v1047, %v1159
        %v1161 = vpop.f32.mrb[0].mxu0
        %1162 = vmatprep.mubr.bf16.mxu0 0
        %1163 = vmatmul.mubr.bf16.gmra.mrb[0].mxu0 %v680
        %v1164 = vpop.f32.mrb[0].mxu0
        %v1165 = vadd.f32 %v1052, %v1164
        %v1166 = vpop.f32.mrb[0].mxu0
        %v1167 = vpop.f32.mrb[0].mxu0
        %v1168 = vadd.f32 %v1055, %v1167
        %v1169 = vpop.f32.mrb[0].mxu0
        %1170 = vmatprep.mubr.bf16.mxu0 0
        %1171 = vmatmul.mubr.bf16.gmra.mrb[0].mxu0 %v683
        %v1172 = vpop.f32.mrb[0].mxu0
        %v1173 = vadd.f32 %v1060, %v1172
        %v1174 = vpop.f32.mrb[0].mxu0
        %v1175 = vpop.f32.mrb[0].mxu0
        %v1176 = vadd.f32 %v1063, %v1175
        %v1177 = vpop.f32.mrb[0].mxu0
        %1178 = vmatprep.mubr.bf16.mxu0 0
        %1179 = vmatmul.mubr.bf16.gmra.mrb[0].mxu0 %v766
        %v1180 = vpop.f32.mrb[0].mxu0
        %v1181 = vadd.f32 %v1068, %v1180
        %v1182 = vpop.f32.mrb[0].mxu0
        %v1183 = vpop.f32.mrb[0].mxu0
        %v1184 = vadd.f32 %v1071, %v1183
        %v1185 = vpop.f32.mrb[0].mxu0
        %1186 = vdwg.mxu0
        %v1235 = vunpack.c.l.b16 %v694
        %v1236 = vunpack.c.l.b16 %v695
        %v1237 = vunpack.c.l.b16 %v696
        %v1238 = vunpack.c.l.b16 %v697
        %v1239 = vunpack.c.l.b16 %v698
        %v1240 = vunpack.c.l.b16 %v699
        %v1241 = vunpack.c.l.b16 %v700
        %v1242 = vunpack.c.l.b16 %v701
        %v1243 = vunpack.c.l.b16 %v702
        %v1244 = vunpack.c.l.b16 %v703
        %v1245 = vunpack.c.l.b16 %v704
        %v1246 = vunpack.c.l.b16 %v705
        %v1247 = vunpack.c.l.b16 %v706
        %v1248 = vunpack.c.l.b16 %v707
        %v1249 = vunpack.c.l.b16 %v708
        %v1250 = vunpack.c.l.b16 %v709
        %v1251 = vunpack.c.l.b16 %v710
        %v1252 = vunpack.c.l.b16 %v711
        %v1253 = vunpack.c.l.b16 %v712
        %v1254 = vunpack.c.l.b16 %v713
        %v1255 = vunpack.c.l.b16 %v714
        %v1256 = vunpack.c.l.b16 %v715
        %v1257 = vunpack.c.l.b16 %v716
        %v1258 = vunpack.c.l.b16 %v717
        %v1259 = vunpack.c.l.b16 %v718
        %v1260 = vunpack.c.l.b16 %v719
        %v1261 = vunpack.c.l.b16 %v720
        %v1262 = vunpack.c.l.b16 %v721
        %v1263 = vunpack.c.l.b16 %v722
        %v1264 = vunpack.c.l.b16 %v723
        %v1265 = vunpack.c.l.b16 %v724
        %v1266 = vunpack.c.l.b16 %v725
        %v1267 = vunpack.c.l.b16 %v726
        %v1268 = vunpack.c.l.b16 %v727
        %v1269 = vunpack.c.l.b16 %v728
        %v1270 = vunpack.c.l.b16 %v729
        %v1271 = vunpack.c.l.b16 %v730
        %v1272 = vunpack.c.l.b16 %v731
        %v1273 = vunpack.c.l.b16 %v732
        %v1274 = vunpack.c.l.b16 %v733
        %v1275 = vunpack.c.l.b16 %v734
        %v1276 = vunpack.c.l.b16 %v735
        %v1277 = vunpack.c.l.b16 %v736
        %v1278 = vunpack.c.l.b16 %v737
        %v1279 = vunpack.c.l.b16 %v738
        %v1280 = vunpack.c.l.b16 %v739
        %v1281 = vunpack.c.l.b16 %v740
        %v1282 = vunpack.c.l.b16 %v741
        %v1283 = vpack.c.b16 %v1236, %v1235
        %v1284 = vpack.c.b16 %v1238, %v1237
        %v1285 = vpack.c.b16 %v1240, %v1239
        %v1286 = vpack.c.b16 %v1242, %v1241
        %v1287 = vpack.c.b16 %v1244, %v1243
        %v1288 = vpack.c.b16 %v1246, %v1245
        %v1289 = vpack.c.b16 %v1248, %v1247
        %v1290 = vpack.c.b16 %v1250, %v1249
        %v1291 = vpack.c.b16 %v1252, %v1251
        %v1292 = vpack.c.b16 %v1254, %v1253
        %v1293 = vpack.c.b16 %v1256, %v1255
        %v1294 = vpack.c.b16 %v1258, %v1257
        %v1295 = vpack.c.b16 %v1260, %v1259
        %v1296 = vpack.c.b16 %v1262, %v1261
        %v1297 = vpack.c.b16 %v1264, %v1263
        %v1298 = vpack.c.b16 %v1266, %v1265
        %v1299 = vpack.c.b16 %v1268, %v1267
        %v1300 = vpack.c.b16 %v1270, %v1269
        %v1301 = vpack.c.b16 %v1272, %v1271
        %v1302 = vpack.c.b16 %v1274, %v1273
        %v1303 = vpack.c.b16 %v1276, %v1275
        %v1304 = vpack.c.b16 %v1278, %v1277
        %v1305 = vpack.c.b16 %v1280, %v1279
        %v1306 = vpack.c.b16 %v1282, %v1281
        %1331 = vmatprep.subr.bf16.mxu0 0
        %1332 = vmatpush1.bf16.msra.mxu0 %v1283
        %1333 = vmatprep.subr.bf16.mxu0 0
        %1334 = vmatpush1.bf16.msra.mxu0 %v1284
        %1335 = vmatprep.subr.bf16.mxu0 0
        %1336 = vmatpush1.bf16.msra.mxu0 %v1285
        %1337 = vmatprep.subr.bf16.mxu0 0
        %1338 = vmatpush1.bf16.msra.mxu0 %v1286
        %1339 = vmatprep.subr.bf16.mxu0 0
        %1340 = vmatpush1.bf16.msra.mxu0 %v1287
        %1341 = vmatprep.subr.bf16.mxu0 0
        %1342 = vmatpush1.bf16.msra.mxu0 %v1288
        %1343 = vmatprep.subr.bf16.mxu0 0
        %1344 = vmatpush1.bf16.msra.mxu0 %v1289
        %1345 = vmatprep.subr.bf16.mxu0 0
        %1346 = vmatpush1.bf16.msra.mxu0 %v1290
        %1347 = vmatprep.subr.bf16.mxu0 0
        %1348 = vmatpush1.bf16.msra.mxu0 %v1291
        %1349 = vmatprep.subr.bf16.mxu0 0
        %1350 = vmatpush1.bf16.msra.mxu0 %v1292
        %1351 = vmatprep.subr.bf16.mxu0 0
        %1352 = vmatpush1.bf16.msra.mxu0 %v1293
        %1353 = vmatprep.subr.bf16.mxu0 0
        %1354 = vmatpush1.bf16.msra.mxu0 %v1294
        %1355 = vmatprep.subr.bf16.mxu0 0
        %1356 = vmatpush1.bf16.msra.mxu0 %v1295
        %1357 = vmatprep.subr.bf16.mxu0 0
        %1358 = vmatpush1.bf16.msra.mxu0 %v1296
        %1359 = vmatprep.subr.bf16.mxu0 0
        %1360 = vmatpush1.bf16.msra.mxu0 %v1297
        %1361 = vmatprep.subr.bf16.mxu0 0
        %1362 = vmatpush1.bf16.msra.mxu0 %v1298
        %1363 = vmatprep.mubr.bf16.mxu0 %v534
        %1364 = vmatmul.mubr.bf16.gmra.mrb[0].mxu0 %v472
        %v1365 = vpop.f32.mrb[0].mxu0
        %v1366 = vadd.f32 %v1109, %v1365
        %v1367 = vpop.f32.mrb[0].mxu0
        %v1368 = vpop.f32.mrb[0].mxu0
        %v1369 = vadd.f32 %v1112, %v1368
        %v1370 = vpop.f32.mrb[0].mxu0
        %1371 = vmatprep.mubr.bf16.mxu0 %v546
        %1372 = vmatmul.mubr.bf16.gmra.mrb[0].mxu0 %v473
        %v1373 = vpop.f32.mrb[0].mxu0
        %v1374 = vadd.f32 %v1117, %v1373
        %v1375 = vpop.f32.mrb[0].mxu0
        %v1376 = vpop.f32.mrb[0].mxu0
        %v1377 = vadd.f32 %v1120, %v1376
        %v1378 = vpop.f32.mrb[0].mxu0
        %1379 = vmatprep.mubr.bf16.mxu0 %v558
        %1380 = vmatmul.mubr.bf16.gmra.mrb[0].mxu0 %v474
        %v1381 = vpop.f32.mrb[0].mxu0
        %v1382 = vadd.f32 %v1125, %v1381
        %v1383 = vpop.f32.mrb[0].mxu0
        %v1384 = vpop.f32.mrb[0].mxu0
        %v1385 = vadd.f32 %v1128, %v1384
        %v1386 = vpop.f32.mrb[0].mxu0
        %1387 = vmatprep.mubr.bf16.mxu0 %v570
        %1388 = vmatmul.mubr.bf16.gmra.mrb[0].mxu0 %v475
        %v1389 = vpop.f32.mrb[0].mxu0
        %v1390 = vadd.f32 %v1133, %v1389
        %v1391 = vpop.f32.mrb[0].mxu0
        %v1392 = vpop.f32.mrb[0].mxu0
        %v1393 = vadd.f32 %v1136, %v1392
        %v1394 = vpop.f32.mrb[0].mxu0
        %1395 = vmatprep.mubr.bf16.mxu0 %v582
        %1396 = vmatmul.mubr.bf16.gmra.mrb[0].mxu0 %v476
        %v1397 = vpop.f32.mrb[0].mxu0
        %v1398 = vadd.f32 %v1141, %v1397
        %v1399 = vpop.f32.mrb[0].mxu0
        %v1400 = vpop.f32.mrb[0].mxu0
        %v1401 = vadd.f32 %v1144, %v1400
        %v1402 = vpop.f32.mrb[0].mxu0
        %1403 = vmatprep.mubr.bf16.mxu0 %v594
        %1404 = vmatmul.mubr.bf16.gmra.mrb[0].mxu0 %v477
        %v1405 = vpop.f32.mrb[0].mxu0
        %v1406 = vadd.f32 %v1149, %v1405
        %v1407 = vpop.f32.mrb[0].mxu0
        %v1408 = vpop.f32.mrb[0].mxu0
        %v1409 = vadd.f32 %v1152, %v1408
        %v1410 = vpop.f32.mrb[0].mxu0
        %1411 = vmatprep.mubr.bf16.mxu0 %v606
        %1412 = vmatmul.mubr.bf16.gmra.mrb[0].mxu0 %v478
        %v1413 = vpop.f32.mrb[0].mxu0
        %v1414 = vadd.f32 %v1157, %v1413
        %v1415 = vpop.f32.mrb[0].mxu0
        %v1416 = vpop.f32.mrb[0].mxu0
        %v1417 = vadd.f32 %v1160, %v1416
        %v1418 = vpop.f32.mrb[0].mxu0
        %1419 = vmatprep.mubr.bf16.mxu0 %v618
        %1420 = vmatmul.mubr.bf16.gmra.mrb[0].mxu0 %v479
        %v1421 = vpop.f32.mrb[0].mxu0
        %v1422 = vadd.f32 %v1165, %v1421
        %v1423 = vpop.f32.mrb[0].mxu0
        %v1424 = vpop.f32.mrb[0].mxu0
        %v1425 = vadd.f32 %v1168, %v1424
        %v1426 = vpop.f32.mrb[0].mxu0
        %1427 = vmatprep.mubr.bf16.mxu0 %v630
        %1428 = vmatmul.mubr.bf16.gmra.mrb[0].mxu0 %v480
        %v1429 = vpop.f32.mrb[0].mxu0
        %v1430 = vadd.f32 %v1173, %v1429
        %v1431 = vpop.f32.mrb[0].mxu0
        %v1432 = vpop.f32.mrb[0].mxu0
        %v1433 = vadd.f32 %v1176, %v1432
        %v1434 = vpop.f32.mrb[0].mxu0
        %1435 = vmatprep.mubr.bf16.mxu0 %v642
        %1436 = vmatmul.mubr.bf16.gmra.mrb[0].mxu0 %v481
        %v1437 = vpop.f32.mrb[0].mxu0
        %v1438 = vadd.f32 %v1181, %v1437
        %v1439 = vpop.f32.mrb[0].mxu0
        %v1440 = vpop.f32.mrb[0].mxu0
        %v1441 = vadd.f32 %v1184, %v1440
        %v1442 = vpop.f32.mrb[0].mxu0
        %1443 = vdwg.mxu0
        %1444 = vmatprep.subr.bf16.mxu0 0
        %1445 = vmatpush1.bf16.msra.mxu0 %v1299
        %1446 = vmatprep.subr.bf16.mxu0 0
        %1447 = vmatpush1.bf16.msra.mxu0 %v1300
        %1448 = vmatprep.subr.bf16.mxu0 0
        %1449 = vmatpush1.bf16.msra.mxu0 %v1301
        %1450 = vmatprep.subr.bf16.mxu0 0
        %1451 = vmatpush1.bf16.msra.mxu0 %v1302
        %1452 = vmatprep.subr.bf16.mxu0 0
        %1453 = vmatpush1.bf16.msra.mxu0 %v1303
        %1454 = vmatprep.subr.bf16.mxu0 0
        %1455 = vmatpush1.bf16.msra.mxu0 %v1304
        %1456 = vmatprep.subr.bf16.mxu0 0
        %1457 = vmatpush1.bf16.msra.mxu0 %v1305
        %1458 = vmatprep.subr.bf16.mxu0 0
        %1459 = vmatpush1.bf16.msra.mxu0 %v1306
        %1460 = vmatprep.subr.bf16.mxu0 0
        %1461 = vmatpush1.bf16.msra.mxu0 0
        %1462 = vmatprep.subr.bf16.mxu0 0
        %1463 = vmatpush1.bf16.msra.mxu0 0
        %1464 = vmatprep.subr.bf16.mxu0 0
        %1465 = vmatpush1.bf16.msra.mxu0 0
        %1466 = vmatprep.subr.bf16.mxu0 0
        %1467 = vmatpush1.bf16.msra.mxu0 0
        %1468 = vmatprep.subr.bf16.mxu0 0
        %1469 = vmatpush1.bf16.msra.mxu0 0
        %1470 = vmatprep.subr.bf16.mxu0 0
        %1471 = vmatpush1.bf16.msra.mxu0 0
        %1472 = vmatprep.subr.bf16.mxu0 0
        %1473 = vmatpush1.bf16.msra.mxu0 0
        %1474 = vmatprep.subr.bf16.mxu0 0
        %1475 = vmatpush1.bf16.msra.mxu0 0
        %1476 = vmatprep.mubr.bf16.mxu0 0
        %1477 = vmatmul.mubr.bf16.gmra.mrb[0].mxu0 %v656
        %v1478 = vpop.f32.mrb[0].mxu0
        %v1479 = vadd.f32 %v1366, %v1478
        %v1480 = vpop.f32.mrb[0].mxu0
        %v1481 = vpop.f32.mrb[0].mxu0
        %v1482 = vadd.f32 %v1369, %v1481
        %v1483 = vpop.f32.mrb[0].mxu0
        %1484 = vmatprep.mubr.bf16.mxu0 0
        %1485 = vmatmul.mubr.bf16.gmra.mrb[0].mxu0 %v659
        %v1486 = vpop.f32.mrb[0].mxu0
        %v1487 = vadd.f32 %v1374, %v1486
        %v1488 = vpop.f32.mrb[0].mxu0
        %v1489 = vpop.f32.mrb[0].mxu0
        %v1490 = vadd.f32 %v1377, %v1489
        %v1491 = vpop.f32.mrb[0].mxu0
        %1492 = vmatprep.mubr.bf16.mxu0 0
        %1493 = vmatmul.mubr.bf16.gmra.mrb[0].mxu0 %v662
        %v1494 = vpop.f32.mrb[0].mxu0
        %v1495 = vadd.f32 %v1382, %v1494
        %v1496 = vpop.f32.mrb[0].mxu0
        %v1497 = vpop.f32.mrb[0].mxu0
        %v1498 = vadd.f32 %v1385, %v1497
        %v1499 = vpop.f32.mrb[0].mxu0
        %1500 = vmatprep.mubr.bf16.mxu0 0
        %1501 = vmatmul.mubr.bf16.gmra.mrb[0].mxu0 %v665
        %v1502 = vpop.f32.mrb[0].mxu0
        %v1503 = vadd.f32 %v1390, %v1502
        %v1504 = vpop.f32.mrb[0].mxu0
        %v1505 = vpop.f32.mrb[0].mxu0
        %v1506 = vadd.f32 %v1393, %v1505
        %v1507 = vpop.f32.mrb[0].mxu0
        %1508 = vmatprep.mubr.bf16.mxu0 0
        %1509 = vmatmul.mubr.bf16.gmra.mrb[0].mxu0 %v668
        %v1510 = vpop.f32.mrb[0].mxu0
        %v1511 = vadd.f32 %v1398, %v1510
        %v1512 = vpop.f32.mrb[0].mxu0
        %v1513 = vpop.f32.mrb[0].mxu0
        %v1514 = vadd.f32 %v1401, %v1513
        %v1515 = vpop.f32.mrb[0].mxu0
        %1516 = vmatprep.mubr.bf16.mxu0 0
        %1517 = vmatmul.mubr.bf16.gmra.mrb[0].mxu0 %v671
        %v1518 = vpop.f32.mrb[0].mxu0
        %v1519 = vadd.f32 %v1406, %v1518
        %v1520 = vpop.f32.mrb[0].mxu0
        %v1521 = vpop.f32.mrb[0].mxu0
        %v1522 = vadd.f32 %v1409, %v1521
        %v1523 = vpop.f32.mrb[0].mxu0
        %1524 = vmatprep.mubr.bf16.mxu0 0
        %1525 = vmatmul.mubr.bf16.gmra.mrb[0].mxu0 %v674
        %v1526 = vpop.f32.mrb[0].mxu0
        %v1527 = vadd.f32 %v1414, %v1526
        %v1528 = vpop.f32.mrb[0].mxu0
        %v1529 = vpop.f32.mrb[0].mxu0
        %v1530 = vadd.f32 %v1417, %v1529
        %v1531 = vpop.f32.mrb[0].mxu0
        %1532 = vmatprep.mubr.bf16.mxu0 0
        %1533 = vmatmul.mubr.bf16.gmra.mrb[0].mxu0 %v677
        %v1534 = vpop.f32.mrb[0].mxu0
        %v1535 = vadd.f32 %v1422, %v1534
        %v1536 = vpop.f32.mrb[0].mxu0
        %v1537 = vpop.f32.mrb[0].mxu0
        %v1538 = vadd.f32 %v1425, %v1537
        %v1539 = vpop.f32.mrb[0].mxu0
        %1540 = vmatprep.mubr.bf16.mxu0 0
        %1541 = vmatmul.mubr.bf16.gmra.mrb[0].mxu0 %v680
        %v1542 = vpop.f32.mrb[0].mxu0
        %v1543 = vadd.f32 %v1430, %v1542
        %v1544 = vpop.f32.mrb[0].mxu0
        %v1545 = vpop.f32.mrb[0].mxu0
        %v1546 = vadd.f32 %v1433, %v1545
        %v1547 = vpop.f32.mrb[0].mxu0
        %1548 = vmatprep.mubr.bf16.mxu0 0
        %1549 = vmatmul.mubr.bf16.gmra.mrb[0].mxu0 %v683
        %v1550 = vpop.f32.mrb[0].mxu0
        %v1551 = vadd.f32 %v1438, %v1550
        %v1552 = vpop.f32.mrb[0].mxu0
        %v1553 = vpop.f32.mrb[0].mxu0
        %v1554 = vadd.f32 %v1441, %v1553
        %v1555 = vpop.f32.mrb[0].mxu0
        %1556 = vdwg.mxu0
        %v1559 = vunpack.c.l.b16 %v429
        %v1560 = vunpack.c.l.b16 %v430
        %v1561 = vpack.c.b16 %v1560, %v1559
        %v1564 = vunpack.c.l.b16 %v431
        %v1565 = vpack.c.b16 %v1564, %v1564
        %v1567 = vshrl.u32 %v1561, 16
        %v1569 = vshll.u32 %v1561, 16
        %v1571 = vrot.slane %v1569, 1
        %v1572 = vor.u32 %v1567, %v1571
        %v1574 = vshll.u32 %v1565, 16
        %v1576 = vrot.slane %v1574, 1
        %v1577 = vsel %vm522, %v1572, %v1576
        %v1579 = vrot.slane %v1561, 1
        %v1580 = vrot.slane %v1565, 1
        %v1581 = vsel %vm653, %v1579, %v1580
        %s1583 = scalar_lea.vmem [#allocation6], 384
        %v1584 = vld [vmem:[%s1583] sm:$0xf]
        %v1585 = vld [vmem:[%s1583 + $0x4] sm:$0xf]
        %v1586 = vld [vmem:[%s1583 + $0x8] sm:$0xf]
        %v1587 = vld [vmem:[%s1583 + $0xc] sm:$0xf]
        %v1588 = vld [vmem:[%s1583 + $0x10] sm:$0xf]
        %v1589 = vld [vmem:[%s1583 + $0x14] sm:$0xf]
        %v1590 = vld [vmem:[%s1583 + $0x18] sm:$0xf]
        %v1591 = vld [vmem:[%s1583 + $0x1c] sm:$0xf]
        %v1592 = vld [vmem:[%s1583 + $0x20] sm:$0xf]
        %v1593 = vld [vmem:[%s1583 + $0x24] sm:$0xf]
        %v1594 = vld [vmem:[%s1583 + $0x28] sm:$0xf]
        %v1595 = vld [vmem:[%s1583 + $0x2c] sm:$0xf]
        %v1596 = vld [vmem:[%s1583 + $0x30] sm:$0xf]
        %v1597 = vld [vmem:[%s1583 + $0x34] sm:$0xf]
        %v1598 = vld [vmem:[%s1583 + $0x38] sm:$0xf]
        %v1599 = vld [vmem:[%s1583 + $0x3c] sm:$0xf]
        %v1600 = vld [vmem:[%s1583 + $0x40] sm:$0xf]
        %v1601 = vld [vmem:[%s1583 + $0x44] sm:$0xf]
        %v1602 = vld [vmem:[%s1583 + $0x48] sm:$0xf]
        %v1603 = vld [vmem:[%s1583 + $0x4c] sm:$0xf]
        %v1604 = vld [vmem:[%s1583 + $0x50] sm:$0xf]
        %v1605 = vld [vmem:[%s1583 + $0x54] sm:$0xf]
        %v1606 = vld [vmem:[%s1583 + $0x58] sm:$0xf]
        %v1607 = vld [vmem:[%s1583 + $0x5c] sm:$0xf]
        %v1608 = vld [vmem:[%s1583 + $0x60] sm:$0xf]
        %v1609 = vld [vmem:[%s1583 + $0x64] sm:$0xf]
        %v1610 = vld [vmem:[%s1583 + $0x68] sm:$0xf]
        %v1611 = vld [vmem:[%s1583 + $0x6c] sm:$0xf]
        %v1612 = vld [vmem:[%s1583 + $0x70] sm:$0xf]
        %v1613 = vld [vmem:[%s1583 + $0x74] sm:$0xf]
        %v1614 = vld [vmem:[%s1583 + $0x78] sm:$0xf]
        %v1615 = vld [vmem:[%s1583 + $0x7c] sm:$0xf]
        %v1616 = vld [vmem:[%s1583 + $0x80] sm:$0xf]
        %v1617 = vld [vmem:[%s1583 + $0x84] sm:$0xf]
        %v1618 = vld [vmem:[%s1583 + $0x88] sm:$0xf]
        %v1619 = vld [vmem:[%s1583 + $0x8c] sm:$0xf]
        %v1620 = vld [vmem:[%s1583 + $0x90] sm:$0xf]
        %v1621 = vld [vmem:[%s1583 + $0x94] sm:$0xf]
        %v1622 = vld [vmem:[%s1583 + $0x98] sm:$0xf]
        %v1623 = vld [vmem:[%s1583 + $0x9c] sm:$0xf]
        %v1624 = vld [vmem:[%s1583 + $0xa0] sm:$0xf]
        %v1625 = vld [vmem:[%s1583 + $0xa4] sm:$0xf]
        %v1626 = vld [vmem:[%s1583 + $0xa8] sm:$0xf]
        %v1627 = vld [vmem:[%s1583 + $0xac] sm:$0xf]
        %v1628 = vld [vmem:[%s1583 + $0xb0] sm:$0xf]
        %v1629 = vld [vmem:[%s1583 + $0xb4] sm:$0xf]
        %v1630 = vld [vmem:[%s1583 + $0xb8] sm:$0xf]
        %v1631 = vld [vmem:[%s1583 + $0xbc] sm:$0xf]
        %v1680 = vunpack.c.l.b16 %v1584
        %v1681 = vunpack.c.l.b16 %v1585
        %v1682 = vunpack.c.l.b16 %v1586
        %v1683 = vunpack.c.l.b16 %v1587
        %v1684 = vunpack.c.l.b16 %v1588
        %v1685 = vunpack.c.l.b16 %v1589
        %v1686 = vunpack.c.l.b16 %v1590
        %v1687 = vunpack.c.l.b16 %v1591
        %v1688 = vunpack.c.l.b16 %v1592
        %v1689 = vunpack.c.l.b16 %v1593
        %v1690 = vunpack.c.l.b16 %v1594
        %v1691 = vunpack.c.l.b16 %v1595
        %v1692 = vunpack.c.l.b16 %v1596
        %v1693 = vunpack.c.l.b16 %v1597
        %v1694 = vunpack.c.l.b16 %v1598
        %v1695 = vunpack.c.l.b16 %v1599
        %v1696 = vunpack.c.l.b16 %v1600
        %v1697 = vunpack.c.l.b16 %v1601
        %v1698 = vunpack.c.l.b16 %v1602
        %v1699 = vunpack.c.l.b16 %v1603
        %v1700 = vunpack.c.l.b16 %v1604
        %v1701 = vunpack.c.l.b16 %v1605
        %v1702 = vunpack.c.l.b16 %v1606
        %v1703 = vunpack.c.l.b16 %v1607
        %v1704 = vunpack.c.l.b16 %v1608
        %v1705 = vunpack.c.l.b16 %v1609
        %v1706 = vunpack.c.l.b16 %v1610
        %v1707 = vunpack.c.l.b16 %v1611
        %v1708 = vunpack.c.l.b16 %v1612
        %v1709 = vunpack.c.l.b16 %v1613
        %v1710 = vunpack.c.l.b16 %v1614
        %v1711 = vunpack.c.l.b16 %v1615
        %v1712 = vunpack.c.l.b16 %v1616
        %v1713 = vunpack.c.l.b16 %v1617
        %v1714 = vunpack.c.l.b16 %v1618
        %v1715 = vunpack.c.l.b16 %v1619
        %v1716 = vunpack.c.l.b16 %v1620
        %v1717 = vunpack.c.l.b16 %v1621
        %v1718 = vunpack.c.l.b16 %v1622
        %v1719 = vunpack.c.l.b16 %v1623
        %v1720 = vunpack.c.l.b16 %v1624
        %v1721 = vunpack.c.l.b16 %v1625
        %v1722 = vunpack.c.l.b16 %v1626
        %v1723 = vunpack.c.l.b16 %v1627
        %v1724 = vunpack.c.l.b16 %v1628
        %v1725 = vunpack.c.l.b16 %v1629
        %v1726 = vunpack.c.l.b16 %v1630
        %v1727 = vunpack.c.l.b16 %v1631
        %v1728 = vpack.c.b16 %v1681, %v1680
        %v1729 = vpack.c.b16 %v1683, %v1682
        %v1730 = vpack.c.b16 %v1685, %v1684
        %v1731 = vpack.c.b16 %v1687, %v1686
        %v1732 = vpack.c.b16 %v1689, %v1688
        %v1733 = vpack.c.b16 %v1691, %v1690
        %v1734 = vpack.c.b16 %v1693, %v1692
        %v1735 = vpack.c.b16 %v1695, %v1694
        %v1736 = vpack.c.b16 %v1697, %v1696
        %v1737 = vpack.c.b16 %v1699, %v1698
        %v1738 = vpack.c.b16 %v1701, %v1700
        %v1739 = vpack.c.b16 %v1703, %v1702
        %v1740 = vpack.c.b16 %v1705, %v1704
        %v1741 = vpack.c.b16 %v1707, %v1706
        %v1742 = vpack.c.b16 %v1709, %v1708
        %v1743 = vpack.c.b16 %v1711, %v1710
        %v1744 = vpack.c.b16 %v1713, %v1712
        %v1745 = vpack.c.b16 %v1715, %v1714
        %v1746 = vpack.c.b16 %v1717, %v1716
        %v1747 = vpack.c.b16 %v1719, %v1718
        %v1748 = vpack.c.b16 %v1721, %v1720
        %v1749 = vpack.c.b16 %v1723, %v1722
        %v1750 = vpack.c.b16 %v1725, %v1724
        %v1751 = vpack.c.b16 %v1727, %v1726
        %1776 = vmatprep.subr.bf16.mxu0 0
        %1777 = vmatpush1.bf16.msra.mxu0 %v1728
        %1778 = vmatprep.subr.bf16.mxu0 0
        %1779 = vmatpush1.bf16.msra.mxu0 %v1729
        %1780 = vmatprep.subr.bf16.mxu0 0
        %1781 = vmatpush1.bf16.msra.mxu0 %v1730
        %1782 = vmatprep.subr.bf16.mxu0 0
        %1783 = vmatpush1.bf16.msra.mxu0 %v1731
        %1784 = vmatprep.subr.bf16.mxu0 0
        %1785 = vmatpush1.bf16.msra.mxu0 %v1732
        %1786 = vmatprep.subr.bf16.mxu0 0
        %1787 = vmatpush1.bf16.msra.mxu0 %v1733
        %1788 = vmatprep.subr.bf16.mxu0 0
        %1789 = vmatpush1.bf16.msra.mxu0 %v1734
        %1790 = vmatprep.subr.bf16.mxu0 0
        %1791 = vmatpush1.bf16.msra.mxu0 %v1735
        %1792 = vmatprep.subr.bf16.mxu0 0
        %1793 = vmatpush1.bf16.msra.mxu0 %v1736
        %1794 = vmatprep.subr.bf16.mxu0 0
        %1795 = vmatpush1.bf16.msra.mxu0 %v1737
        %1796 = vmatprep.subr.bf16.mxu0 0
        %1797 = vmatpush1.bf16.msra.mxu0 %v1738
        %1798 = vmatprep.subr.bf16.mxu0 0
        %1799 = vmatpush1.bf16.msra.mxu0 %v1739
        %1800 = vmatprep.subr.bf16.mxu0 0
        %1801 = vmatpush1.bf16.msra.mxu0 %v1740
        %1802 = vmatprep.subr.bf16.mxu0 0
        %1803 = vmatpush1.bf16.msra.mxu0 %v1741
        %1804 = vmatprep.subr.bf16.mxu0 0
        %1805 = vmatpush1.bf16.msra.mxu0 %v1742
        %1806 = vmatprep.subr.bf16.mxu0 0
        %1807 = vmatpush1.bf16.msra.mxu0 %v1743
        %1808 = vmatprep.mubr.bf16.mxu0 %v558
        %1809 = vmatmul.mubr.bf16.gmra.mrb[0].mxu0 %v474
        %v1810 = vpop.f32.mrb[0].mxu0
        %v1811 = vadd.f32 0.0, %v1810
        %v1812 = vpop.f32.mrb[0].mxu0
        %v1813 = vpop.f32.mrb[0].mxu0
        %v1814 = vadd.f32 0.0, %v1813
        %v1815 = vpop.f32.mrb[0].mxu0
        %1816 = vmatprep.mubr.bf16.mxu0 %v570
        %1817 = vmatmul.mubr.bf16.gmra.mrb[0].mxu0 %v475
        %v1818 = vpop.f32.mrb[0].mxu0
        %v1819 = vadd.f32 0.0, %v1818
        %v1820 = vpop.f32.mrb[0].mxu0
        %v1821 = vpop.f32.mrb[0].mxu0
        %v1822 = vadd.f32 0.0, %v1821
        %v1823 = vpop.f32.mrb[0].mxu0
        %1824 = vmatprep.mubr.bf16.mxu0 %v582
        %1825 = vmatmul.mubr.bf16.gmra.mrb[0].mxu0 %v476
        %v1826 = vpop.f32.mrb[0].mxu0
        %v1827 = vadd.f32 0.0, %v1826
        %v1828 = vpop.f32.mrb[0].mxu0
        %v1829 = vpop.f32.mrb[0].mxu0
        %v1830 = vadd.f32 0.0, %v1829
        %v1831 = vpop.f32.mrb[0].mxu0
        %1832 = vmatprep.mubr.bf16.mxu0 %v594
        %1833 = vmatmul.mubr.bf16.gmra.mrb[0].mxu0 %v477
        %v1834 = vpop.f32.mrb[0].mxu0
        %v1835 = vadd.f32 0.0, %v1834
        %v1836 = vpop.f32.mrb[0].mxu0
        %v1837 = vpop.f32.mrb[0].mxu0
        %v1838 = vadd.f32 0.0, %v1837
        %v1839 = vpop.f32.mrb[0].mxu0
        %1840 = vmatprep.mubr.bf16.mxu0 %v606
        %1841 = vmatmul.mubr.bf16.gmra.mrb[0].mxu0 %v478
        %v1842 = vpop.f32.mrb[0].mxu0
        %v1843 = vadd.f32 0.0, %v1842
        %v1844 = vpop.f32.mrb[0].mxu0
        %v1845 = vpop.f32.mrb[0].mxu0
        %v1846 = vadd.f32 0.0, %v1845
        %v1847 = vpop.f32.mrb[0].mxu0
        %1848 = vmatprep.mubr.bf16.mxu0 %v618
        %1849 = vmatmul.mubr.bf16.gmra.mrb[0].mxu0 %v479
        %v1850 = vpop.f32.mrb[0].mxu0
        %v1851 = vadd.f32 0.0, %v1850
        %v1852 = vpop.f32.mrb[0].mxu0
        %v1853 = vpop.f32.mrb[0].mxu0
        %v1854 = vadd.f32 0.0, %v1853
        %v1855 = vpop.f32.mrb[0].mxu0
        %1856 = vmatprep.mubr.bf16.mxu0 %v630
        %1857 = vmatmul.mubr.bf16.gmra.mrb[0].mxu0 %v480
        %v1858 = vpop.f32.mrb[0].mxu0
        %v1859 = vadd.f32 0.0, %v1858
        %v1860 = vpop.f32.mrb[0].mxu0
        %v1861 = vpop.f32.mrb[0].mxu0
        %v1862 = vadd.f32 0.0, %v1861
        %v1863 = vpop.f32.mrb[0].mxu0
        %1864 = vmatprep.mubr.bf16.mxu0 %v642
        %1865 = vmatmul.mubr.bf16.gmra.mrb[0].mxu0 %v481
        %v1866 = vpop.f32.mrb[0].mxu0
        %v1867 = vadd.f32 0.0, %v1866
        %v1868 = vpop.f32.mrb[0].mxu0
        %v1869 = vpop.f32.mrb[0].mxu0
        %v1870 = vadd.f32 0.0, %v1869
        %v1871 = vpop.f32.mrb[0].mxu0
        %1872 = vmatprep.mubr.bf16.mxu0 %v762
        %1873 = vmatmul.mubr.bf16.gmra.mrb[0].mxu0 %v746
        %v1874 = vpop.f32.mrb[0].mxu0
        %v1875 = vadd.f32 0.0, %v1874
        %v1876 = vpop.f32.mrb[0].mxu0
        %v1877 = vpop.f32.mrb[0].mxu0
        %v1878 = vadd.f32 0.0, %v1877
        %v1879 = vpop.f32.mrb[0].mxu0
        %1880 = vmatprep.mubr.bf16.mxu0 %v1577
        %1881 = vmatmul.mubr.bf16.gmra.mrb[0].mxu0 %v1561
        %v1882 = vpop.f32.mrb[0].mxu0
        %v1883 = vadd.f32 0.0, %v1882
        %v1884 = vpop.f32.mrb[0].mxu0
        %v1885 = vpop.f32.mrb[0].mxu0
        %v1886 = vadd.f32 0.0, %v1885
        %v1887 = vpop.f32.mrb[0].mxu0
        %1888 = vdwg.mxu0
        %1889 = vmatprep.subr.bf16.mxu0 0
        %1890 = vmatpush1.bf16.msra.mxu0 %v1744
        %1891 = vmatprep.subr.bf16.mxu0 0
        %1892 = vmatpush1.bf16.msra.mxu0 %v1745
        %1893 = vmatprep.subr.bf16.mxu0 0
        %1894 = vmatpush1.bf16.msra.mxu0 %v1746
        %1895 = vmatprep.subr.bf16.mxu0 0
        %1896 = vmatpush1.bf16.msra.mxu0 %v1747
        %1897 = vmatprep.subr.bf16.mxu0 0
        %1898 = vmatpush1.bf16.msra.mxu0 %v1748
        %1899 = vmatprep.subr.bf16.mxu0 0
        %1900 = vmatpush1.bf16.msra.mxu0 %v1749
        %1901 = vmatprep.subr.bf16.mxu0 0
        %1902 = vmatpush1.bf16.msra.mxu0 %v1750
        %1903 = vmatprep.subr.bf16.mxu0 0
        %1904 = vmatpush1.bf16.msra.mxu0 %v1751
        %1905 = vmatprep.subr.bf16.mxu0 0
        %1906 = vmatpush1.bf16.msra.mxu0 0
        %1907 = vmatprep.subr.bf16.mxu0 0
        %1908 = vmatpush1.bf16.msra.mxu0 0
        %1909 = vmatprep.subr.bf16.mxu0 0
        %1910 = vmatpush1.bf16.msra.mxu0 0
        %1911 = vmatprep.subr.bf16.mxu0 0
        %1912 = vmatpush1.bf16.msra.mxu0 0
        %1913 = vmatprep.subr.bf16.mxu0 0
        %1914 = vmatpush1.bf16.msra.mxu0 0
        %1915 = vmatprep.subr.bf16.mxu0 0
        %1916 = vmatpush1.bf16.msra.mxu0 0
        %1917 = vmatprep.subr.bf16.mxu0 0
        %1918 = vmatpush1.bf16.msra.mxu0 0
        %1919 = vmatprep.subr.bf16.mxu0 0
        %1920 = vmatpush1.bf16.msra.mxu0 0
        %1921 = vmatprep.mubr.bf16.mxu0 0
        %1922 = vmatmul.mubr.bf16.gmra.mrb[0].mxu0 %v662
        %v1923 = vpop.f32.mrb[0].mxu0
        %v1924 = vadd.f32 %v1811, %v1923
        %v1925 = vpop.f32.mrb[0].mxu0
        %v1926 = vpop.f32.mrb[0].mxu0
        %v1927 = vadd.f32 %v1814, %v1926
        %v1928 = vpop.f32.mrb[0].mxu0
        %1929 = vmatprep.mubr.bf16.mxu0 0
        %1930 = vmatmul.mubr.bf16.gmra.mrb[0].mxu0 %v665
        %v1931 = vpop.f32.mrb[0].mxu0
        %v1932 = vadd.f32 %v1819, %v1931
        %v1933 = vpop.f32.mrb[0].mxu0
        %v1934 = vpop.f32.mrb[0].mxu0
        %v1935 = vadd.f32 %v1822, %v1934
        %v1936 = vpop.f32.mrb[0].mxu0
        %1937 = vmatprep.mubr.bf16.mxu0 0
        %1938 = vmatmul.mubr.bf16.gmra.mrb[0].mxu0 %v668
        %v1939 = vpop.f32.mrb[0].mxu0
        %v1940 = vadd.f32 %v1827, %v1939
        %v1941 = vpop.f32.mrb[0].mxu0
        %v1942 = vpop.f32.mrb[0].mxu0
        %v1943 = vadd.f32 %v1830, %v1942
        %v1944 = vpop.f32.mrb[0].mxu0
        %1945 = vmatprep.mubr.bf16.mxu0 0
        %1946 = vmatmul.mubr.bf16.gmra.mrb[0].mxu0 %v671
        %v1947 = vpop.f32.mrb[0].mxu0
        %v1948 = vadd.f32 %v1835, %v1947
        %v1949 = vpop.f32.mrb[0].mxu0
        %v1950 = vpop.f32.mrb[0].mxu0
        %v1951 = vadd.f32 %v1838, %v1950
        %v1952 = vpop.f32.mrb[0].mxu0
        %1953 = vmatprep.mubr.bf16.mxu0 0
        %1954 = vmatmul.mubr.bf16.gmra.mrb[0].mxu0 %v674
        %v1955 = vpop.f32.mrb[0].mxu0
        %v1956 = vadd.f32 %v1843, %v1955
        %v1957 = vpop.f32.mrb[0].mxu0
        %v1958 = vpop.f32.mrb[0].mxu0
        %v1959 = vadd.f32 %v1846, %v1958
        %v1960 = vpop.f32.mrb[0].mxu0
        %1961 = vmatprep.mubr.bf16.mxu0 0
        %1962 = vmatmul.mubr.bf16.gmra.mrb[0].mxu0 %v677
        %v1963 = vpop.f32.mrb[0].mxu0
        %v1964 = vadd.f32 %v1851, %v1963
        %v1965 = vpop.f32.mrb[0].mxu0
        %v1966 = vpop.f32.mrb[0].mxu0
        %v1967 = vadd.f32 %v1854, %v1966
        %v1968 = vpop.f32.mrb[0].mxu0
        %1969 = vmatprep.mubr.bf16.mxu0 0
        %1970 = vmatmul.mubr.bf16.gmra.mrb[0].mxu0 %v680
        %v1971 = vpop.f32.mrb[0].mxu0
        %v1972 = vadd.f32 %v1859, %v1971
        %v1973 = vpop.f32.mrb[0].mxu0
        %v1974 = vpop.f32.mrb[0].mxu0
        %v1975 = vadd.f32 %v1862, %v1974
        %v1976 = vpop.f32.mrb[0].mxu0
        %1977 = vmatprep.mubr.bf16.mxu0 0
        %1978 = vmatmul.mubr.bf16.gmra.mrb[0].mxu0 %v683
        %v1979 = vpop.f32.mrb[0].mxu0
        %v1980 = vadd.f32 %v1867, %v1979
        %v1981 = vpop.f32.mrb[0].mxu0
        %v1982 = vpop.f32.mrb[0].mxu0
        %v1983 = vadd.f32 %v1870, %v1982
        %v1984 = vpop.f32.mrb[0].mxu0
        %1985 = vmatprep.mubr.bf16.mxu0 0
        %1986 = vmatmul.mubr.bf16.gmra.mrb[0].mxu0 %v766
        %v1987 = vpop.f32.mrb[0].mxu0
        %v1988 = vadd.f32 %v1875, %v1987
        %v1989 = vpop.f32.mrb[0].mxu0
        %v1990 = vpop.f32.mrb[0].mxu0
        %v1991 = vadd.f32 %v1878, %v1990
        %v1992 = vpop.f32.mrb[0].mxu0
        %1993 = vmatprep.mubr.bf16.mxu0 0
        %1994 = vmatmul.mubr.bf16.gmra.mrb[0].mxu0 %v1581
        %v1995 = vpop.f32.mrb[0].mxu0
        %v1996 = vadd.f32 %v1883, %v1995
        %v1997 = vpop.f32.mrb[0].mxu0
        %v1998 = vpop.f32.mrb[0].mxu0
        %v1999 = vadd.f32 %v1886, %v1998
        %v2000 = vpop.f32.mrb[0].mxu0
        %2001 = vdwg.mxu0
        %v2002 = vadd.f32 %v1479, %v1924
        %v2003 = vadd.f32 %v1482, %v1927
        %v2004 = vadd.f32 %v1487, %v1932
        %v2005 = vadd.f32 %v1490, %v1935
        %v2006 = vadd.f32 %v1495, %v1940
        %v2007 = vadd.f32 %v1498, %v1943
        %v2008 = vadd.f32 %v1503, %v1948
        %v2009 = vadd.f32 %v1506, %v1951
        %v2010 = vadd.f32 %v1511, %v1956
        %v2011 = vadd.f32 %v1514, %v1959
        %v2012 = vadd.f32 %v1519, %v1964
        %v2013 = vadd.f32 %v1522, %v1967
        %v2014 = vadd.f32 %v1527, %v1972
        %v2015 = vadd.f32 %v1530, %v1975
        %v2016 = vadd.f32 %v1535, %v1980
        %v2017 = vadd.f32 %v1538, %v1983
        %v2018 = vadd.f32 %v1543, %v1988
        %v2019 = vadd.f32 %v1546, %v1991
        %v2020 = vadd.f32 %v1551, %v1996
        %v2021 = vadd.f32 %v1554, %v1999
        %v2022 = vld [vmem:[#allocation8] sm:$0x1]
        %v2024 = vlaneseq
        %v2025 = vshrl.u32 %v2024, 7
        %v2026 = vsub.s32 0, %v2025
        %v2027 = vrot.slane %v2022, %v2026
        %v2029 = vmul.f32 %v2002, %v2027
        %v2030 = vmul.f32 %v2003, %v2027
        %v2031 = vmul.f32 %v2004, %v2027
        %v2032 = vmul.f32 %v2005, %v2027
        %v2033 = vmul.f32 %v2006, %v2027
        %v2034 = vmul.f32 %v2007, %v2027
        %v2035 = vmul.f32 %v2008, %v2027
        %v2036 = vmul.f32 %v2009, %v2027
        %v2037 = vmul.f32 %v2010, %v2027
        %v2038 = vmul.f32 %v2011, %v2027
        %v2039 = vmul.f32 %v2012, %v2027
        %v2040 = vmul.f32 %v2013, %v2027
        %v2041 = vmul.f32 %v2014, %v2027
        %v2042 = vmul.f32 %v2015, %v2027
        %v2043 = vmul.f32 %v2016, %v2027
        %v2044 = vmul.f32 %v2017, %v2027
        %v2045 = vmul.f32 %v2018, %v2027
        %v2046 = vmul.f32 %v2019, %v2027
        %v2047 = vmul.f32 %v2020, %v2027
        %v2048 = vmul.f32 %v2021, %v2027
        %v2049 = vld [vmem:[#allocation9] sm:$0x1]
        %v2051 = vlaneseq
        %v2052 = vshrl.u32 %v2051, 7
        %v2053 = vsub.s32 0, %v2052
        %v2054 = vrot.slane %v2049, %v2053
        %v2056 = vadd.f32 %v2029, %v2054
        %v2057 = vadd.f32 %v2030, %v2054
        %v2058 = vadd.f32 %v2031, %v2054
        %v2059 = vadd.f32 %v2032, %v2054
        %v2060 = vadd.f32 %v2033, %v2054
        %v2061 = vadd.f32 %v2034, %v2054
        %v2062 = vadd.f32 %v2035, %v2054
        %v2063 = vadd.f32 %v2036, %v2054
        %v2064 = vadd.f32 %v2037, %v2054
        %v2065 = vadd.f32 %v2038, %v2054
        %v2066 = vadd.f32 %v2039, %v2054
        %v2067 = vadd.f32 %v2040, %v2054
        %v2068 = vadd.f32 %v2041, %v2054
        %v2069 = vadd.f32 %v2042, %v2054
        %v2070 = vadd.f32 %v2043, %v2054
        %v2071 = vadd.f32 %v2044, %v2054
        %v2072 = vadd.f32 %v2045, %v2054
        %v2073 = vadd.f32 %v2046, %v2054
        %v2074 = vadd.f32 %v2047, %v2054
        %v2075 = vadd.f32 %v2048, %v2054
        %v2076 = vmax.f32 %v2056, 0.0
        %v2077 = vmax.f32 %v2057, 0.0
        %v2078 = vmax.f32 %v2058, 0.0
        %v2079 = vmax.f32 %v2059, 0.0
        %v2080 = vmax.f32 %v2060, 0.0
        %v2081 = vmax.f32 %v2061, 0.0
        %v2082 = vmax.f32 %v2062, 0.0
        %v2083 = vmax.f32 %v2063, 0.0
        %v2084 = vmax.f32 %v2064, 0.0
        %v2085 = vmax.f32 %v2065, 0.0
        %v2086 = vmax.f32 %v2066, 0.0
        %v2087 = vmax.f32 %v2067, 0.0
        %v2088 = vmax.f32 %v2068, 0.0
        %v2089 = vmax.f32 %v2069, 0.0
        %v2090 = vmax.f32 %v2070, 0.0
        %v2091 = vmax.f32 %v2071, 0.0
        %v2092 = vmax.f32 %v2072, 0.0
        %v2093 = vmax.f32 %v2073, 0.0
        %v2094 = vmax.f32 %v2074, 0.0
        %v2095 = vmax.f32 %v2075, 0.0
        %s2096 = ssub.s32 %s392, 1
        %v2097 = vstv %s2096
        %v2098 = vadd.s32 %v2097, 1
        %v2099 = vadd.s32 %v2097, 2
        %v2100 = vadd.s32 %v2097, 3
        %v2101 = vadd.s32 %v2097, 4
        %v2102 = vadd.s32 %v2097, 5
        %v2103 = vadd.s32 %v2097, 6
        %v2104 = vadd.s32 %v2097, 7
        %v2105 = vadd.s32 %v2097, 8
        %v2106 = vadd.s32 %v2097, 9
        %vm2107 = vcmp.ge.s32.totalorder %v2097, 0
        %vm2108 = vcmp.ge.s32.totalorder %v2098, 0
        %vm2109 = vcmp.ge.s32.totalorder %v2099, 0
        %vm2110 = vcmp.ge.s32.totalorder %v2100, 0
        %vm2111 = vcmp.ge.s32.totalorder %v2101, 0
        %vm2112 = vcmp.ge.s32.totalorder %v2102, 0
        %vm2113 = vcmp.ge.s32.totalorder %v2103, 0
        %vm2114 = vcmp.ge.s32.totalorder %v2104, 0
        %vm2115 = vcmp.ge.s32.totalorder %v2105, 0
        %vm2116 = vcmp.ge.s32.totalorder %v2106, 0
        %vm2117 = vcmp.lt.s32.totalorder %v2097, 16
        %vm2118 = vcmp.lt.s32.totalorder %v2098, 16
        %vm2119 = vcmp.lt.s32.totalorder %v2099, 16
        %vm2120 = vcmp.lt.s32.totalorder %v2100, 16
        %vm2121 = vcmp.lt.s32.totalorder %v2101, 16
        %vm2122 = vcmp.lt.s32.totalorder %v2102, 16
        %vm2123 = vcmp.lt.s32.totalorder %v2103, 16
        %vm2124 = vcmp.lt.s32.totalorder %v2104, 16
        %vm2125 = vcmp.lt.s32.totalorder %v2105, 16
        %vm2126 = vcmp.lt.s32.totalorder %v2106, 16
        %vm2127 = vmand %vm2107, %vm2117
        %vm2128 = vmand %vm2108, %vm2118
        %vm2129 = vmand %vm2109, %vm2119
        %vm2130 = vmand %vm2110, %vm2120
        %vm2131 = vmand %vm2111, %vm2121
        %vm2132 = vmand %vm2112, %vm2122
        %vm2133 = vmand %vm2113, %vm2123
        %vm2134 = vmand %vm2114, %vm2124
        %vm2135 = vmand %vm2115, %vm2125
        %vm2136 = vmand %vm2116, %vm2126
        %v2137 = vsel %vm2127, 1, 0
        %v2138 = vsel %vm2128, 1, 0
        %v2139 = vsel %vm2129, 1, 0
        %v2140 = vsel %vm2130, 1, 0
        %v2141 = vsel %vm2131, 1, 0
        %v2142 = vsel %vm2132, 1, 0
        %v2143 = vsel %vm2133, 1, 0
        %v2144 = vsel %vm2134, 1, 0
        %v2145 = vsel %vm2135, 1, 0
        %v2146 = vsel %vm2136, 1, 0
        %vm2147 = vcmp.eq.s32.totalorder %v2137, 1
        %vm2148 = vcmp.eq.s32.totalorder %v2138, 1
        %vm2149 = vcmp.eq.s32.totalorder %v2139, 1
        %vm2150 = vcmp.eq.s32.totalorder %v2140, 1
        %vm2151 = vcmp.eq.s32.totalorder %v2141, 1
        %vm2152 = vcmp.eq.s32.totalorder %v2142, 1
        %vm2153 = vcmp.eq.s32.totalorder %v2143, 1
        %vm2154 = vcmp.eq.s32.totalorder %v2144, 1
        %vm2155 = vcmp.eq.s32.totalorder %v2145, 1
        %vm2156 = vcmp.eq.s32.totalorder %v2146, 1
        %v2157 = vsel %vm2147, %v2076, 0.0
        %v2158 = vsel %vm2147, %v2077, 0.0
        %v2159 = vsel %vm2148, %v2078, 0.0
        %v2160 = vsel %vm2148, %v2079, 0.0
        %v2161 = vsel %vm2149, %v2080, 0.0
        %v2162 = vsel %vm2149, %v2081, 0.0
        %v2163 = vsel %vm2150, %v2082, 0.0
        %v2164 = vsel %vm2150, %v2083, 0.0
        %v2165 = vsel %vm2151, %v2084, 0.0
        %v2166 = vsel %vm2151, %v2085, 0.0
        %v2167 = vsel %vm2152, %v2086, 0.0
        %v2168 = vsel %vm2152, %v2087, 0.0
        %v2169 = vsel %vm2153, %v2088, 0.0
        %v2170 = vsel %vm2153, %v2089, 0.0
        %v2171 = vsel %vm2154, %v2090, 0.0
        %v2172 = vsel %vm2154, %v2091, 0.0
        %v2173 = vsel %vm2155, %v2092, 0.0
        %v2174 = vsel %vm2155, %v2093, 0.0
        %v2175 = vsel %vm2156, %v2094, 0.0
        %v2176 = vsel %vm2156, %v2095, 0.0
        %v2177 = vpack.c.bf16 %v2158, %v2157
        %v2178 = vpack.c.bf16 %v2160, %v2159
        %v2179 = vpack.c.bf16 %v2162, %v2161
        %v2180 = vpack.c.bf16 %v2164, %v2163
        %v2181 = vpack.c.bf16 %v2166, %v2165
        %v2182 = vpack.c.bf16 %v2168, %v2167
        %v2183 = vpack.c.bf16 %v2170, %v2169
        %v2184 = vpack.c.bf16 %v2172, %v2171
        %v2185 = vpack.c.bf16 %v2174, %v2173
        %v2186 = vpack.c.bf16 %v2176, %v2175
        %v2197 = vunpack.c.l.b16 %v2177
        %v2198 = vunpack.c.h.b16 %v2177
        %v2199 = vunpack.c.l.b16 %v2178
        %v2200 = vunpack.c.h.b16 %v2178
        %v2201 = vunpack.c.l.b16 %v2179
        %v2202 = vunpack.c.h.b16 %v2179
        %v2203 = vunpack.c.l.b16 %v2180
        %v2204 = vunpack.c.h.b16 %v2180
        %v2205 = vunpack.c.l.b16 %v2181
        %v2206 = vunpack.c.h.b16 %v2181
        %v2207 = vunpack.c.l.b16 %v2182
        %v2208 = vunpack.c.h.b16 %v2182
        %v2209 = vunpack.c.l.b16 %v2183
        %v2210 = vunpack.c.h.b16 %v2183
        %v2211 = vunpack.c.l.b16 %v2184
        %v2212 = vunpack.c.h.b16 %v2184
        %v2213 = vunpack.c.l.b16 %v2185
        %v2214 = vunpack.c.h.b16 %v2185
        %v2215 = vunpack.c.l.b16 %v2186
        %v2216 = vunpack.c.h.b16 %v2186
        %v2217 = vpack.c.b16 %v2197, %v2197
        %v2218 = vpack.c.b16 %v2198, %v2198
        %v2219 = vpack.c.b16 %v2199, %v2199
        %v2220 = vpack.c.b16 %v2200, %v2200
        %v2221 = vpack.c.b16 %v2201, %v2201
        %v2222 = vpack.c.b16 %v2202, %v2202
        %v2223 = vpack.c.b16 %v2203, %v2203
        %v2224 = vpack.c.b16 %v2204, %v2204
        %v2225 = vpack.c.b16 %v2205, %v2205
        %v2226 = vpack.c.b16 %v2206, %v2206
        %v2227 = vpack.c.b16 %v2207, %v2207
        %v2228 = vpack.c.b16 %v2208, %v2208
        %v2229 = vpack.c.b16 %v2209, %v2209
        %v2230 = vpack.c.b16 %v2210, %v2210
        %v2231 = vpack.c.b16 %v2211, %v2211
        %v2232 = vpack.c.b16 %v2212, %v2212
        %v2233 = vpack.c.b16 %v2213, %v2213
        %v2234 = vpack.c.b16 %v2214, %v2214
        %v2235 = vpack.c.b16 %v2215, %v2215
        %v2236 = vpack.c.b16 %v2216, %v2216
        %vm2237 = vsmask.f32 256
        %vm2238 = vsmask.f32 4368
        %vm2239 = vmor %vm2237, %vm2238
        %v2241 = vshrl.u32 %v2217, 16
        %v2243 = vrot.slane %v2241, 7
        %v2244 = vshll.u32 %v2217, 16
        %v2246 = vor.u32 %v2243, %v2244
        %v2247 = vrot.slane %v2243, 4
        %v2249 = vshrl.u32 %v2218, 16
        %v2251 = vrot.slane %v2249, 7
        %v2252 = vshll.u32 %v2218, 16
        %v2254 = vor.u32 %v2251, %v2252
        %v2255 = vsel %vm2239, %v2247, %v2254
        %v2256 = vrot.slane %v2251, 4
        %v2258 = vshrl.u32 %v2219, 16
        %v2260 = vrot.slane %v2258, 7
        %v2261 = vshll.u32 %v2219, 16
        %v2263 = vor.u32 %v2260, %v2261
        %v2264 = vrot.slane %v2260, 4
        %v2266 = vshrl.u32 %v2220, 16
        %v2268 = vrot.slane %v2266, 7
        %v2269 = vshll.u32 %v2220, 16
        %v2271 = vor.u32 %v2268, %v2269
        %v2272 = vsel %vm2239, %v2264, %v2271
        %v2273 = vrot.slane %v2268, 4
        %v2275 = vshrl.u32 %v2221, 16
        %v2277 = vrot.slane %v2275, 7
        %v2278 = vshll.u32 %v2221, 16
        %v2280 = vor.u32 %v2277, %v2278
        %v2281 = vrot.slane %v2277, 4
        %v2283 = vshrl.u32 %v2222, 16
        %v2285 = vrot.slane %v2283, 7
        %v2286 = vshll.u32 %v2222, 16
        %v2288 = vor.u32 %v2285, %v2286
        %v2289 = vsel %vm2239, %v2281, %v2288
        %v2290 = vrot.slane %v2285, 4
        %v2292 = vshrl.u32 %v2223, 16
        %v2294 = vrot.slane %v2292, 7
        %v2295 = vshll.u32 %v2223, 16
        %v2297 = vor.u32 %v2294, %v2295
        %v2298 = vrot.slane %v2294, 4
        %v2300 = vshrl.u32 %v2224, 16
        %v2302 = vrot.slane %v2300, 7
        %v2303 = vshll.u32 %v2224, 16
        %v2305 = vor.u32 %v2302, %v2303
        %v2306 = vsel %vm2239, %v2298, %v2305
        %v2307 = vrot.slane %v2302, 4
        %v2309 = vshrl.u32 %v2225, 16
        %v2311 = vrot.slane %v2309, 7
        %v2312 = vshll.u32 %v2225, 16
        %v2314 = vor.u32 %v2311, %v2312
        %v2315 = vrot.slane %v2311, 4
        %v2317 = vshrl.u32 %v2226, 16
        %v2319 = vrot.slane %v2317, 7
        %v2320 = vshll.u32 %v2226, 16
        %v2322 = vor.u32 %v2319, %v2320
        %v2323 = vsel %vm2239, %v2315, %v2322
        %v2324 = vrot.slane %v2319, 4
        %v2326 = vshrl.u32 %v2227, 16
        %v2328 = vrot.slane %v2326, 7
        %v2329 = vshll.u32 %v2227, 16
        %v2331 = vor.u32 %v2328, %v2329
        %v2332 = vrot.slane %v2328, 4
        %v2334 = vshrl.u32 %v2228, 16
        %v2336 = vrot.slane %v2334, 7
        %v2337 = vshll.u32 %v2228, 16
        %v2339 = vor.u32 %v2336, %v2337
        %v2340 = vsel %vm2239, %v2332, %v2339
        %v2341 = vrot.slane %v2336, 4
        %v2343 = vshrl.u32 %v2229, 16
        %v2345 = vrot.slane %v2343, 7
        %v2346 = vshll.u32 %v2229, 16
        %v2348 = vor.u32 %v2345, %v2346
        %v2349 = vrot.slane %v2345, 4
        %v2351 = vshrl.u32 %v2230, 16
        %v2353 = vrot.slane %v2351, 7
        %v2354 = vshll.u32 %v2230, 16
        %v2356 = vor.u32 %v2353, %v2354
        %v2357 = vsel %vm2239, %v2349, %v2356
        %v2358 = vrot.slane %v2353, 4
        %v2360 = vshrl.u32 %v2231, 16
        %v2362 = vrot.slane %v2360, 7
        %v2363 = vshll.u32 %v2231, 16
        %v2365 = vor.u32 %v2362, %v2363
        %v2366 = vrot.slane %v2362, 4
        %v2368 = vshrl.u32 %v2232, 16
        %v2370 = vrot.slane %v2368, 7
        %v2371 = vshll.u32 %v2232, 16
        %v2373 = vor.u32 %v2370, %v2371
        %v2374 = vsel %vm2239, %v2366, %v2373
        %v2375 = vrot.slane %v2370, 4
        %v2377 = vshrl.u32 %v2233, 16
        %v2379 = vrot.slane %v2377, 7
        %v2380 = vshll.u32 %v2233, 16
        %v2382 = vor.u32 %v2379, %v2380
        %v2383 = vrot.slane %v2379, 4
        %v2385 = vshrl.u32 %v2234, 16
        %v2387 = vrot.slane %v2385, 7
        %v2388 = vshll.u32 %v2234, 16
        %v2390 = vor.u32 %v2387, %v2388
        %v2391 = vsel %vm2239, %v2383, %v2390
        %v2392 = vrot.slane %v2387, 4
        %v2394 = vshrl.u32 %v2235, 16
        %v2396 = vrot.slane %v2394, 7
        %v2397 = vshll.u32 %v2235, 16
        %v2399 = vor.u32 %v2396, %v2397
        %v2400 = vrot.slane %v2396, 4
        %v2402 = vshrl.u32 %v2236, 16
        %v2404 = vrot.slane %v2402, 7
        %v2405 = vshll.u32 %v2236, 16
        %v2407 = vor.u32 %v2404, %v2405
        %v2408 = vsel %vm2239, %v2400, %v2407
        %v2409 = vrot.slane %v2404, 4
        %vm2440 = vcmask 1043456
        %vm2441 = vsmask.f32 7938
        %vm2442 = vmand %vm2440, %vm2441
        %v2443 = vld [vmem:[#allocation2] sm:$0xf]
        %v2444 = vsel %vm2442, %v2246, %v2443
        %2445 = vst [vmem:[#allocation2] sm:$0xf] %v2444
        %2446 = vst [vmem:[#allocation2 + $0x4] sm:$0xf] %v2255
        %vm2447 = vcmask 1040384
        %vm2448 = vmand %vm2447, %vm2237
        %v2449 = vld [vmem:[#allocation2 + $0x8] sm:$0x1]
        %v2450 = vsel %vm2448, %v2256, %v2449
        %2451 = vst [vmem:[#allocation2 + $0x8] sm:$0x1] %v2450
        %v2452 = vld [vmem:[#allocation2 + $0xc] sm:$0xf]
        %v2453 = vsel %vm2442, %v2263, %v2452
        %2454 = vst [vmem:[#allocation2 + $0xc] sm:$0xf] %v2453
        %2455 = vst [vmem:[#allocation2 + $0x10] sm:$0xf] %v2272
        %v2456 = vld [vmem:[#allocation2 + $0x14] sm:$0x1]
        %v2457 = vsel %vm2448, %v2273, %v2456
        %2458 = vst [vmem:[#allocation2 + $0x14] sm:$0x1] %v2457
        %v2459 = vld [vmem:[#allocation2 + $0x18] sm:$0xf]
        %v2460 = vsel %vm2442, %v2280, %v2459
        %2461 = vst [vmem:[#allocation2 + $0x18] sm:$0xf] %v2460
        %2462 = vst [vmem:[#allocation2 + $0x1c] sm:$0xf] %v2289
        %v2463 = vld [vmem:[#allocation2 + $0x20] sm:$0x1]
        %v2464 = vsel %vm2448, %v2290, %v2463
        %2465 = vst [vmem:[#allocation2 + $0x20] sm:$0x1] %v2464
        %v2466 = vld [vmem:[#allocation2 + $0x24] sm:$0xf]
        %v2467 = vsel %vm2442, %v2297, %v2466
        %2468 = vst [vmem:[#allocation2 + $0x24] sm:$0xf] %v2467
        %2469 = vst [vmem:[#allocation2 + $0x28] sm:$0xf] %v2306
        %v2470 = vld [vmem:[#allocation2 + $0x2c] sm:$0x1]
        %v2471 = vsel %vm2448, %v2307, %v2470
        %2472 = vst [vmem:[#allocation2 + $0x2c] sm:$0x1] %v2471
        %v2473 = vld [vmem:[#allocation2 + $0x30] sm:$0xf]
        %v2474 = vsel %vm2442, %v2314, %v2473
        %2475 = vst [vmem:[#allocation2 + $0x30] sm:$0xf] %v2474
        %2476 = vst [vmem:[#allocation2 + $0x34] sm:$0xf] %v2323
        %v2477 = vld [vmem:[#allocation2 + $0x38] sm:$0x1]
        %v2478 = vsel %vm2448, %v2324, %v2477
        %2479 = vst [vmem:[#allocation2 + $0x38] sm:$0x1] %v2478
        %v2480 = vld [vmem:[#allocation2 + $0x3c] sm:$0xf]
        %v2481 = vsel %vm2442, %v2331, %v2480
        %2482 = vst [vmem:[#allocation2 + $0x3c] sm:$0xf] %v2481
        %2483 = vst [vmem:[#allocation2 + $0x40] sm:$0xf] %v2340
        %v2484 = vld [vmem:[#allocation2 + $0x44] sm:$0x1]
        %v2485 = vsel %vm2448, %v2341, %v2484
        %2486 = vst [vmem:[#allocation2 + $0x44] sm:$0x1] %v2485
        %v2487 = vld [vmem:[#allocation2 + $0x48] sm:$0xf]
        %v2488 = vsel %vm2442, %v2348, %v2487
        %2489 = vst [vmem:[#allocation2 + $0x48] sm:$0xf] %v2488
        %2490 = vst [vmem:[#allocation2 + $0x4c] sm:$0xf] %v2357
        %v2491 = vld [vmem:[#allocation2 + $0x50] sm:$0x1]
        %v2492 = vsel %vm2448, %v2358, %v2491
        %2493 = vst [vmem:[#allocation2 + $0x50] sm:$0x1] %v2492
        %v2494 = vld [vmem:[#allocation2 + $0x54] sm:$0xf]
        %v2495 = vsel %vm2442, %v2365, %v2494
        %2496 = vst [vmem:[#allocation2 + $0x54] sm:$0xf] %v2495
        %2497 = vst [vmem:[#allocation2 + $0x58] sm:$0xf] %v2374
        %v2498 = vld [vmem:[#allocation2 + $0x5c] sm:$0x1]
        %v2499 = vsel %vm2448, %v2375, %v2498
        %2500 = vst [vmem:[#allocation2 + $0x5c] sm:$0x1] %v2499
        %v2501 = vld [vmem:[#allocation2 + $0x60] sm:$0xf]
        %v2502 = vsel %vm2442, %v2382, %v2501
        %2503 = vst [vmem:[#allocation2 + $0x60] sm:$0xf] %v2502
        %2504 = vst [vmem:[#allocation2 + $0x64] sm:$0xf] %v2391
        %v2505 = vld [vmem:[#allocation2 + $0x68] sm:$0x1]
        %v2506 = vsel %vm2448, %v2392, %v2505
        %2507 = vst [vmem:[#allocation2 + $0x68] sm:$0x1] %v2506
        %v2508 = vld [vmem:[#allocation2 + $0x6c] sm:$0xf]
        %v2509 = vsel %vm2442, %v2399, %v2508
        %2510 = vst [vmem:[#allocation2 + $0x6c] sm:$0xf] %v2509
        %2511 = vst [vmem:[#allocation2 + $0x70] sm:$0xf] %v2408
        %v2512 = vld [vmem:[#allocation2 + $0x74] sm:$0x1]
        %v2513 = vsel %vm2448, %v2409, %v2512
        %2514 = vst [vmem:[#allocation2 + $0x74] sm:$0x1] %v2513
        %v2515 = vld [vmem:[#allocation2] sm:$0x1]
        %v2516 = vsel %vm2448, 0, %v2515
        %2517 = vst [vmem:[#allocation2] sm:$0x1] %v2516
        %v2518 = vld [vmem:[#allocation2 + $0xc] sm:$0x1]
        %v2519 = vsel %vm2448, 0, %v2518
        %2520 = vst [vmem:[#allocation2 + $0xc] sm:$0x1] %v2519
        %v2521 = vld [vmem:[#allocation2 + $0x18] sm:$0x1]
        %v2522 = vsel %vm2448, 0, %v2521
        %2523 = vst [vmem:[#allocation2 + $0x18] sm:$0x1] %v2522
        %v2524 = vld [vmem:[#allocation2 + $0x24] sm:$0x1]
        %v2525 = vsel %vm2448, 0, %v2524
        %2526 = vst [vmem:[#allocation2 + $0x24] sm:$0x1] %v2525
        %v2527 = vld [vmem:[#allocation2 + $0x30] sm:$0x1]
        %v2528 = vsel %vm2448, 0, %v2527
        %2529 = vst [vmem:[#allocation2 + $0x30] sm:$0x1] %v2528
        %v2530 = vld [vmem:[#allocation2 + $0x3c] sm:$0x1]
        %v2531 = vsel %vm2448, 0, %v2530
        %2532 = vst [vmem:[#allocation2 + $0x3c] sm:$0x1] %v2531
        %v2533 = vld [vmem:[#allocation2 + $0x48] sm:$0x1]
        %v2534 = vsel %vm2448, 0, %v2533
        %2535 = vst [vmem:[#allocation2 + $0x48] sm:$0x1] %v2534
        %v2536 = vld [vmem:[#allocation2 + $0x54] sm:$0x1]
        %v2537 = vsel %vm2448, 0, %v2536
        %2538 = vst [vmem:[#allocation2 + $0x54] sm:$0x1] %v2537
        %v2539 = vld [vmem:[#allocation2 + $0x60] sm:$0x1]
        %v2540 = vsel %vm2448, 0, %v2539
        %2541 = vst [vmem:[#allocation2 + $0x60] sm:$0x1] %v2540
        %v2542 = vld [vmem:[#allocation2 + $0x6c] sm:$0x1]
        %v2543 = vsel %vm2448, 0, %v2542
        %2544 = vst [vmem:[#allocation2 + $0x6c] sm:$0x1] %v2543
        %vm2545 = vmand %vm2447, %vm2441
        %v2546 = vld [vmem:[#allocation2 + $0x8] sm:$0x1]
        %v2547 = vsel %vm2545, 0, %v2546
        %2548 = vst [vmem:[#allocation2 + $0x8] sm:$0x1] %v2547
        %v2549 = vld [vmem:[#allocation2 + $0x14] sm:$0x1]
        %v2550 = vsel %vm2545, 0, %v2549
        %2551 = vst [vmem:[#allocation2 + $0x14] sm:$0x1] %v2550
        %v2552 = vld [vmem:[#allocation2 + $0x20] sm:$0x1]
        %v2553 = vsel %vm2545, 0, %v2552
        %2554 = vst [vmem:[#allocation2 + $0x20] sm:$0x1] %v2553
        %v2555 = vld [vmem:[#allocation2 + $0x2c] sm:$0x1]
        %v2556 = vsel %vm2545, 0, %v2555
        %2557 = vst [vmem:[#allocation2 + $0x2c] sm:$0x1] %v2556
        %v2558 = vld [vmem:[#allocation2 + $0x38] sm:$0x1]
        %v2559 = vsel %vm2545, 0, %v2558
        %2560 = vst [vmem:[#allocation2 + $0x38] sm:$0x1] %v2559
        %v2561 = vld [vmem:[#allocation2 + $0x44] sm:$0x1]
        %v2562 = vsel %vm2545, 0, %v2561
        %2563 = vst [vmem:[#allocation2 + $0x44] sm:$0x1] %v2562
        %v2564 = vld [vmem:[#allocation2 + $0x50] sm:$0x1]
        %v2565 = vsel %vm2545, 0, %v2564
        %2566 = vst [vmem:[#allocation2 + $0x50] sm:$0x1] %v2565
        %v2567 = vld [vmem:[#allocation2 + $0x5c] sm:$0x1]
        %v2568 = vsel %vm2545, 0, %v2567
        %2569 = vst [vmem:[#allocation2 + $0x5c] sm:$0x1] %v2568
        %v2570 = vld [vmem:[#allocation2 + $0x68] sm:$0x1]
        %v2571 = vsel %vm2545, 0, %v2570
        %2572 = vst [vmem:[#allocation2 + $0x68] sm:$0x1] %v2571
        %v2573 = vld [vmem:[#allocation2 + $0x74] sm:$0x1]
        %v2574 = vsel %vm2545, 0, %v2573
        %2575 = vst [vmem:[#allocation2 + $0x74] sm:$0x1] %v2574
        %v2576 = vld [vmem:[#allocation2] sm:$0xf]
        %v2577 = vld [vmem:[#allocation2 + $0x4] sm:$0xf]
        %v2578 = vld [vmem:[#allocation2 + $0xc] sm:$0xf]
        %v2579 = vld [vmem:[#allocation2 + $0x10] sm:$0xf]
        %v2580 = vld [vmem:[#allocation2 + $0x18] sm:$0xf]
        %v2581 = vld [vmem:[#allocation2 + $0x1c] sm:$0xf]
        %v2582 = vld [vmem:[#allocation2 + $0x24] sm:$0xf]
        %v2583 = vld [vmem:[#allocation2 + $0x28] sm:$0xf]
        %v2584 = vld [vmem:[#allocation2 + $0x30] sm:$0xf]
        %v2585 = vld [vmem:[#allocation2 + $0x34] sm:$0xf]
        %v2586 = vld [vmem:[#allocation2 + $0x3c] sm:$0xf]
        %v2587 = vld [vmem:[#allocation2 + $0x40] sm:$0xf]
        %v2588 = vld [vmem:[#allocation2 + $0x48] sm:$0xf]
        %v2589 = vld [vmem:[#allocation2 + $0x4c] sm:$0xf]
        %v2590 = vld [vmem:[#allocation2 + $0x54] sm:$0xf]
        %v2591 = vld [vmem:[#allocation2 + $0x58] sm:$0xf]
        %v2592 = vld [vmem:[#allocation2 + $0x8] sm:$0x1]
        %v2593 = vld [vmem:[#allocation2 + $0x14] sm:$0x1]
        %v2594 = vld [vmem:[#allocation2 + $0x20] sm:$0x1]
        %v2595 = vld [vmem:[#allocation2 + $0x2c] sm:$0x1]
        %v2596 = vld [vmem:[#allocation2 + $0x38] sm:$0x1]
        %v2597 = vld [vmem:[#allocation2 + $0x44] sm:$0x1]
        %v2598 = vld [vmem:[#allocation2 + $0x50] sm:$0x1]
        %v2599 = vld [vmem:[#allocation2 + $0x5c] sm:$0x1]
        %v2600 = vld [vmem:[#allocation2] sm:$0xe]
        %v2601 = vld [vmem:[#allocation2 + $0xc] sm:$0xe]
        %v2602 = vld [vmem:[#allocation2 + $0x18] sm:$0xe]
        %v2603 = vld [vmem:[#allocation2 + $0x24] sm:$0xe]
        %v2604 = vld [vmem:[#allocation2 + $0x30] sm:$0xe]
        %v2605 = vld [vmem:[#allocation2 + $0x3c] sm:$0xe]
        %v2606 = vld [vmem:[#allocation2 + $0x48] sm:$0xe]
        %v2607 = vld [vmem:[#allocation2 + $0x54] sm:$0xe]
        %v2624 = vunpack.c.l.b16 %v2576
        %v2625 = vunpack.c.l.b16 %v2577
        %v2626 = vunpack.c.l.b16 %v2578
        %v2627 = vunpack.c.l.b16 %v2579
        %v2628 = vunpack.c.l.b16 %v2580
        %v2629 = vunpack.c.l.b16 %v2581
        %v2630 = vunpack.c.l.b16 %v2582
        %v2631 = vunpack.c.l.b16 %v2583
        %v2632 = vunpack.c.l.b16 %v2584
        %v2633 = vunpack.c.l.b16 %v2585
        %v2634 = vunpack.c.l.b16 %v2586
        %v2635 = vunpack.c.l.b16 %v2587
        %v2636 = vunpack.c.l.b16 %v2588
        %v2637 = vunpack.c.l.b16 %v2589
        %v2638 = vunpack.c.l.b16 %v2590
        %v2639 = vunpack.c.l.b16 %v2591
        %v2640 = vpack.c.b16 %v2625, %v2624
        %v2641 = vpack.c.b16 %v2627, %v2626
        %v2642 = vpack.c.b16 %v2629, %v2628
        %v2643 = vpack.c.b16 %v2631, %v2630
        %v2644 = vpack.c.b16 %v2633, %v2632
        %v2645 = vpack.c.b16 %v2635, %v2634
        %v2646 = vpack.c.b16 %v2637, %v2636
        %v2647 = vpack.c.b16 %v2639, %v2638
        %v2664 = vunpack.c.l.b16 %v2592
        %v2665 = vunpack.c.l.b16 %v2593
        %v2666 = vunpack.c.l.b16 %v2594
        %v2667 = vunpack.c.l.b16 %v2595
        %v2668 = vunpack.c.l.b16 %v2596
        %v2669 = vunpack.c.l.b16 %v2597
        %v2670 = vunpack.c.l.b16 %v2598
        %v2671 = vunpack.c.l.b16 %v2599
        %v2672 = vpack.c.b16 %v2664, %v2664
        %v2673 = vpack.c.b16 %v2665, %v2665
        %v2674 = vpack.c.b16 %v2666, %v2666
        %v2675 = vpack.c.b16 %v2667, %v2667
        %v2676 = vpack.c.b16 %v2668, %v2668
        %v2677 = vpack.c.b16 %v2669, %v2669
        %v2678 = vpack.c.b16 %v2670, %v2670
        %v2679 = vpack.c.b16 %v2671, %v2671
        %v2681 = vshrl.u32 %v2640, 16
        %v2683 = vshll.u32 %v2640, 16
        %v2685 = vrot.slane %v2683, 1
        %v2686 = vor.u32 %v2681, %v2685
        %v2688 = vshll.u32 %v2672, 16
        %v2690 = vrot.slane %v2688, 1
        %v2691 = vsel %vm522, %v2686, %v2690
        %v2693 = vshrl.u32 %v2641, 16
        %v2695 = vshll.u32 %v2641, 16
        %v2697 = vrot.slane %v2695, 1
        %v2698 = vor.u32 %v2693, %v2697
        %v2700 = vshll.u32 %v2673, 16
        %v2702 = vrot.slane %v2700, 1
        %v2703 = vsel %vm522, %v2698, %v2702
        %v2705 = vshrl.u32 %v2642, 16
        %v2707 = vshll.u32 %v2642, 16
        %v2709 = vrot.slane %v2707, 1
        %v2710 = vor.u32 %v2705, %v2709
        %v2712 = vshll.u32 %v2674, 16
        %v2714 = vrot.slane %v2712, 1
        %v2715 = vsel %vm522, %v2710, %v2714
        %v2717 = vshrl.u32 %v2643, 16
        %v2719 = vshll.u32 %v2643, 16
        %v2721 = vrot.slane %v2719, 1
        %v2722 = vor.u32 %v2717, %v2721
        %v2724 = vshll.u32 %v2675, 16
        %v2726 = vrot.slane %v2724, 1
        %v2727 = vsel %vm522, %v2722, %v2726
        %v2729 = vshrl.u32 %v2644, 16
        %v2731 = vshll.u32 %v2644, 16
        %v2733 = vrot.slane %v2731, 1
        %v2734 = vor.u32 %v2729, %v2733
        %v2736 = vshll.u32 %v2676, 16
        %v2738 = vrot.slane %v2736, 1
        %v2739 = vsel %vm522, %v2734, %v2738
        %v2741 = vshrl.u32 %v2645, 16
        %v2743 = vshll.u32 %v2645, 16
        %v2745 = vrot.slane %v2743, 1
        %v2746 = vor.u32 %v2741, %v2745
        %v2748 = vshll.u32 %v2677, 16
        %v2750 = vrot.slane %v2748, 1
        %v2751 = vsel %vm522, %v2746, %v2750
        %v2753 = vshrl.u32 %v2646, 16
        %v2755 = vshll.u32 %v2646, 16
        %v2757 = vrot.slane %v2755, 1
        %v2758 = vor.u32 %v2753, %v2757
        %v2760 = vshll.u32 %v2678, 16
        %v2762 = vrot.slane %v2760, 1
        %v2763 = vsel %vm522, %v2758, %v2762
        %v2765 = vshrl.u32 %v2647, 16
        %v2767 = vshll.u32 %v2647, 16
        %v2769 = vrot.slane %v2767, 1
        %v2770 = vor.u32 %v2765, %v2769
        %v2772 = vshll.u32 %v2679, 16
        %v2774 = vrot.slane %v2772, 1
        %v2775 = vsel %vm522, %v2770, %v2774
        %v2792 = vunpack.c.l.b16 %v2600
        %v2793 = vunpack.c.l.b16 %v2601
        %v2794 = vunpack.c.l.b16 %v2602
        %v2795 = vunpack.c.l.b16 %v2603
        %v2796 = vunpack.c.l.b16 %v2604
        %v2797 = vunpack.c.l.b16 %v2605
        %v2798 = vunpack.c.l.b16 %v2606
        %v2799 = vunpack.c.l.b16 %v2607
        %v2800 = vpack.c.b16 %v2625, %v2792
        %v2801 = vpack.c.b16 %v2627, %v2793
        %v2802 = vpack.c.b16 %v2629, %v2794
        %v2803 = vpack.c.b16 %v2631, %v2795
        %v2804 = vpack.c.b16 %v2633, %v2796
        %v2805 = vpack.c.b16 %v2635, %v2797
        %v2806 = vpack.c.b16 %v2637, %v2798
        %v2807 = vpack.c.b16 %v2639, %v2799
        %v2808 = vrot.slane %v2800, 1
        %v2809 = vrot.slane %v2672, 1
        %v2810 = vsel %vm653, %v2808, %v2809
        %v2811 = vrot.slane %v2801, 1
        %v2812 = vrot.slane %v2673, 1
        %v2813 = vsel %vm653, %v2811, %v2812
        %v2814 = vrot.slane %v2802, 1
        %v2815 = vrot.slane %v2674, 1
        %v2816 = vsel %vm653, %v2814, %v2815
        %v2817 = vrot.slane %v2803, 1
        %v2818 = vrot.slane %v2675, 1
        %v2819 = vsel %vm653, %v2817, %v2818
        %v2820 = vrot.slane %v2804, 1
        %v2821 = vrot.slane %v2676, 1
        %v2822 = vsel %vm653, %v2820, %v2821
        %v2823 = vrot.slane %v2805, 1
        %v2824 = vrot.slane %v2677, 1
        %v2825 = vsel %vm653, %v2823, %v2824
        %v2826 = vrot.slane %v2806, 1
        %v2827 = vrot.slane %v2678, 1
        %v2828 = vsel %vm653, %v2826, %v2827
        %v2829 = vrot.slane %v2807, 1
        %v2830 = vrot.slane %v2679, 1
        %v2831 = vsel %vm653, %v2829, %v2830
        %v2840 = vld [vmem:[#allocation11] sm:$0xf]
        %v2841 = vld [vmem:[#allocation11 + $0x4] sm:$0xf]
        %v2842 = vld [vmem:[#allocation11 + $0x8] sm:$0xf]
        %v2843 = vld [vmem:[#allocation11 + $0xc] sm:$0xf]
        %v2844 = vld [vmem:[#allocation11 + $0x10] sm:$0xf]
        %v2845 = vld [vmem:[#allocation11 + $0x14] sm:$0xf]
        %v2846 = vld [vmem:[#allocation11 + $0x18] sm:$0xf]
        %v2847 = vld [vmem:[#allocation11 + $0x1c] sm:$0xf]
        %v2848 = vld [vmem:[#allocation11 + $0x20] sm:$0xf]
        %v2849 = vld [vmem:[#allocation11 + $0x24] sm:$0xf]
        %v2850 = vld [vmem:[#allocation11 + $0x28] sm:$0xf]
        %v2851 = vld [vmem:[#allocation11 + $0x2c] sm:$0xf]
        %v2852 = vld [vmem:[#allocation11 + $0x30] sm:$0xf]
        %v2853 = vld [vmem:[#allocation11 + $0x34] sm:$0xf]
        %v2854 = vld [vmem:[#allocation11 + $0x38] sm:$0xf]
        %v2855 = vld [vmem:[#allocation11 + $0x3c] sm:$0xf]
        %v2856 = vld [vmem:[#allocation11 + $0x40] sm:$0xf]
        %v2857 = vld [vmem:[#allocation11 + $0x44] sm:$0xf]
        %v2858 = vld [vmem:[#allocation11 + $0x48] sm:$0xf]
        %v2859 = vld [vmem:[#allocation11 + $0x4c] sm:$0xf]
        %v2860 = vld [vmem:[#allocation11 + $0x50] sm:$0xf]
        %v2861 = vld [vmem:[#allocation11 + $0x54] sm:$0xf]
        %v2862 = vld [vmem:[#allocation11 + $0x58] sm:$0xf]
        %v2863 = vld [vmem:[#allocation11 + $0x5c] sm:$0xf]
        %v2864 = vld [vmem:[#allocation11 + $0x60] sm:$0xf]
        %v2865 = vld [vmem:[#allocation11 + $0x64] sm:$0xf]
        %v2866 = vld [vmem:[#allocation11 + $0x68] sm:$0xf]
        %v2867 = vld [vmem:[#allocation11 + $0x6c] sm:$0xf]
        %v2868 = vld [vmem:[#allocation11 + $0x70] sm:$0xf]
        %v2869 = vld [vmem:[#allocation11 + $0x74] sm:$0xf]
        %v2870 = vld [vmem:[#allocation11 + $0x78] sm:$0xf]
        %v2871 = vld [vmem:[#allocation11 + $0x7c] sm:$0xf]
        %v2872 = vld [vmem:[#allocation11 + $0x80] sm:$0xf]
        %v2873 = vld [vmem:[#allocation11 + $0x84] sm:$0xf]
        %v2874 = vld [vmem:[#allocation11 + $0x88] sm:$0xf]
        %v2875 = vld [vmem:[#allocation11 + $0x8c] sm:$0xf]
        %v2876 = vld [vmem:[#allocation11 + $0x90] sm:$0xf]
        %v2877 = vld [vmem:[#allocation11 + $0x94] sm:$0xf]
        %v2878 = vld [vmem:[#allocation11 + $0x98] sm:$0xf]
        %v2879 = vld [vmem:[#allocation11 + $0x9c] sm:$0xf]
        %v2880 = vld [vmem:[#allocation11 + $0xa0] sm:$0xf]
        %v2881 = vld [vmem:[#allocation11 + $0xa4] sm:$0xf]
        %v2882 = vld [vmem:[#allocation11 + $0xa8] sm:$0xf]
        %v2883 = vld [vmem:[#allocation11 + $0xac] sm:$0xf]
        %v2884 = vld [vmem:[#allocation11 + $0xb0] sm:$0xf]
        %v2885 = vld [vmem:[#allocation11 + $0xb4] sm:$0xf]
        %v2886 = vld [vmem:[#allocation11 + $0xb8] sm:$0xf]
        %v2887 = vld [vmem:[#allocation11 + $0xbc] sm:$0xf]
        %s2888 = scalar_lea.vmem [#allocation2], 12
        %v2889 = vld [vmem:[%s2888] sm:$0xf]
        %v2890 = vld [vmem:[%s2888 + $0x4] sm:$0xf]
        %v2891 = vld [vmem:[%s2888 + $0xc] sm:$0xf]
        %v2892 = vld [vmem:[%s2888 + $0x10] sm:$0xf]
        %v2893 = vld [vmem:[%s2888 + $0x18] sm:$0xf]
        %v2894 = vld [vmem:[%s2888 + $0x1c] sm:$0xf]
        %v2895 = vld [vmem:[%s2888 + $0x24] sm:$0xf]
        %v2896 = vld [vmem:[%s2888 + $0x28] sm:$0xf]
        %v2897 = vld [vmem:[%s2888 + $0x30] sm:$0xf]
        %v2898 = vld [vmem:[%s2888 + $0x34] sm:$0xf]
        %v2899 = vld [vmem:[%s2888 + $0x3c] sm:$0xf]
        %v2900 = vld [vmem:[%s2888 + $0x40] sm:$0xf]
        %v2901 = vld [vmem:[%s2888 + $0x48] sm:$0xf]
        %v2902 = vld [vmem:[%s2888 + $0x4c] sm:$0xf]
        %v2903 = vld [vmem:[%s2888 + $0x54] sm:$0xf]
        %v2904 = vld [vmem:[%s2888 + $0x58] sm:$0xf]
        %v2905 = vld [vmem:[%s2888 + $0x8] sm:$0x1]
        %v2906 = vld [vmem:[%s2888 + $0x14] sm:$0x1]
        %v2907 = vld [vmem:[%s2888 + $0x20] sm:$0x1]
        %v2908 = vld [vmem:[%s2888 + $0x2c] sm:$0x1]
        %v2909 = vld [vmem:[%s2888 + $0x38] sm:$0x1]
        %v2910 = vld [vmem:[%s2888 + $0x44] sm:$0x1]
        %v2911 = vld [vmem:[%s2888 + $0x50] sm:$0x1]
        %v2912 = vld [vmem:[%s2888 + $0x5c] sm:$0x1]
        %v2913 = vld [vmem:[%s2888] sm:$0xe]
        %v2914 = vld [vmem:[%s2888 + $0xc] sm:$0xe]
        %v2915 = vld [vmem:[%s2888 + $0x18] sm:$0xe]
        %v2916 = vld [vmem:[%s2888 + $0x24] sm:$0xe]
        %v2917 = vld [vmem:[%s2888 + $0x30] sm:$0xe]
        %v2918 = vld [vmem:[%s2888 + $0x3c] sm:$0xe]
        %v2919 = vld [vmem:[%s2888 + $0x48] sm:$0xe]
        %v2920 = vld [vmem:[%s2888 + $0x54] sm:$0xe]
        %v2937 = vunpack.c.l.b16 %v2889
        %v2938 = vunpack.c.l.b16 %v2890
        %v2939 = vunpack.c.l.b16 %v2891
        %v2940 = vunpack.c.l.b16 %v2892
        %v2941 = vunpack.c.l.b16 %v2893
        %v2942 = vunpack.c.l.b16 %v2894
        %v2943 = vunpack.c.l.b16 %v2895
        %v2944 = vunpack.c.l.b16 %v2896
        %v2945 = vunpack.c.l.b16 %v2897
        %v2946 = vunpack.c.l.b16 %v2898
        %v2947 = vunpack.c.l.b16 %v2899
        %v2948 = vunpack.c.l.b16 %v2900
        %v2949 = vunpack.c.l.b16 %v2901
        %v2950 = vunpack.c.l.b16 %v2902
        %v2951 = vunpack.c.l.b16 %v2903
        %v2952 = vunpack.c.l.b16 %v2904
        %v2953 = vpack.c.b16 %v2938, %v2937
        %v2954 = vpack.c.b16 %v2940, %v2939
        %v2955 = vpack.c.b16 %v2942, %v2941
        %v2956 = vpack.c.b16 %v2944, %v2943
        %v2957 = vpack.c.b16 %v2946, %v2945
        %v2958 = vpack.c.b16 %v2948, %v2947
        %v2959 = vpack.c.b16 %v2950, %v2949
        %v2960 = vpack.c.b16 %v2952, %v2951
        %v2977 = vunpack.c.l.b16 %v2905
        %v2978 = vunpack.c.l.b16 %v2906
        %v2979 = vunpack.c.l.b16 %v2907
        %v2980 = vunpack.c.l.b16 %v2908
        %v2981 = vunpack.c.l.b16 %v2909
        %v2982 = vunpack.c.l.b16 %v2910
        %v2983 = vunpack.c.l.b16 %v2911
        %v2984 = vunpack.c.l.b16 %v2912
        %v2985 = vpack.c.b16 %v2977, %v2977
        %v2986 = vpack.c.b16 %v2978, %v2978
        %v2987 = vpack.c.b16 %v2979, %v2979
        %v2988 = vpack.c.b16 %v2980, %v2980
        %v2989 = vpack.c.b16 %v2981, %v2981
        %v2990 = vpack.c.b16 %v2982, %v2982
        %v2991 = vpack.c.b16 %v2983, %v2983
        %v2992 = vpack.c.b16 %v2984, %v2984
        %v2994 = vshrl.u32 %v2953, 16
        %v2996 = vshll.u32 %v2953, 16
        %v2998 = vrot.slane %v2996, 1
        %v2999 = vor.u32 %v2994, %v2998
        %v3001 = vshll.u32 %v2985, 16
        %v3003 = vrot.slane %v3001, 1
        %v3004 = vsel %vm522, %v2999, %v3003
        %v3006 = vshrl.u32 %v2954, 16
        %v3008 = vshll.u32 %v2954, 16
        %v3010 = vrot.slane %v3008, 1
        %v3011 = vor.u32 %v3006, %v3010
        %v3013 = vshll.u32 %v2986, 16
        %v3015 = vrot.slane %v3013, 1
        %v3016 = vsel %vm522, %v3011, %v3015
        %v3018 = vshrl.u32 %v2955, 16
        %v3020 = vshll.u32 %v2955, 16
        %v3022 = vrot.slane %v3020, 1
        %v3023 = vor.u32 %v3018, %v3022
        %v3025 = vshll.u32 %v2987, 16
        %v3027 = vrot.slane %v3025, 1
        %v3028 = vsel %vm522, %v3023, %v3027
        %v3030 = vshrl.u32 %v2956, 16
        %v3032 = vshll.u32 %v2956, 16
        %v3034 = vrot.slane %v3032, 1
        %v3035 = vor.u32 %v3030, %v3034
        %v3037 = vshll.u32 %v2988, 16
        %v3039 = vrot.slane %v3037, 1
        %v3040 = vsel %vm522, %v3035, %v3039
        %v3042 = vshrl.u32 %v2957, 16
        %v3044 = vshll.u32 %v2957, 16
        %v3046 = vrot.slane %v3044, 1
        %v3047 = vor.u32 %v3042, %v3046
        %v3049 = vshll.u32 %v2989, 16
        %v3051 = vrot.slane %v3049, 1
        %v3052 = vsel %vm522, %v3047, %v3051
        %v3054 = vshrl.u32 %v2958, 16
        %v3056 = vshll.u32 %v2958, 16
        %v3058 = vrot.slane %v3056, 1
        %v3059 = vor.u32 %v3054, %v3058
        %v3061 = vshll.u32 %v2990, 16
        %v3063 = vrot.slane %v3061, 1
        %v3064 = vsel %vm522, %v3059, %v3063
        %v3066 = vshrl.u32 %v2959, 16
        %v3068 = vshll.u32 %v2959, 16
        %v3070 = vrot.slane %v3068, 1
        %v3071 = vor.u32 %v3066, %v3070
        %v3073 = vshll.u32 %v2991, 16
        %v3075 = vrot.slane %v3073, 1
        %v3076 = vsel %vm522, %v3071, %v3075
        %v3078 = vshrl.u32 %v2960, 16
        %v3080 = vshll.u32 %v2960, 16
        %v3082 = vrot.slane %v3080, 1
        %v3083 = vor.u32 %v3078, %v3082
        %v3085 = vshll.u32 %v2992, 16
        %v3087 = vrot.slane %v3085, 1
        %v3088 = vsel %vm522, %v3083, %v3087
        %v3105 = vunpack.c.l.b16 %v2913
        %v3106 = vunpack.c.l.b16 %v2914
        %v3107 = vunpack.c.l.b16 %v2915
        %v3108 = vunpack.c.l.b16 %v2916
        %v3109 = vunpack.c.l.b16 %v2917
        %v3110 = vunpack.c.l.b16 %v2918
        %v3111 = vunpack.c.l.b16 %v2919
        %v3112 = vunpack.c.l.b16 %v2920
        %v3113 = vpack.c.b16 %v2938, %v3105
        %v3114 = vpack.c.b16 %v2940, %v3106
        %v3115 = vpack.c.b16 %v2942, %v3107
        %v3116 = vpack.c.b16 %v2944, %v3108
        %v3117 = vpack.c.b16 %v2946, %v3109
        %v3118 = vpack.c.b16 %v2948, %v3110
        %v3119 = vpack.c.b16 %v2950, %v3111
        %v3120 = vpack.c.b16 %v2952, %v3112
        %v3121 = vrot.slane %v3113, 1
        %v3122 = vrot.slane %v2985, 1
        %v3123 = vsel %vm653, %v3121, %v3122
        %v3124 = vrot.slane %v3114, 1
        %v3125 = vrot.slane %v2986, 1
        %v3126 = vsel %vm653, %v3124, %v3125
        %v3127 = vrot.slane %v3115, 1
        %v3128 = vrot.slane %v2987, 1
        %v3129 = vsel %vm653, %v3127, %v3128
        %v3130 = vrot.slane %v3116, 1
        %v3131 = vrot.slane %v2988, 1
        %v3132 = vsel %vm653, %v3130, %v3131
        %v3133 = vrot.slane %v3117, 1
        %v3134 = vrot.slane %v2989, 1
        %v3135 = vsel %vm653, %v3133, %v3134
        %v3136 = vrot.slane %v3118, 1
        %v3137 = vrot.slane %v2990, 1
        %v3138 = vsel %vm653, %v3136, %v3137
        %v3139 = vrot.slane %v3119, 1
        %v3140 = vrot.slane %v2991, 1
        %v3141 = vsel %vm653, %v3139, %v3140
        %v3142 = vrot.slane %v3120, 1
        %v3143 = vrot.slane %v2992, 1
        %v3144 = vsel %vm653, %v3142, %v3143
        %s3153 = scalar_lea.vmem [#allocation11], 192
        %v3154 = vld [vmem:[%s3153] sm:$0xf]
        %v3155 = vld [vmem:[%s3153 + $0x4] sm:$0xf]
        %v3156 = vld [vmem:[%s3153 + $0x8] sm:$0xf]
        %v3157 = vld [vmem:[%s3153 + $0xc] sm:$0xf]
        %v3158 = vld [vmem:[%s3153 + $0x10] sm:$0xf]
        %v3159 = vld [vmem:[%s3153 + $0x14] sm:$0xf]
        %v3160 = vld [vmem:[%s3153 + $0x18] sm:$0xf]
        %v3161 = vld [vmem:[%s3153 + $0x1c] sm:$0xf]
        %v3162 = vld [vmem:[%s3153 + $0x20] sm:$0xf]
        %v3163 = vld [vmem:[%s3153 + $0x24] sm:$0xf]
        %v3164 = vld [vmem:[%s3153 + $0x28] sm:$0xf]
        %v3165 = vld [vmem:[%s3153 + $0x2c] sm:$0xf]
        %v3166 = vld [vmem:[%s3153 + $0x30] sm:$0xf]
        %v3167 = vld [vmem:[%s3153 + $0x34] sm:$0xf]
        %v3168 = vld [vmem:[%s3153 + $0x38] sm:$0xf]
        %v3169 = vld [vmem:[%s3153 + $0x3c] sm:$0xf]
        %v3170 = vld [vmem:[%s3153 + $0x40] sm:$0xf]
        %v3171 = vld [vmem:[%s3153 + $0x44] sm:$0xf]
        %v3172 = vld [vmem:[%s3153 + $0x48] sm:$0xf]
        %v3173 = vld [vmem:[%s3153 + $0x4c] sm:$0xf]
        %v3174 = vld [vmem:[%s3153 + $0x50] sm:$0xf]
        %v3175 = vld [vmem:[%s3153 + $0x54] sm:$0xf]
        %v3176 = vld [vmem:[%s3153 + $0x58] sm:$0xf]
        %v3177 = vld [vmem:[%s3153 + $0x5c] sm:$0xf]
        %v3178 = vld [vmem:[%s3153 + $0x60] sm:$0xf]
        %v3179 = vld [vmem:[%s3153 + $0x64] sm:$0xf]
        %v3180 = vld [vmem:[%s3153 + $0x68] sm:$0xf]
        %v3181 = vld [vmem:[%s3153 + $0x6c] sm:$0xf]
        %v3182 = vld [vmem:[%s3153 + $0x70] sm:$0xf]
        %v3183 = vld [vmem:[%s3153 + $0x74] sm:$0xf]
        %v3184 = vld [vmem:[%s3153 + $0x78] sm:$0xf]
        %v3185 = vld [vmem:[%s3153 + $0x7c] sm:$0xf]
        %v3186 = vld [vmem:[%s3153 + $0x80] sm:$0xf]
        %v3187 = vld [vmem:[%s3153 + $0x84] sm:$0xf]
        %v3188 = vld [vmem:[%s3153 + $0x88] sm:$0xf]
        %v3189 = vld [vmem:[%s3153 + $0x8c] sm:$0xf]
        %v3190 = vld [vmem:[%s3153 + $0x90] sm:$0xf]
        %v3191 = vld [vmem:[%s3153 + $0x94] sm:$0xf]
        %v3192 = vld [vmem:[%s3153 + $0x98] sm:$0xf]
        %v3193 = vld [vmem:[%s3153 + $0x9c] sm:$0xf]
        %v3194 = vld [vmem:[%s3153 + $0xa0] sm:$0xf]
        %v3195 = vld [vmem:[%s3153 + $0xa4] sm:$0xf]
        %v3196 = vld [vmem:[%s3153 + $0xa8] sm:$0xf]
        %v3197 = vld [vmem:[%s3153 + $0xac] sm:$0xf]
        %v3198 = vld [vmem:[%s3153 + $0xb0] sm:$0xf]
        %v3199 = vld [vmem:[%s3153 + $0xb4] sm:$0xf]
        %v3200 = vld [vmem:[%s3153 + $0xb8] sm:$0xf]
        %v3201 = vld [vmem:[%s3153 + $0xbc] sm:$0xf]
        %v3250 = vunpack.c.l.b16 %v3154
        %v3251 = vunpack.c.l.b16 %v3155
        %v3252 = vunpack.c.l.b16 %v3156
        %v3253 = vunpack.c.l.b16 %v3157
        %v3254 = vunpack.c.l.b16 %v3158
        %v3255 = vunpack.c.l.b16 %v3159
        %v3256 = vunpack.c.l.b16 %v3160
        %v3257 = vunpack.c.l.b16 %v3161
        %v3258 = vunpack.c.l.b16 %v3162
        %v3259 = vunpack.c.l.b16 %v3163
        %v3260 = vunpack.c.l.b16 %v3164
        %v3261 = vunpack.c.l.b16 %v3165
        %v3262 = vunpack.c.l.b16 %v3166
        %v3263 = vunpack.c.l.b16 %v3167
        %v3264 = vunpack.c.l.b16 %v3168
        %v3265 = vunpack.c.l.b16 %v3169
        %v3266 = vunpack.c.l.b16 %v3170
        %v3267 = vunpack.c.l.b16 %v3171
        %v3268 = vunpack.c.l.b16 %v3172
        %v3269 = vunpack.c.l.b16 %v3173
        %v3270 = vunpack.c.l.b16 %v3174
        %v3271 = vunpack.c.l.b16 %v3175
        %v3272 = vunpack.c.l.b16 %v3176
        %v3273 = vunpack.c.l.b16 %v3177
        %v3274 = vunpack.c.l.b16 %v3178
        %v3275 = vunpack.c.l.b16 %v3179
        %v3276 = vunpack.c.l.b16 %v3180
        %v3277 = vunpack.c.l.b16 %v3181
        %v3278 = vunpack.c.l.b16 %v3182
        %v3279 = vunpack.c.l.b16 %v3183
        %v3280 = vunpack.c.l.b16 %v3184
        %v3281 = vunpack.c.l.b16 %v3185
        %v3282 = vunpack.c.l.b16 %v3186
        %v3283 = vunpack.c.l.b16 %v3187
        %v3284 = vunpack.c.l.b16 %v3188
        %v3285 = vunpack.c.l.b16 %v3189
        %v3286 = vunpack.c.l.b16 %v3190
        %v3287 = vunpack.c.l.b16 %v3191
        %v3288 = vunpack.c.l.b16 %v3192
        %v3289 = vunpack.c.l.b16 %v3193
        %v3290 = vunpack.c.l.b16 %v3194
        %v3291 = vunpack.c.l.b16 %v3195
        %v3292 = vunpack.c.l.b16 %v3196
        %v3293 = vunpack.c.l.b16 %v3197
        %v3294 = vunpack.c.l.b16 %v3198
        %v3295 = vunpack.c.l.b16 %v3199
        %v3296 = vunpack.c.l.b16 %v3200
        %v3297 = vunpack.c.l.b16 %v3201
        %v3298 = vpack.c.b16 %v3251, %v3250
        %v3299 = vpack.c.b16 %v3253, %v3252
        %v3300 = vpack.c.b16 %v3255, %v3254
        %v3301 = vpack.c.b16 %v3257, %v3256
        %v3302 = vpack.c.b16 %v3259, %v3258
        %v3303 = vpack.c.b16 %v3261, %v3260
        %v3304 = vpack.c.b16 %v3263, %v3262
        %v3305 = vpack.c.b16 %v3265, %v3264
        %v3306 = vpack.c.b16 %v3267, %v3266
        %v3307 = vpack.c.b16 %v3269, %v3268
        %v3308 = vpack.c.b16 %v3271, %v3270
        %v3309 = vpack.c.b16 %v3273, %v3272
        %v3310 = vpack.c.b16 %v3275, %v3274
        %v3311 = vpack.c.b16 %v3277, %v3276
        %v3312 = vpack.c.b16 %v3279, %v3278
        %v3313 = vpack.c.b16 %v3281, %v3280
        %v3314 = vpack.c.b16 %v3283, %v3282
        %v3315 = vpack.c.b16 %v3285, %v3284
        %v3316 = vpack.c.b16 %v3287, %v3286
        %v3317 = vpack.c.b16 %v3289, %v3288
        %v3318 = vpack.c.b16 %v3291, %v3290
        %v3319 = vpack.c.b16 %v3293, %v3292
        %v3320 = vpack.c.b16 %v3295, %v3294
        %v3321 = vpack.c.b16 %v3297, %v3296
        %3346 = vmatprep.subr.bf16.mxu0 0
        %3347 = vmatpush1.bf16.msra.mxu0 %v3298
        %3348 = vmatprep.subr.bf16.mxu0 0
        %3349 = vmatpush1.bf16.msra.mxu0 %v3299
        %3350 = vmatprep.subr.bf16.mxu0 0
        %3351 = vmatpush1.bf16.msra.mxu0 %v3300
        %3352 = vmatprep.subr.bf16.mxu0 0
        %3353 = vmatpush1.bf16.msra.mxu0 %v3301
        %3354 = vmatprep.subr.bf16.mxu0 0
        %3355 = vmatpush1.bf16.msra.mxu0 %v3302
        %3356 = vmatprep.subr.bf16.mxu0 0
        %3357 = vmatpush1.bf16.msra.mxu0 %v3303
        %3358 = vmatprep.subr.bf16.mxu0 0
        %3359 = vmatpush1.bf16.msra.mxu0 %v3304
        %3360 = vmatprep.subr.bf16.mxu0 0
        %3361 = vmatpush1.bf16.msra.mxu0 %v3305
        %3362 = vmatprep.subr.bf16.mxu0 0
        %3363 = vmatpush1.bf16.msra.mxu0 %v3306
        %3364 = vmatprep.subr.bf16.mxu0 0
        %3365 = vmatpush1.bf16.msra.mxu0 %v3307
        %3366 = vmatprep.subr.bf16.mxu0 0
        %3367 = vmatpush1.bf16.msra.mxu0 %v3308
        %3368 = vmatprep.subr.bf16.mxu0 0
        %3369 = vmatpush1.bf16.msra.mxu0 %v3309
        %3370 = vmatprep.subr.bf16.mxu0 0
        %3371 = vmatpush1.bf16.msra.mxu0 %v3310
        %3372 = vmatprep.subr.bf16.mxu0 0
        %3373 = vmatpush1.bf16.msra.mxu0 %v3311
        %3374 = vmatprep.subr.bf16.mxu0 0
        %3375 = vmatpush1.bf16.msra.mxu0 %v3312
        %3376 = vmatprep.subr.bf16.mxu0 0
        %3377 = vmatpush1.bf16.msra.mxu0 %v3313
        %3378 = vmatprep.mubr.bf16.mxu0 %v3004
        %3379 = vmatmul.mubr.bf16.gmra.mrb[0].mxu0 %v2953
        %v3380 = vpop.f32.mrb[0].mxu0
        %v3381 = vadd.f32 0.0, %v3380
        %v3382 = vpop.f32.mrb[0].mxu0
        %v3383 = vpop.f32.mrb[0].mxu0
        %v3384 = vadd.f32 0.0, %v3383
        %v3385 = vpop.f32.mrb[0].mxu0
        %3386 = vmatprep.mubr.bf16.mxu0 %v3016
        %3387 = vmatmul.mubr.bf16.gmra.mrb[0].mxu0 %v2954
        %v3388 = vpop.f32.mrb[0].mxu0
        %v3389 = vadd.f32 0.0, %v3388
        %v3390 = vpop.f32.mrb[0].mxu0
        %v3391 = vpop.f32.mrb[0].mxu0
        %v3392 = vadd.f32 0.0, %v3391
        %v3393 = vpop.f32.mrb[0].mxu0
        %3394 = vmatprep.mubr.bf16.mxu0 %v3028
        %3395 = vmatmul.mubr.bf16.gmra.mrb[0].mxu0 %v2955
        %v3396 = vpop.f32.mrb[0].mxu0
        %v3397 = vadd.f32 0.0, %v3396
        %v3398 = vpop.f32.mrb[0].mxu0
        %v3399 = vpop.f32.mrb[0].mxu0
        %v3400 = vadd.f32 0.0, %v3399
        %v3401 = vpop.f32.mrb[0].mxu0
        %3402 = vmatprep.mubr.bf16.mxu0 %v3040
        %3403 = vmatmul.mubr.bf16.gmra.mrb[0].mxu0 %v2956
        %v3404 = vpop.f32.mrb[0].mxu0
        %v3405 = vadd.f32 0.0, %v3404
        %v3406 = vpop.f32.mrb[0].mxu0
        %v3407 = vpop.f32.mrb[0].mxu0
        %v3408 = vadd.f32 0.0, %v3407
        %v3409 = vpop.f32.mrb[0].mxu0
        %3410 = vmatprep.mubr.bf16.mxu0 %v3052
        %3411 = vmatmul.mubr.bf16.gmra.mrb[0].mxu0 %v2957
        %v3412 = vpop.f32.mrb[0].mxu0
        %v3413 = vadd.f32 0.0, %v3412
        %v3414 = vpop.f32.mrb[0].mxu0
        %v3415 = vpop.f32.mrb[0].mxu0
        %v3416 = vadd.f32 0.0, %v3415
        %v3417 = vpop.f32.mrb[0].mxu0
        %3418 = vmatprep.mubr.bf16.mxu0 %v3064
        %3419 = vmatmul.mubr.bf16.gmra.mrb[0].mxu0 %v2958
        %v3420 = vpop.f32.mrb[0].mxu0
        %v3421 = vadd.f32 0.0, %v3420
        %v3422 = vpop.f32.mrb[0].mxu0
        %v3423 = vpop.f32.mrb[0].mxu0
        %v3424 = vadd.f32 0.0, %v3423
        %v3425 = vpop.f32.mrb[0].mxu0
        %3426 = vmatprep.mubr.bf16.mxu0 %v3076
        %3427 = vmatmul.mubr.bf16.gmra.mrb[0].mxu0 %v2959
        %v3428 = vpop.f32.mrb[0].mxu0
        %v3429 = vadd.f32 0.0, %v3428
        %v3430 = vpop.f32.mrb[0].mxu0
        %v3431 = vpop.f32.mrb[0].mxu0
        %v3432 = vadd.f32 0.0, %v3431
        %v3433 = vpop.f32.mrb[0].mxu0
        %3434 = vmatprep.mubr.bf16.mxu0 %v3088
        %3435 = vmatmul.mubr.bf16.gmra.mrb[0].mxu0 %v2960
        %v3436 = vpop.f32.mrb[0].mxu0
        %v3437 = vadd.f32 0.0, %v3436
        %v3438 = vpop.f32.mrb[0].mxu0
        %v3439 = vpop.f32.mrb[0].mxu0
        %v3440 = vadd.f32 0.0, %v3439
        %v3441 = vpop.f32.mrb[0].mxu0
        %3442 = vdwg.mxu0
        %3443 = vmatprep.subr.bf16.mxu0 0
        %3444 = vmatpush1.bf16.msra.mxu0 %v3314
        %3445 = vmatprep.subr.bf16.mxu0 0
        %3446 = vmatpush1.bf16.msra.mxu0 %v3315
        %3447 = vmatprep.subr.bf16.mxu0 0
        %3448 = vmatpush1.bf16.msra.mxu0 %v3316
        %3449 = vmatprep.subr.bf16.mxu0 0
        %3450 = vmatpush1.bf16.msra.mxu0 %v3317
        %3451 = vmatprep.subr.bf16.mxu0 0
        %3452 = vmatpush1.bf16.msra.mxu0 %v3318
        %3453 = vmatprep.subr.bf16.mxu0 0
        %3454 = vmatpush1.bf16.msra.mxu0 %v3319
        %3455 = vmatprep.subr.bf16.mxu0 0
        %3456 = vmatpush1.bf16.msra.mxu0 %v3320
        %3457 = vmatprep.subr.bf16.mxu0 0
        %3458 = vmatpush1.bf16.msra.mxu0 %v3321
        %3459 = vmatprep.subr.bf16.mxu0 0
        %3460 = vmatpush1.bf16.msra.mxu0 0
        %3461 = vmatprep.subr.bf16.mxu0 0
        %3462 = vmatpush1.bf16.msra.mxu0 0
        %3463 = vmatprep.subr.bf16.mxu0 0
        %3464 = vmatpush1.bf16.msra.mxu0 0
        %3465 = vmatprep.subr.bf16.mxu0 0
        %3466 = vmatpush1.bf16.msra.mxu0 0
        %3467 = vmatprep.subr.bf16.mxu0 0
        %3468 = vmatpush1.bf16.msra.mxu0 0
        %3469 = vmatprep.subr.bf16.mxu0 0
        %3470 = vmatpush1.bf16.msra.mxu0 0
        %3471 = vmatprep.subr.bf16.mxu0 0
        %3472 = vmatpush1.bf16.msra.mxu0 0
        %3473 = vmatprep.subr.bf16.mxu0 0
        %3474 = vmatpush1.bf16.msra.mxu0 0
        %3475 = vmatprep.mubr.bf16.mxu0 0
        %3476 = vmatmul.mubr.bf16.gmra.mrb[0].mxu0 %v3123
        %v3477 = vpop.f32.mrb[0].mxu0
        %v3478 = vadd.f32 %v3381, %v3477
        %v3479 = vpop.f32.mrb[0].mxu0
        %v3480 = vpop.f32.mrb[0].mxu0
        %v3481 = vadd.f32 %v3384, %v3480
        %v3482 = vpop.f32.mrb[0].mxu0
        %3483 = vmatprep.mubr.bf16.mxu0 0
        %3484 = vmatmul.mubr.bf16.gmra.mrb[0].mxu0 %v3126
        %v3485 = vpop.f32.mrb[0].mxu0
        %v3486 = vadd.f32 %v3389, %v3485
        %v3487 = vpop.f32.mrb[0].mxu0
        %v3488 = vpop.f32.mrb[0].mxu0
        %v3489 = vadd.f32 %v3392, %v3488
        %v3490 = vpop.f32.mrb[0].mxu0
        %3491 = vmatprep.mubr.bf16.mxu0 0
        %3492 = vmatmul.mubr.bf16.gmra.mrb[0].mxu0 %v3129
        %v3493 = vpop.f32.mrb[0].mxu0
        %v3494 = vadd.f32 %v3397, %v3493
        %v3495 = vpop.f32.mrb[0].mxu0
        %v3496 = vpop.f32.mrb[0].mxu0
        %v3497 = vadd.f32 %v3400, %v3496
        %v3498 = vpop.f32.mrb[0].mxu0
        %3499 = vmatprep.mubr.bf16.mxu0 0
        %3500 = vmatmul.mubr.bf16.gmra.mrb[0].mxu0 %v3132
        %v3501 = vpop.f32.mrb[0].mxu0
        %v3502 = vadd.f32 %v3405, %v3501
        %v3503 = vpop.f32.mrb[0].mxu0
        %v3504 = vpop.f32.mrb[0].mxu0
        %v3505 = vadd.f32 %v3408, %v3504
        %v3506 = vpop.f32.mrb[0].mxu0
        %3507 = vmatprep.mubr.bf16.mxu0 0
        %3508 = vmatmul.mubr.bf16.gmra.mrb[0].mxu0 %v3135
        %v3509 = vpop.f32.mrb[0].mxu0
        %v3510 = vadd.f32 %v3413, %v3509
        %v3511 = vpop.f32.mrb[0].mxu0
        %v3512 = vpop.f32.mrb[0].mxu0
        %v3513 = vadd.f32 %v3416, %v3512
        %v3514 = vpop.f32.mrb[0].mxu0
        %3515 = vmatprep.mubr.bf16.mxu0 0
        %3516 = vmatmul.mubr.bf16.gmra.mrb[0].mxu0 %v3138
        %v3517 = vpop.f32.mrb[0].mxu0
        %v3518 = vadd.f32 %v3421, %v3517
        %v3519 = vpop.f32.mrb[0].mxu0
        %v3520 = vpop.f32.mrb[0].mxu0
        %v3521 = vadd.f32 %v3424, %v3520
        %v3522 = vpop.f32.mrb[0].mxu0
        %3523 = vmatprep.mubr.bf16.mxu0 0
        %3524 = vmatmul.mubr.bf16.gmra.mrb[0].mxu0 %v3141
        %v3525 = vpop.f32.mrb[0].mxu0
        %v3526 = vadd.f32 %v3429, %v3525
        %v3527 = vpop.f32.mrb[0].mxu0
        %v3528 = vpop.f32.mrb[0].mxu0
        %v3529 = vadd.f32 %v3432, %v3528
        %v3530 = vpop.f32.mrb[0].mxu0
        %3531 = vmatprep.mubr.bf16.mxu0 0
        %3532 = vmatmul.mubr.bf16.gmra.mrb[0].mxu0 %v3144
        %v3533 = vpop.f32.mrb[0].mxu0
        %v3534 = vadd.f32 %v3437, %v3533
        %v3535 = vpop.f32.mrb[0].mxu0
        %v3536 = vpop.f32.mrb[0].mxu0
        %v3537 = vadd.f32 %v3440, %v3536
        %v3538 = vpop.f32.mrb[0].mxu0
        %3539 = vdwg.mxu0
        %v3588 = vunpack.c.l.b16 %v2840
        %v3589 = vunpack.c.l.b16 %v2841
        %v3590 = vunpack.c.l.b16 %v2842
        %v3591 = vunpack.c.l.b16 %v2843
        %v3592 = vunpack.c.l.b16 %v2844
        %v3593 = vunpack.c.l.b16 %v2845
        %v3594 = vunpack.c.l.b16 %v2846
        %v3595 = vunpack.c.l.b16 %v2847
        %v3596 = vunpack.c.l.b16 %v2848
        %v3597 = vunpack.c.l.b16 %v2849
        %v3598 = vunpack.c.l.b16 %v2850
        %v3599 = vunpack.c.l.b16 %v2851
        %v3600 = vunpack.c.l.b16 %v2852
        %v3601 = vunpack.c.l.b16 %v2853
        %v3602 = vunpack.c.l.b16 %v2854
        %v3603 = vunpack.c.l.b16 %v2855
        %v3604 = vunpack.c.l.b16 %v2856
        %v3605 = vunpack.c.l.b16 %v2857
        %v3606 = vunpack.c.l.b16 %v2858
        %v3607 = vunpack.c.l.b16 %v2859
        %v3608 = vunpack.c.l.b16 %v2860
        %v3609 = vunpack.c.l.b16 %v2861
        %v3610 = vunpack.c.l.b16 %v2862
        %v3611 = vunpack.c.l.b16 %v2863
        %v3612 = vunpack.c.l.b16 %v2864
        %v3613 = vunpack.c.l.b16 %v2865
        %v3614 = vunpack.c.l.b16 %v2866
        %v3615 = vunpack.c.l.b16 %v2867
        %v3616 = vunpack.c.l.b16 %v2868
        %v3617 = vunpack.c.l.b16 %v2869
        %v3618 = vunpack.c.l.b16 %v2870
        %v3619 = vunpack.c.l.b16 %v2871
        %v3620 = vunpack.c.l.b16 %v2872
        %v3621 = vunpack.c.l.b16 %v2873
        %v3622 = vunpack.c.l.b16 %v2874
        %v3623 = vunpack.c.l.b16 %v2875
        %v3624 = vunpack.c.l.b16 %v2876
        %v3625 = vunpack.c.l.b16 %v2877
        %v3626 = vunpack.c.l.b16 %v2878
        %v3627 = vunpack.c.l.b16 %v2879
        %v3628 = vunpack.c.l.b16 %v2880
        %v3629 = vunpack.c.l.b16 %v2881
        %v3630 = vunpack.c.l.b16 %v2882
        %v3631 = vunpack.c.l.b16 %v2883
        %v3632 = vunpack.c.l.b16 %v2884
        %v3633 = vunpack.c.l.b16 %v2885
        %v3634 = vunpack.c.l.b16 %v2886
        %v3635 = vunpack.c.l.b16 %v2887
        %v3636 = vpack.c.b16 %v3589, %v3588
        %v3637 = vpack.c.b16 %v3591, %v3590
        %v3638 = vpack.c.b16 %v3593, %v3592
        %v3639 = vpack.c.b16 %v3595, %v3594
        %v3640 = vpack.c.b16 %v3597, %v3596
        %v3641 = vpack.c.b16 %v3599, %v3598
        %v3642 = vpack.c.b16 %v3601, %v3600
        %v3643 = vpack.c.b16 %v3603, %v3602
        %v3644 = vpack.c.b16 %v3605, %v3604
        %v3645 = vpack.c.b16 %v3607, %v3606
        %v3646 = vpack.c.b16 %v3609, %v3608
        %v3647 = vpack.c.b16 %v3611, %v3610
        %v3648 = vpack.c.b16 %v3613, %v3612
        %v3649 = vpack.c.b16 %v3615, %v3614
        %v3650 = vpack.c.b16 %v3617, %v3616
        %v3651 = vpack.c.b16 %v3619, %v3618
        %v3652 = vpack.c.b16 %v3621, %v3620
        %v3653 = vpack.c.b16 %v3623, %v3622
        %v3654 = vpack.c.b16 %v3625, %v3624
        %v3655 = vpack.c.b16 %v3627, %v3626
        %v3656 = vpack.c.b16 %v3629, %v3628
        %v3657 = vpack.c.b16 %v3631, %v3630
        %v3658 = vpack.c.b16 %v3633, %v3632
        %v3659 = vpack.c.b16 %v3635, %v3634
        %3684 = vmatprep.subr.bf16.mxu0 0
        %3685 = vmatpush1.bf16.msra.mxu0 %v3636
        %3686 = vmatprep.subr.bf16.mxu0 0
        %3687 = vmatpush1.bf16.msra.mxu0 %v3637
        %3688 = vmatprep.subr.bf16.mxu0 0
        %3689 = vmatpush1.bf16.msra.mxu0 %v3638
        %3690 = vmatprep.subr.bf16.mxu0 0
        %3691 = vmatpush1.bf16.msra.mxu0 %v3639
        %3692 = vmatprep.subr.bf16.mxu0 0
        %3693 = vmatpush1.bf16.msra.mxu0 %v3640
        %3694 = vmatprep.subr.bf16.mxu0 0
        %3695 = vmatpush1.bf16.msra.mxu0 %v3641
        %3696 = vmatprep.subr.bf16.mxu0 0
        %3697 = vmatpush1.bf16.msra.mxu0 %v3642
        %3698 = vmatprep.subr.bf16.mxu0 0
        %3699 = vmatpush1.bf16.msra.mxu0 %v3643
        %3700 = vmatprep.subr.bf16.mxu0 0
        %3701 = vmatpush1.bf16.msra.mxu0 %v3644
        %3702 = vmatprep.subr.bf16.mxu0 0
        %3703 = vmatpush1.bf16.msra.mxu0 %v3645
        %3704 = vmatprep.subr.bf16.mxu0 0
        %3705 = vmatpush1.bf16.msra.mxu0 %v3646
        %3706 = vmatprep.subr.bf16.mxu0 0
        %3707 = vmatpush1.bf16.msra.mxu0 %v3647
        %3708 = vmatprep.subr.bf16.mxu0 0
        %3709 = vmatpush1.bf16.msra.mxu0 %v3648
        %3710 = vmatprep.subr.bf16.mxu0 0
        %3711 = vmatpush1.bf16.msra.mxu0 %v3649
        %3712 = vmatprep.subr.bf16.mxu0 0
        %3713 = vmatpush1.bf16.msra.mxu0 %v3650
        %3714 = vmatprep.subr.bf16.mxu0 0
        %3715 = vmatpush1.bf16.msra.mxu0 %v3651
        %3716 = vmatprep.mubr.bf16.mxu0 %v2691
        %3717 = vmatmul.mubr.bf16.gmra.mrb[0].mxu0 %v2640
        %v3718 = vpop.f32.mrb[0].mxu0
        %v3719 = vadd.f32 %v3478, %v3718
        %v3720 = vpop.f32.mrb[0].mxu0
        %v3721 = vpop.f32.mrb[0].mxu0
        %v3722 = vadd.f32 %v3481, %v3721
        %v3723 = vpop.f32.mrb[0].mxu0
        %3724 = vmatprep.mubr.bf16.mxu0 %v2703
        %3725 = vmatmul.mubr.bf16.gmra.mrb[0].mxu0 %v2641
        %v3726 = vpop.f32.mrb[0].mxu0
        %v3727 = vadd.f32 %v3486, %v3726
        %v3728 = vpop.f32.mrb[0].mxu0
        %v3729 = vpop.f32.mrb[0].mxu0
        %v3730 = vadd.f32 %v3489, %v3729
        %v3731 = vpop.f32.mrb[0].mxu0
        %3732 = vmatprep.mubr.bf16.mxu0 %v2715
        %3733 = vmatmul.mubr.bf16.gmra.mrb[0].mxu0 %v2642
        %v3734 = vpop.f32.mrb[0].mxu0
        %v3735 = vadd.f32 %v3494, %v3734
        %v3736 = vpop.f32.mrb[0].mxu0
        %v3737 = vpop.f32.mrb[0].mxu0
        %v3738 = vadd.f32 %v3497, %v3737
        %v3739 = vpop.f32.mrb[0].mxu0
        %3740 = vmatprep.mubr.bf16.mxu0 %v2727
        %3741 = vmatmul.mubr.bf16.gmra.mrb[0].mxu0 %v2643
        %v3742 = vpop.f32.mrb[0].mxu0
        %v3743 = vadd.f32 %v3502, %v3742
        %v3744 = vpop.f32.mrb[0].mxu0
        %v3745 = vpop.f32.mrb[0].mxu0
        %v3746 = vadd.f32 %v3505, %v3745
        %v3747 = vpop.f32.mrb[0].mxu0
        %3748 = vmatprep.mubr.bf16.mxu0 %v2739
        %3749 = vmatmul.mubr.bf16.gmra.mrb[0].mxu0 %v2644
        %v3750 = vpop.f32.mrb[0].mxu0
        %v3751 = vadd.f32 %v3510, %v3750
        %v3752 = vpop.f32.mrb[0].mxu0
        %v3753 = vpop.f32.mrb[0].mxu0
        %v3754 = vadd.f32 %v3513, %v3753
        %v3755 = vpop.f32.mrb[0].mxu0
        %3756 = vmatprep.mubr.bf16.mxu0 %v2751
        %3757 = vmatmul.mubr.bf16.gmra.mrb[0].mxu0 %v2645
        %v3758 = vpop.f32.mrb[0].mxu0
        %v3759 = vadd.f32 %v3518, %v3758
        %v3760 = vpop.f32.mrb[0].mxu0
        %v3761 = vpop.f32.mrb[0].mxu0
        %v3762 = vadd.f32 %v3521, %v3761
        %v3763 = vpop.f32.mrb[0].mxu0
        %3764 = vmatprep.mubr.bf16.mxu0 %v2763
        %3765 = vmatmul.mubr.bf16.gmra.mrb[0].mxu0 %v2646
        %v3766 = vpop.f32.mrb[0].mxu0
        %v3767 = vadd.f32 %v3526, %v3766
        %v3768 = vpop.f32.mrb[0].mxu0
        %v3769 = vpop.f32.mrb[0].mxu0
        %v3770 = vadd.f32 %v3529, %v3769
        %v3771 = vpop.f32.mrb[0].mxu0
        %3772 = vmatprep.mubr.bf16.mxu0 %v2775
        %3773 = vmatmul.mubr.bf16.gmra.mrb[0].mxu0 %v2647
        %v3774 = vpop.f32.mrb[0].mxu0
        %v3775 = vadd.f32 %v3534, %v3774
        %v3776 = vpop.f32.mrb[0].mxu0
        %v3777 = vpop.f32.mrb[0].mxu0
        %v3778 = vadd.f32 %v3537, %v3777
        %v3779 = vpop.f32.mrb[0].mxu0
        %3780 = vdwg.mxu0
        %3781 = vmatprep.subr.bf16.mxu0 0
        %3782 = vmatpush1.bf16.msra.mxu0 %v3652
        %3783 = vmatprep.subr.bf16.mxu0 0
        %3784 = vmatpush1.bf16.msra.mxu0 %v3653
        %3785 = vmatprep.subr.bf16.mxu0 0
        %3786 = vmatpush1.bf16.msra.mxu0 %v3654
        %3787 = vmatprep.subr.bf16.mxu0 0
        %3788 = vmatpush1.bf16.msra.mxu0 %v3655
        %3789 = vmatprep.subr.bf16.mxu0 0
        %3790 = vmatpush1.bf16.msra.mxu0 %v3656
        %3791 = vmatprep.subr.bf16.mxu0 0
        %3792 = vmatpush1.bf16.msra.mxu0 %v3657
        %3793 = vmatprep.subr.bf16.mxu0 0
        %3794 = vmatpush1.bf16.msra.mxu0 %v3658
        %3795 = vmatprep.subr.bf16.mxu0 0
        %3796 = vmatpush1.bf16.msra.mxu0 %v3659
        %3797 = vmatprep.subr.bf16.mxu0 0
        %3798 = vmatpush1.bf16.msra.mxu0 0
        %3799 = vmatprep.subr.bf16.mxu0 0
        %3800 = vmatpush1.bf16.msra.mxu0 0
        %3801 = vmatprep.subr.bf16.mxu0 0
        %3802 = vmatpush1.bf16.msra.mxu0 0
        %3803 = vmatprep.subr.bf16.mxu0 0
        %3804 = vmatpush1.bf16.msra.mxu0 0
        %3805 = vmatprep.subr.bf16.mxu0 0
        %3806 = vmatpush1.bf16.msra.mxu0 0
        %3807 = vmatprep.subr.bf16.mxu0 0
        %3808 = vmatpush1.bf16.msra.mxu0 0
        %3809 = vmatprep.subr.bf16.mxu0 0
        %3810 = vmatpush1.bf16.msra.mxu0 0
        %3811 = vmatprep.subr.bf16.mxu0 0
        %3812 = vmatpush1.bf16.msra.mxu0 0
        %3813 = vmatprep.mubr.bf16.mxu0 0
        %3814 = vmatmul.mubr.bf16.gmra.mrb[0].mxu0 %v2810
        %v3815 = vpop.f32.mrb[0].mxu0
        %v3816 = vadd.f32 %v3719, %v3815
        %v3817 = vpop.f32.mrb[0].mxu0
        %v3818 = vpop.f32.mrb[0].mxu0
        %v3819 = vadd.f32 %v3722, %v3818
        %v3820 = vpop.f32.mrb[0].mxu0
        %3821 = vmatprep.mubr.bf16.mxu0 0
        %3822 = vmatmul.mubr.bf16.gmra.mrb[0].mxu0 %v2813
        %v3823 = vpop.f32.mrb[0].mxu0
        %v3824 = vadd.f32 %v3727, %v3823
        %v3825 = vpop.f32.mrb[0].mxu0
        %v3826 = vpop.f32.mrb[0].mxu0
        %v3827 = vadd.f32 %v3730, %v3826
        %v3828 = vpop.f32.mrb[0].mxu0
        %3829 = vmatprep.mubr.bf16.mxu0 0
        %3830 = vmatmul.mubr.bf16.gmra.mrb[0].mxu0 %v2816
        %v3831 = vpop.f32.mrb[0].mxu0
        %v3832 = vadd.f32 %v3735, %v3831
        %v3833 = vpop.f32.mrb[0].mxu0
        %v3834 = vpop.f32.mrb[0].mxu0
        %v3835 = vadd.f32 %v3738, %v3834
        %v3836 = vpop.f32.mrb[0].mxu0
        %3837 = vmatprep.mubr.bf16.mxu0 0
        %3838 = vmatmul.mubr.bf16.gmra.mrb[0].mxu0 %v2819
        %v3839 = vpop.f32.mrb[0].mxu0
        %v3840 = vadd.f32 %v3743, %v3839
        %v3841 = vpop.f32.mrb[0].mxu0
        %v3842 = vpop.f32.mrb[0].mxu0
        %v3843 = vadd.f32 %v3746, %v3842
        %v3844 = vpop.f32.mrb[0].mxu0
        %3845 = vmatprep.mubr.bf16.mxu0 0
        %3846 = vmatmul.mubr.bf16.gmra.mrb[0].mxu0 %v2822
        %v3847 = vpop.f32.mrb[0].mxu0
        %v3848 = vadd.f32 %v3751, %v3847
        %v3849 = vpop.f32.mrb[0].mxu0
        %v3850 = vpop.f32.mrb[0].mxu0
        %v3851 = vadd.f32 %v3754, %v3850
        %v3852 = vpop.f32.mrb[0].mxu0
        %3853 = vmatprep.mubr.bf16.mxu0 0
        %3854 = vmatmul.mubr.bf16.gmra.mrb[0].mxu0 %v2825
        %v3855 = vpop.f32.mrb[0].mxu0
        %v3856 = vadd.f32 %v3759, %v3855
        %v3857 = vpop.f32.mrb[0].mxu0
        %v3858 = vpop.f32.mrb[0].mxu0
        %v3859 = vadd.f32 %v3762, %v3858
        %v3860 = vpop.f32.mrb[0].mxu0
        %3861 = vmatprep.mubr.bf16.mxu0 0
        %3862 = vmatmul.mubr.bf16.gmra.mrb[0].mxu0 %v2828
        %v3863 = vpop.f32.mrb[0].mxu0
        %v3864 = vadd.f32 %v3767, %v3863
        %v3865 = vpop.f32.mrb[0].mxu0
        %v3866 = vpop.f32.mrb[0].mxu0
        %v3867 = vadd.f32 %v3770, %v3866
        %v3868 = vpop.f32.mrb[0].mxu0
        %3869 = vmatprep.mubr.bf16.mxu0 0
        %3870 = vmatmul.mubr.bf16.gmra.mrb[0].mxu0 %v2831
        %v3871 = vpop.f32.mrb[0].mxu0
        %v3872 = vadd.f32 %v3775, %v3871
        %v3873 = vpop.f32.mrb[0].mxu0
        %v3874 = vpop.f32.mrb[0].mxu0
        %v3875 = vadd.f32 %v3778, %v3874
        %v3876 = vpop.f32.mrb[0].mxu0
        %3877 = vdwg.mxu0
        %s3878 = scalar_lea.vmem [#allocation2], 24
        %v3879 = vld [vmem:[%s3878] sm:$0xf]
        %v3880 = vld [vmem:[%s3878 + $0x4] sm:$0xf]
        %v3881 = vld [vmem:[%s3878 + $0xc] sm:$0xf]
        %v3882 = vld [vmem:[%s3878 + $0x10] sm:$0xf]
        %v3883 = vld [vmem:[%s3878 + $0x18] sm:$0xf]
        %v3884 = vld [vmem:[%s3878 + $0x1c] sm:$0xf]
        %v3885 = vld [vmem:[%s3878 + $0x24] sm:$0xf]
        %v3886 = vld [vmem:[%s3878 + $0x28] sm:$0xf]
        %v3887 = vld [vmem:[%s3878 + $0x30] sm:$0xf]
        %v3888 = vld [vmem:[%s3878 + $0x34] sm:$0xf]
        %v3889 = vld [vmem:[%s3878 + $0x3c] sm:$0xf]
        %v3890 = vld [vmem:[%s3878 + $0x40] sm:$0xf]
        %v3891 = vld [vmem:[%s3878 + $0x48] sm:$0xf]
        %v3892 = vld [vmem:[%s3878 + $0x4c] sm:$0xf]
        %v3893 = vld [vmem:[%s3878 + $0x54] sm:$0xf]
        %v3894 = vld [vmem:[%s3878 + $0x58] sm:$0xf]
        %v3895 = vld [vmem:[%s3878 + $0x8] sm:$0x1]
        %v3896 = vld [vmem:[%s3878 + $0x14] sm:$0x1]
        %v3897 = vld [vmem:[%s3878 + $0x20] sm:$0x1]
        %v3898 = vld [vmem:[%s3878 + $0x2c] sm:$0x1]
        %v3899 = vld [vmem:[%s3878 + $0x38] sm:$0x1]
        %v3900 = vld [vmem:[%s3878 + $0x44] sm:$0x1]
        %v3901 = vld [vmem:[%s3878 + $0x50] sm:$0x1]
        %v3902 = vld [vmem:[%s3878 + $0x5c] sm:$0x1]
        %v3903 = vld [vmem:[%s3878] sm:$0xe]
        %v3904 = vld [vmem:[%s3878 + $0xc] sm:$0xe]
        %v3905 = vld [vmem:[%s3878 + $0x18] sm:$0xe]
        %v3906 = vld [vmem:[%s3878 + $0x24] sm:$0xe]
        %v3907 = vld [vmem:[%s3878 + $0x30] sm:$0xe]
        %v3908 = vld [vmem:[%s3878 + $0x3c] sm:$0xe]
        %v3909 = vld [vmem:[%s3878 + $0x48] sm:$0xe]
        %v3910 = vld [vmem:[%s3878 + $0x54] sm:$0xe]
        %v3927 = vunpack.c.l.b16 %v3879
        %v3928 = vunpack.c.l.b16 %v3880
        %v3929 = vunpack.c.l.b16 %v3881
        %v3930 = vunpack.c.l.b16 %v3882
        %v3931 = vunpack.c.l.b16 %v3883
        %v3932 = vunpack.c.l.b16 %v3884
        %v3933 = vunpack.c.l.b16 %v3885
        %v3934 = vunpack.c.l.b16 %v3886
        %v3935 = vunpack.c.l.b16 %v3887
        %v3936 = vunpack.c.l.b16 %v3888
        %v3937 = vunpack.c.l.b16 %v3889
        %v3938 = vunpack.c.l.b16 %v3890
        %v3939 = vunpack.c.l.b16 %v3891
        %v3940 = vunpack.c.l.b16 %v3892
        %v3941 = vunpack.c.l.b16 %v3893
        %v3942 = vunpack.c.l.b16 %v3894
        %v3943 = vpack.c.b16 %v3928, %v3927
        %v3944 = vpack.c.b16 %v3930, %v3929
        %v3945 = vpack.c.b16 %v3932, %v3931
        %v3946 = vpack.c.b16 %v3934, %v3933
        %v3947 = vpack.c.b16 %v3936, %v3935
        %v3948 = vpack.c.b16 %v3938, %v3937
        %v3949 = vpack.c.b16 %v3940, %v3939
        %v3950 = vpack.c.b16 %v3942, %v3941
        %v3967 = vunpack.c.l.b16 %v3895
        %v3968 = vunpack.c.l.b16 %v3896
        %v3969 = vunpack.c.l.b16 %v3897
        %v3970 = vunpack.c.l.b16 %v3898
        %v3971 = vunpack.c.l.b16 %v3899
        %v3972 = vunpack.c.l.b16 %v3900
        %v3973 = vunpack.c.l.b16 %v3901
        %v3974 = vunpack.c.l.b16 %v3902
        %v3975 = vpack.c.b16 %v3967, %v3967
        %v3976 = vpack.c.b16 %v3968, %v3968
        %v3977 = vpack.c.b16 %v3969, %v3969
        %v3978 = vpack.c.b16 %v3970, %v3970
        %v3979 = vpack.c.b16 %v3971, %v3971
        %v3980 = vpack.c.b16 %v3972, %v3972
        %v3981 = vpack.c.b16 %v3973, %v3973
        %v3982 = vpack.c.b16 %v3974, %v3974
        %v3984 = vshrl.u32 %v3943, 16
        %v3986 = vshll.u32 %v3943, 16
        %v3988 = vrot.slane %v3986, 1
        %v3989 = vor.u32 %v3984, %v3988
        %v3991 = vshll.u32 %v3975, 16
        %v3993 = vrot.slane %v3991, 1
        %v3994 = vsel %vm522, %v3989, %v3993
        %v3996 = vshrl.u32 %v3944, 16
        %v3998 = vshll.u32 %v3944, 16
        %v4000 = vrot.slane %v3998, 1
        %v4001 = vor.u32 %v3996, %v4000
        %v4003 = vshll.u32 %v3976, 16
        %v4005 = vrot.slane %v4003, 1
        %v4006 = vsel %vm522, %v4001, %v4005
        %v4008 = vshrl.u32 %v3945, 16
        %v4010 = vshll.u32 %v3945, 16
        %v4012 = vrot.slane %v4010, 1
        %v4013 = vor.u32 %v4008, %v4012
        %v4015 = vshll.u32 %v3977, 16
        %v4017 = vrot.slane %v4015, 1
        %v4018 = vsel %vm522, %v4013, %v4017
        %v4020 = vshrl.u32 %v3946, 16
        %v4022 = vshll.u32 %v3946, 16
        %v4024 = vrot.slane %v4022, 1
        %v4025 = vor.u32 %v4020, %v4024
        %v4027 = vshll.u32 %v3978, 16
        %v4029 = vrot.slane %v4027, 1
        %v4030 = vsel %vm522, %v4025, %v4029
        %v4032 = vshrl.u32 %v3947, 16
        %v4034 = vshll.u32 %v3947, 16
        %v4036 = vrot.slane %v4034, 1
        %v4037 = vor.u32 %v4032, %v4036
        %v4039 = vshll.u32 %v3979, 16
        %v4041 = vrot.slane %v4039, 1
        %v4042 = vsel %vm522, %v4037, %v4041
        %v4044 = vshrl.u32 %v3948, 16
        %v4046 = vshll.u32 %v3948, 16
        %v4048 = vrot.slane %v4046, 1
        %v4049 = vor.u32 %v4044, %v4048
        %v4051 = vshll.u32 %v3980, 16
        %v4053 = vrot.slane %v4051, 1
        %v4054 = vsel %vm522, %v4049, %v4053
        %v4056 = vshrl.u32 %v3949, 16
        %v4058 = vshll.u32 %v3949, 16
        %v4060 = vrot.slane %v4058, 1
        %v4061 = vor.u32 %v4056, %v4060
        %v4063 = vshll.u32 %v3981, 16
        %v4065 = vrot.slane %v4063, 1
        %v4066 = vsel %vm522, %v4061, %v4065
        %v4068 = vshrl.u32 %v3950, 16
        %v4070 = vshll.u32 %v3950, 16
        %v4072 = vrot.slane %v4070, 1
        %v4073 = vor.u32 %v4068, %v4072
        %v4075 = vshll.u32 %v3982, 16
        %v4077 = vrot.slane %v4075, 1
        %v4078 = vsel %vm522, %v4073, %v4077
        %v4095 = vunpack.c.l.b16 %v3903
        %v4096 = vunpack.c.l.b16 %v3904
        %v4097 = vunpack.c.l.b16 %v3905
        %v4098 = vunpack.c.l.b16 %v3906
        %v4099 = vunpack.c.l.b16 %v3907
        %v4100 = vunpack.c.l.b16 %v3908
        %v4101 = vunpack.c.l.b16 %v3909
        %v4102 = vunpack.c.l.b16 %v3910
        %v4103 = vpack.c.b16 %v3928, %v4095
        %v4104 = vpack.c.b16 %v3930, %v4096
        %v4105 = vpack.c.b16 %v3932, %v4097
        %v4106 = vpack.c.b16 %v3934, %v4098
        %v4107 = vpack.c.b16 %v3936, %v4099
        %v4108 = vpack.c.b16 %v3938, %v4100
        %v4109 = vpack.c.b16 %v3940, %v4101
        %v4110 = vpack.c.b16 %v3942, %v4102
        %v4111 = vrot.slane %v4103, 1
        %v4112 = vrot.slane %v3975, 1
        %v4113 = vsel %vm653, %v4111, %v4112
        %v4114 = vrot.slane %v4104, 1
        %v4115 = vrot.slane %v3976, 1
        %v4116 = vsel %vm653, %v4114, %v4115
        %v4117 = vrot.slane %v4105, 1
        %v4118 = vrot.slane %v3977, 1
        %v4119 = vsel %vm653, %v4117, %v4118
        %v4120 = vrot.slane %v4106, 1
        %v4121 = vrot.slane %v3978, 1
        %v4122 = vsel %vm653, %v4120, %v4121
        %v4123 = vrot.slane %v4107, 1
        %v4124 = vrot.slane %v3979, 1
        %v4125 = vsel %vm653, %v4123, %v4124
        %v4126 = vrot.slane %v4108, 1
        %v4127 = vrot.slane %v3980, 1
        %v4128 = vsel %vm653, %v4126, %v4127
        %v4129 = vrot.slane %v4109, 1
        %v4130 = vrot.slane %v3981, 1
        %v4131 = vsel %vm653, %v4129, %v4130
        %v4132 = vrot.slane %v4110, 1
        %v4133 = vrot.slane %v3982, 1
        %v4134 = vsel %vm653, %v4132, %v4133
        %s4143 = scalar_lea.vmem [#allocation11], 384
        %v4144 = vld [vmem:[%s4143] sm:$0xf]
        %v4145 = vld [vmem:[%s4143 + $0x4] sm:$0xf]
        %v4146 = vld [vmem:[%s4143 + $0x8] sm:$0xf]
        %v4147 = vld [vmem:[%s4143 + $0xc] sm:$0xf]
        %v4148 = vld [vmem:[%s4143 + $0x10] sm:$0xf]
        %v4149 = vld [vmem:[%s4143 + $0x14] sm:$0xf]
        %v4150 = vld [vmem:[%s4143 + $0x18] sm:$0xf]
        %v4151 = vld [vmem:[%s4143 + $0x1c] sm:$0xf]
        %v4152 = vld [vmem:[%s4143 + $0x20] sm:$0xf]
        %v4153 = vld [vmem:[%s4143 + $0x24] sm:$0xf]
        %v4154 = vld [vmem:[%s4143 + $0x28] sm:$0xf]
        %v4155 = vld [vmem:[%s4143 + $0x2c] sm:$0xf]
        %v4156 = vld [vmem:[%s4143 + $0x30] sm:$0xf]
        %v4157 = vld [vmem:[%s4143 + $0x34] sm:$0xf]
        %v4158 = vld [vmem:[%s4143 + $0x38] sm:$0xf]
        %v4159 = vld [vmem:[%s4143 + $0x3c] sm:$0xf]
        %v4160 = vld [vmem:[%s4143 + $0x40] sm:$0xf]
        %v4161 = vld [vmem:[%s4143 + $0x44] sm:$0xf]
        %v4162 = vld [vmem:[%s4143 + $0x48] sm:$0xf]
        %v4163 = vld [vmem:[%s4143 + $0x4c] sm:$0xf]
        %v4164 = vld [vmem:[%s4143 + $0x50] sm:$0xf]
        %v4165 = vld [vmem:[%s4143 + $0x54] sm:$0xf]
        %v4166 = vld [vmem:[%s4143 + $0x58] sm:$0xf]
        %v4167 = vld [vmem:[%s4143 + $0x5c] sm:$0xf]
        %v4168 = vld [vmem:[%s4143 + $0x60] sm:$0xf]
        %v4169 = vld [vmem:[%s4143 + $0x64] sm:$0xf]
        %v4170 = vld [vmem:[%s4143 + $0x68] sm:$0xf]
        %v4171 = vld [vmem:[%s4143 + $0x6c] sm:$0xf]
        %v4172 = vld [vmem:[%s4143 + $0x70] sm:$0xf]
        %v4173 = vld [vmem:[%s4143 + $0x74] sm:$0xf]
        %v4174 = vld [vmem:[%s4143 + $0x78] sm:$0xf]
        %v4175 = vld [vmem:[%s4143 + $0x7c] sm:$0xf]
        %v4176 = vld [vmem:[%s4143 + $0x80] sm:$0xf]
        %v4177 = vld [vmem:[%s4143 + $0x84] sm:$0xf]
        %v4178 = vld [vmem:[%s4143 + $0x88] sm:$0xf]
        %v4179 = vld [vmem:[%s4143 + $0x8c] sm:$0xf]
        %v4180 = vld [vmem:[%s4143 + $0x90] sm:$0xf]
        %v4181 = vld [vmem:[%s4143 + $0x94] sm:$0xf]
        %v4182 = vld [vmem:[%s4143 + $0x98] sm:$0xf]
        %v4183 = vld [vmem:[%s4143 + $0x9c] sm:$0xf]
        %v4184 = vld [vmem:[%s4143 + $0xa0] sm:$0xf]
        %v4185 = vld [vmem:[%s4143 + $0xa4] sm:$0xf]
        %v4186 = vld [vmem:[%s4143 + $0xa8] sm:$0xf]
        %v4187 = vld [vmem:[%s4143 + $0xac] sm:$0xf]
        %v4188 = vld [vmem:[%s4143 + $0xb0] sm:$0xf]
        %v4189 = vld [vmem:[%s4143 + $0xb4] sm:$0xf]
        %v4190 = vld [vmem:[%s4143 + $0xb8] sm:$0xf]
        %v4191 = vld [vmem:[%s4143 + $0xbc] sm:$0xf]
        %v4240 = vunpack.c.l.b16 %v4144
        %v4241 = vunpack.c.l.b16 %v4145
        %v4242 = vunpack.c.l.b16 %v4146
        %v4243 = vunpack.c.l.b16 %v4147
        %v4244 = vunpack.c.l.b16 %v4148
        %v4245 = vunpack.c.l.b16 %v4149
        %v4246 = vunpack.c.l.b16 %v4150
        %v4247 = vunpack.c.l.b16 %v4151
        %v4248 = vunpack.c.l.b16 %v4152
        %v4249 = vunpack.c.l.b16 %v4153
        %v4250 = vunpack.c.l.b16 %v4154
        %v4251 = vunpack.c.l.b16 %v4155
        %v4252 = vunpack.c.l.b16 %v4156
        %v4253 = vunpack.c.l.b16 %v4157
        %v4254 = vunpack.c.l.b16 %v4158
        %v4255 = vunpack.c.l.b16 %v4159
        %v4256 = vunpack.c.l.b16 %v4160
        %v4257 = vunpack.c.l.b16 %v4161
        %v4258 = vunpack.c.l.b16 %v4162
        %v4259 = vunpack.c.l.b16 %v4163
        %v4260 = vunpack.c.l.b16 %v4164
        %v4261 = vunpack.c.l.b16 %v4165
        %v4262 = vunpack.c.l.b16 %v4166
        %v4263 = vunpack.c.l.b16 %v4167
        %v4264 = vunpack.c.l.b16 %v4168
        %v4265 = vunpack.c.l.b16 %v4169
        %v4266 = vunpack.c.l.b16 %v4170
        %v4267 = vunpack.c.l.b16 %v4171
        %v4268 = vunpack.c.l.b16 %v4172
        %v4269 = vunpack.c.l.b16 %v4173
        %v4270 = vunpack.c.l.b16 %v4174
        %v4271 = vunpack.c.l.b16 %v4175
        %v4272 = vunpack.c.l.b16 %v4176
        %v4273 = vunpack.c.l.b16 %v4177
        %v4274 = vunpack.c.l.b16 %v4178
        %v4275 = vunpack.c.l.b16 %v4179
        %v4276 = vunpack.c.l.b16 %v4180
        %v4277 = vunpack.c.l.b16 %v4181
        %v4278 = vunpack.c.l.b16 %v4182
        %v4279 = vunpack.c.l.b16 %v4183
        %v4280 = vunpack.c.l.b16 %v4184
        %v4281 = vunpack.c.l.b16 %v4185
        %v4282 = vunpack.c.l.b16 %v4186
        %v4283 = vunpack.c.l.b16 %v4187
        %v4284 = vunpack.c.l.b16 %v4188
        %v4285 = vunpack.c.l.b16 %v4189
        %v4286 = vunpack.c.l.b16 %v4190
        %v4287 = vunpack.c.l.b16 %v4191
        %v4288 = vpack.c.b16 %v4241, %v4240
        %v4289 = vpack.c.b16 %v4243, %v4242
        %v4290 = vpack.c.b16 %v4245, %v4244
        %v4291 = vpack.c.b16 %v4247, %v4246
        %v4292 = vpack.c.b16 %v4249, %v4248
        %v4293 = vpack.c.b16 %v4251, %v4250
        %v4294 = vpack.c.b16 %v4253, %v4252
        %v4295 = vpack.c.b16 %v4255, %v4254
        %v4296 = vpack.c.b16 %v4257, %v4256
        %v4297 = vpack.c.b16 %v4259, %v4258
        %v4298 = vpack.c.b16 %v4261, %v4260
        %v4299 = vpack.c.b16 %v4263, %v4262
        %v4300 = vpack.c.b16 %v4265, %v4264
        %v4301 = vpack.c.b16 %v4267, %v4266
        %v4302 = vpack.c.b16 %v4269, %v4268
        %v4303 = vpack.c.b16 %v4271, %v4270
        %v4304 = vpack.c.b16 %v4273, %v4272
        %v4305 = vpack.c.b16 %v4275, %v4274
        %v4306 = vpack.c.b16 %v4277, %v4276
        %v4307 = vpack.c.b16 %v4279, %v4278
        %v4308 = vpack.c.b16 %v4281, %v4280
        %v4309 = vpack.c.b16 %v4283, %v4282
        %v4310 = vpack.c.b16 %v4285, %v4284
        %v4311 = vpack.c.b16 %v4287, %v4286
        %4336 = vmatprep.subr.bf16.mxu0 0
        %4337 = vmatpush1.bf16.msra.mxu0 %v4288
        %4338 = vmatprep.subr.bf16.mxu0 0
        %4339 = vmatpush1.bf16.msra.mxu0 %v4289
        %4340 = vmatprep.subr.bf16.mxu0 0
        %4341 = vmatpush1.bf16.msra.mxu0 %v4290
        %4342 = vmatprep.subr.bf16.mxu0 0
        %4343 = vmatpush1.bf16.msra.mxu0 %v4291
        %4344 = vmatprep.subr.bf16.mxu0 0
        %4345 = vmatpush1.bf16.msra.mxu0 %v4292
        %4346 = vmatprep.subr.bf16.mxu0 0
        %4347 = vmatpush1.bf16.msra.mxu0 %v4293
        %4348 = vmatprep.subr.bf16.mxu0 0
        %4349 = vmatpush1.bf16.msra.mxu0 %v4294
        %4350 = vmatprep.subr.bf16.mxu0 0
        %4351 = vmatpush1.bf16.msra.mxu0 %v4295
        %4352 = vmatprep.subr.bf16.mxu0 0
        %4353 = vmatpush1.bf16.msra.mxu0 %v4296
        %4354 = vmatprep.subr.bf16.mxu0 0
        %4355 = vmatpush1.bf16.msra.mxu0 %v4297
        %4356 = vmatprep.subr.bf16.mxu0 0
        %4357 = vmatpush1.bf16.msra.mxu0 %v4298
        %4358 = vmatprep.subr.bf16.mxu0 0
        %4359 = vmatpush1.bf16.msra.mxu0 %v4299
        %4360 = vmatprep.subr.bf16.mxu0 0
        %4361 = vmatpush1.bf16.msra.mxu0 %v4300
        %4362 = vmatprep.subr.bf16.mxu0 0
        %4363 = vmatpush1.bf16.msra.mxu0 %v4301
        %4364 = vmatprep.subr.bf16.mxu0 0
        %4365 = vmatpush1.bf16.msra.mxu0 %v4302
        %4366 = vmatprep.subr.bf16.mxu0 0
        %4367 = vmatpush1.bf16.msra.mxu0 %v4303
        %4368 = vmatprep.mubr.bf16.mxu0 %v3994
        %4369 = vmatmul.mubr.bf16.gmra.mrb[0].mxu0 %v3943
        %v4370 = vpop.f32.mrb[0].mxu0
        %v4371 = vadd.f32 0.0, %v4370
        %v4372 = vpop.f32.mrb[0].mxu0
        %v4373 = vpop.f32.mrb[0].mxu0
        %v4374 = vadd.f32 0.0, %v4373
        %v4375 = vpop.f32.mrb[0].mxu0
        %4376 = vmatprep.mubr.bf16.mxu0 %v4006
        %4377 = vmatmul.mubr.bf16.gmra.mrb[0].mxu0 %v3944
        %v4378 = vpop.f32.mrb[0].mxu0
        %v4379 = vadd.f32 0.0, %v4378
        %v4380 = vpop.f32.mrb[0].mxu0
        %v4381 = vpop.f32.mrb[0].mxu0
        %v4382 = vadd.f32 0.0, %v4381
        %v4383 = vpop.f32.mrb[0].mxu0
        %4384 = vmatprep.mubr.bf16.mxu0 %v4018
        %4385 = vmatmul.mubr.bf16.gmra.mrb[0].mxu0 %v3945
        %v4386 = vpop.f32.mrb[0].mxu0
        %v4387 = vadd.f32 0.0, %v4386
        %v4388 = vpop.f32.mrb[0].mxu0
        %v4389 = vpop.f32.mrb[0].mxu0
        %v4390 = vadd.f32 0.0, %v4389
        %v4391 = vpop.f32.mrb[0].mxu0
        %4392 = vmatprep.mubr.bf16.mxu0 %v4030
        %4393 = vmatmul.mubr.bf16.gmra.mrb[0].mxu0 %v3946
        %v4394 = vpop.f32.mrb[0].mxu0
        %v4395 = vadd.f32 0.0, %v4394
        %v4396 = vpop.f32.mrb[0].mxu0
        %v4397 = vpop.f32.mrb[0].mxu0
        %v4398 = vadd.f32 0.0, %v4397
        %v4399 = vpop.f32.mrb[0].mxu0
        %4400 = vmatprep.mubr.bf16.mxu0 %v4042
        %4401 = vmatmul.mubr.bf16.gmra.mrb[0].mxu0 %v3947
        %v4402 = vpop.f32.mrb[0].mxu0
        %v4403 = vadd.f32 0.0, %v4402
        %v4404 = vpop.f32.mrb[0].mxu0
        %v4405 = vpop.f32.mrb[0].mxu0
        %v4406 = vadd.f32 0.0, %v4405
        %v4407 = vpop.f32.mrb[0].mxu0
        %4408 = vmatprep.mubr.bf16.mxu0 %v4054
        %4409 = vmatmul.mubr.bf16.gmra.mrb[0].mxu0 %v3948
        %v4410 = vpop.f32.mrb[0].mxu0
        %v4411 = vadd.f32 0.0, %v4410
        %v4412 = vpop.f32.mrb[0].mxu0
        %v4413 = vpop.f32.mrb[0].mxu0
        %v4414 = vadd.f32 0.0, %v4413
        %v4415 = vpop.f32.mrb[0].mxu0
        %4416 = vmatprep.mubr.bf16.mxu0 %v4066
        %4417 = vmatmul.mubr.bf16.gmra.mrb[0].mxu0 %v3949
        %v4418 = vpop.f32.mrb[0].mxu0
        %v4419 = vadd.f32 0.0, %v4418
        %v4420 = vpop.f32.mrb[0].mxu0
        %v4421 = vpop.f32.mrb[0].mxu0
        %v4422 = vadd.f32 0.0, %v4421
        %v4423 = vpop.f32.mrb[0].mxu0
        %4424 = vmatprep.mubr.bf16.mxu0 %v4078
        %4425 = vmatmul.mubr.bf16.gmra.mrb[0].mxu0 %v3950
        %v4426 = vpop.f32.mrb[0].mxu0
        %v4427 = vadd.f32 0.0, %v4426
        %v4428 = vpop.f32.mrb[0].mxu0
        %v4429 = vpop.f32.mrb[0].mxu0
        %v4430 = vadd.f32 0.0, %v4429
        %v4431 = vpop.f32.mrb[0].mxu0
        %4432 = vdwg.mxu0
        %4433 = vmatprep.subr.bf16.mxu0 0
        %4434 = vmatpush1.bf16.msra.mxu0 %v4304
        %4435 = vmatprep.subr.bf16.mxu0 0
        %4436 = vmatpush1.bf16.msra.mxu0 %v4305
        %4437 = vmatprep.subr.bf16.mxu0 0
        %4438 = vmatpush1.bf16.msra.mxu0 %v4306
        %4439 = vmatprep.subr.bf16.mxu0 0
        %4440 = vmatpush1.bf16.msra.mxu0 %v4307
        %4441 = vmatprep.subr.bf16.mxu0 0
        %4442 = vmatpush1.bf16.msra.mxu0 %v4308
        %4443 = vmatprep.subr.bf16.mxu0 0
        %4444 = vmatpush1.bf16.msra.mxu0 %v4309
        %4445 = vmatprep.subr.bf16.mxu0 0
        %4446 = vmatpush1.bf16.msra.mxu0 %v4310
        %4447 = vmatprep.subr.bf16.mxu0 0
        %4448 = vmatpush1.bf16.msra.mxu0 %v4311
        %4449 = vmatprep.subr.bf16.mxu0 0
        %4450 = vmatpush1.bf16.msra.mxu0 0
        %4451 = vmatprep.subr.bf16.mxu0 0
        %4452 = vmatpush1.bf16.msra.mxu0 0
        %4453 = vmatprep.subr.bf16.mxu0 0
        %4454 = vmatpush1.bf16.msra.mxu0 0
        %4455 = vmatprep.subr.bf16.mxu0 0
        %4456 = vmatpush1.bf16.msra.mxu0 0
        %4457 = vmatprep.subr.bf16.mxu0 0
        %4458 = vmatpush1.bf16.msra.mxu0 0
        %4459 = vmatprep.subr.bf16.mxu0 0
        %4460 = vmatpush1.bf16.msra.mxu0 0
        %4461 = vmatprep.subr.bf16.mxu0 0
        %4462 = vmatpush1.bf16.msra.mxu0 0
        %4463 = vmatprep.subr.bf16.mxu0 0
        %4464 = vmatpush1.bf16.msra.mxu0 0
        %4465 = vmatprep.mubr.bf16.mxu0 0
        %4466 = vmatmul.mubr.bf16.gmra.mrb[0].mxu0 %v4113
        %v4467 = vpop.f32.mrb[0].mxu0
        %v4468 = vadd.f32 %v4371, %v4467
        %v4469 = vpop.f32.mrb[0].mxu0
        %v4470 = vpop.f32.mrb[0].mxu0
        %v4471 = vadd.f32 %v4374, %v4470
        %v4472 = vpop.f32.mrb[0].mxu0
        %4473 = vmatprep.mubr.bf16.mxu0 0
        %4474 = vmatmul.mubr.bf16.gmra.mrb[0].mxu0 %v4116
        %v4475 = vpop.f32.mrb[0].mxu0
        %v4476 = vadd.f32 %v4379, %v4475
        %v4477 = vpop.f32.mrb[0].mxu0
        %v4478 = vpop.f32.mrb[0].mxu0
        %v4479 = vadd.f32 %v4382, %v4478
        %v4480 = vpop.f32.mrb[0].mxu0
        %4481 = vmatprep.mubr.bf16.mxu0 0
        %4482 = vmatmul.mubr.bf16.gmra.mrb[0].mxu0 %v4119
        %v4483 = vpop.f32.mrb[0].mxu0
        %v4484 = vadd.f32 %v4387, %v4483
        %v4485 = vpop.f32.mrb[0].mxu0
        %v4486 = vpop.f32.mrb[0].mxu0
        %v4487 = vadd.f32 %v4390, %v4486
        %v4488 = vpop.f32.mrb[0].mxu0
        %4489 = vmatprep.mubr.bf16.mxu0 0
        %4490 = vmatmul.mubr.bf16.gmra.mrb[0].mxu0 %v4122
        %v4491 = vpop.f32.mrb[0].mxu0
        %v4492 = vadd.f32 %v4395, %v4491
        %v4493 = vpop.f32.mrb[0].mxu0
        %v4494 = vpop.f32.mrb[0].mxu0
        %v4495 = vadd.f32 %v4398, %v4494
        %v4496 = vpop.f32.mrb[0].mxu0
        %4497 = vmatprep.mubr.bf16.mxu0 0
        %4498 = vmatmul.mubr.bf16.gmra.mrb[0].mxu0 %v4125
        %v4499 = vpop.f32.mrb[0].mxu0
        %v4500 = vadd.f32 %v4403, %v4499
        %v4501 = vpop.f32.mrb[0].mxu0
        %v4502 = vpop.f32.mrb[0].mxu0
        %v4503 = vadd.f32 %v4406, %v4502
        %v4504 = vpop.f32.mrb[0].mxu0
        %4505 = vmatprep.mubr.bf16.mxu0 0
        %4506 = vmatmul.mubr.bf16.gmra.mrb[0].mxu0 %v4128
        %v4507 = vpop.f32.mrb[0].mxu0
        %v4508 = vadd.f32 %v4411, %v4507
        %v4509 = vpop.f32.mrb[0].mxu0
        %v4510 = vpop.f32.mrb[0].mxu0
        %v4511 = vadd.f32 %v4414, %v4510
        %v4512 = vpop.f32.mrb[0].mxu0
        %4513 = vmatprep.mubr.bf16.mxu0 0
        %4514 = vmatmul.mubr.bf16.gmra.mrb[0].mxu0 %v4131
        %v4515 = vpop.f32.mrb[0].mxu0
        %v4516 = vadd.f32 %v4419, %v4515
        %v4517 = vpop.f32.mrb[0].mxu0
        %v4518 = vpop.f32.mrb[0].mxu0
        %v4519 = vadd.f32 %v4422, %v4518
        %v4520 = vpop.f32.mrb[0].mxu0
        %4521 = vmatprep.mubr.bf16.mxu0 0
        %4522 = vmatmul.mubr.bf16.gmra.mrb[0].mxu0 %v4134
        %v4523 = vpop.f32.mrb[0].mxu0
        %v4524 = vadd.f32 %v4427, %v4523
        %v4525 = vpop.f32.mrb[0].mxu0
        %v4526 = vpop.f32.mrb[0].mxu0
        %v4527 = vadd.f32 %v4430, %v4526
        %v4528 = vpop.f32.mrb[0].mxu0
        %4529 = vdwg.mxu0
        %v4530 = vadd.f32 %v3816, %v4468
        %v4531 = vadd.f32 %v3819, %v4471
        %v4532 = vadd.f32 %v3824, %v4476
        %v4533 = vadd.f32 %v3827, %v4479
        %v4534 = vadd.f32 %v3832, %v4484
        %v4535 = vadd.f32 %v3835, %v4487
        %v4536 = vadd.f32 %v3840, %v4492
        %v4537 = vadd.f32 %v3843, %v4495
        %v4538 = vadd.f32 %v3848, %v4500
        %v4539 = vadd.f32 %v3851, %v4503
        %v4540 = vadd.f32 %v3856, %v4508
        %v4541 = vadd.f32 %v3859, %v4511
        %v4542 = vadd.f32 %v3864, %v4516
        %v4543 = vadd.f32 %v3867, %v4519
        %v4544 = vadd.f32 %v3872, %v4524
        %v4545 = vadd.f32 %v3875, %v4527
        %v4546 = vld [vmem:[#allocation12] sm:$0x1]
        %v4548 = vlaneseq
        %v4549 = vshrl.u32 %v4548, 7
        %v4550 = vsub.s32 0, %v4549
        %v4551 = vrot.slane %v4546, %v4550
        %v4553 = vmul.f32 %v4530, %v4551
        %v4554 = vmul.f32 %v4531, %v4551
        %v4555 = vmul.f32 %v4532, %v4551
        %v4556 = vmul.f32 %v4533, %v4551
        %v4557 = vmul.f32 %v4534, %v4551
        %v4558 = vmul.f32 %v4535, %v4551
        %v4559 = vmul.f32 %v4536, %v4551
        %v4560 = vmul.f32 %v4537, %v4551
        %v4561 = vmul.f32 %v4538, %v4551
        %v4562 = vmul.f32 %v4539, %v4551
        %v4563 = vmul.f32 %v4540, %v4551
        %v4564 = vmul.f32 %v4541, %v4551
        %v4565 = vmul.f32 %v4542, %v4551
        %v4566 = vmul.f32 %v4543, %v4551
        %v4567 = vmul.f32 %v4544, %v4551
        %v4568 = vmul.f32 %v4545, %v4551
        %v4569 = vld [vmem:[#allocation14] sm:$0x1]
        %v4571 = vlaneseq
        %v4572 = vshrl.u32 %v4571, 7
        %v4573 = vsub.s32 0, %v4572
        %v4574 = vrot.slane %v4569, %v4573
        %v4576 = vadd.f32 %v4553, %v4574
        %v4577 = vadd.f32 %v4554, %v4574
        %v4578 = vadd.f32 %v4555, %v4574
        %v4579 = vadd.f32 %v4556, %v4574
        %v4580 = vadd.f32 %v4557, %v4574
        %v4581 = vadd.f32 %v4558, %v4574
        %v4582 = vadd.f32 %v4559, %v4574
        %v4583 = vadd.f32 %v4560, %v4574
        %v4584 = vadd.f32 %v4561, %v4574
        %v4585 = vadd.f32 %v4562, %v4574
        %v4586 = vadd.f32 %v4563, %v4574
        %v4587 = vadd.f32 %v4564, %v4574
        %v4588 = vadd.f32 %v4565, %v4574
        %v4589 = vadd.f32 %v4566, %v4574
        %v4590 = vadd.f32 %v4567, %v4574
        %v4591 = vadd.f32 %v4568, %v4574
        %s4592 = sadd.s32 %s392, 2
        %s4593 = smul.u32 %s4592, 3
        %s4594 = smul.addr %s4593, 4
        %s4595 = scalar_lea.vmem %s335, %s4594 [#allocation3]
        %v4596 = vld [vmem:[%s4595] sm:$0xf]
        %v4597 = vld [vmem:[%s4595 + $0x4] sm:$0xf]
        %v4598 = vld [vmem:[%s4595 + $0x8] sm:$0x1]
        %v4599 = vld [vmem:[%s4595 + $0xc] sm:$0xf]
        %v4600 = vld [vmem:[%s4595 + $0x10] sm:$0xf]
        %v4601 = vld [vmem:[%s4595 + $0x14] sm:$0x1]
        %v4602 = vld [vmem:[%s4595 + $0x18] sm:$0xf]
        %v4603 = vld [vmem:[%s4595 + $0x1c] sm:$0xf]
        %v4604 = vld [vmem:[%s4595 + $0x20] sm:$0x1]
        %v4605 = vld [vmem:[%s4595 + $0x24] sm:$0xf]
        %v4606 = vld [vmem:[%s4595 + $0x28] sm:$0xf]
        %v4607 = vld [vmem:[%s4595 + $0x2c] sm:$0x1]
        %v4608 = vld [vmem:[%s4595 + $0x30] sm:$0xf]
        %v4609 = vld [vmem:[%s4595 + $0x34] sm:$0xf]
        %v4610 = vld [vmem:[%s4595 + $0x38] sm:$0x1]
        %v4611 = vld [vmem:[%s4595 + $0x3c] sm:$0xf]
        %v4612 = vld [vmem:[%s4595 + $0x40] sm:$0xf]
        %v4613 = vld [vmem:[%s4595 + $0x44] sm:$0x1]
        %v4614 = vld [vmem:[%s4595 + $0x48] sm:$0xf]
        %v4615 = vld [vmem:[%s4595 + $0x4c] sm:$0xf]
        %v4616 = vld [vmem:[%s4595 + $0x50] sm:$0x1]
        %v4617 = vld [vmem:[%s4595 + $0x54] sm:$0xf]
        %v4618 = vld [vmem:[%s4595 + $0x58] sm:$0xf]
        %v4619 = vld [vmem:[%s4595 + $0x5c] sm:$0x1]
        %v4620 = vunpack.c.l.bf16 %v4596
        %v4621 = vunpack.c.l.bf16 %v4597
        %v4622 = vunpack.c.l.bf16 %v4598
        %v4623 = vunpack.c.l.bf16 %v4599
        %v4624 = vunpack.c.l.bf16 %v4600
        %v4625 = vunpack.c.l.bf16 %v4601
        %v4626 = vunpack.c.l.bf16 %v4602
        %v4627 = vunpack.c.l.bf16 %v4603
        %v4628 = vunpack.c.l.bf16 %v4604
        %v4629 = vunpack.c.l.bf16 %v4605
        %v4630 = vunpack.c.l.bf16 %v4606
        %v4631 = vunpack.c.l.bf16 %v4607
        %v4632 = vunpack.c.l.bf16 %v4608
        %v4633 = vunpack.c.l.bf16 %v4609
        %v4634 = vunpack.c.l.bf16 %v4610
        %v4635 = vunpack.c.l.bf16 %v4611
        %v4636 = vunpack.c.l.bf16 %v4612
        %v4637 = vunpack.c.l.bf16 %v4613
        %v4638 = vunpack.c.l.bf16 %v4614
        %v4639 = vunpack.c.l.bf16 %v4615
        %v4640 = vunpack.c.l.bf16 %v4616
        %v4641 = vunpack.c.l.bf16 %v4617
        %v4642 = vunpack.c.l.bf16 %v4618
        %v4643 = vunpack.c.l.bf16 %v4619
        %vm4668 = vcmask 1046528
        %v4669 = vrot.slane %v4620, 1
        %v4670 = vrot.slane %v4621, 1
        %v4671 = vsel %vm4668, %v4669, %v4670
        %v4672 = vrot.slane %v4622, 1
        %v4673 = vsel %vm4668, %v4670, %v4672
        %v4674 = vrot.slane %v4623, 1
        %v4675 = vrot.slane %v4624, 1
        %v4676 = vsel %vm4668, %v4674, %v4675
        %v4677 = vrot.slane %v4625, 1
        %v4678 = vsel %vm4668, %v4675, %v4677
        %v4679 = vrot.slane %v4626, 1
        %v4680 = vrot.slane %v4627, 1
        %v4681 = vsel %vm4668, %v4679, %v4680
        %v4682 = vrot.slane %v4628, 1
        %v4683 = vsel %vm4668, %v4680, %v4682
        %v4684 = vrot.slane %v4629, 1
        %v4685 = vrot.slane %v4630, 1
        %v4686 = vsel %vm4668, %v4684, %v4685
        %v4687 = vrot.slane %v4631, 1
        %v4688 = vsel %vm4668, %v4685, %v4687
        %v4689 = vrot.slane %v4632, 1
        %v4690 = vrot.slane %v4633, 1
        %v4691 = vsel %vm4668, %v4689, %v4690
        %v4692 = vrot.slane %v4634, 1
        %v4693 = vsel %vm4668, %v4690, %v4692
        %v4694 = vrot.slane %v4635, 1
        %v4695 = vrot.slane %v4636, 1
        %v4696 = vsel %vm4668, %v4694, %v4695
        %v4697 = vrot.slane %v4637, 1
        %v4698 = vsel %vm4668, %v4695, %v4697
        %v4699 = vrot.slane %v4638, 1
        %v4700 = vrot.slane %v4639, 1
        %v4701 = vsel %vm4668, %v4699, %v4700
        %v4702 = vrot.slane %v4640, 1
        %v4703 = vsel %vm4668, %v4700, %v4702
        %v4704 = vrot.slane %v4641, 1
        %v4705 = vrot.slane %v4642, 1
        %v4706 = vsel %vm4668, %v4704, %v4705
        %v4707 = vrot.slane %v4643, 1
        %v4708 = vsel %vm4668, %v4705, %v4707
        %v4725 = vadd.f32 %v4576, %v4671
        %v4726 = vadd.f32 %v4577, %v4673
        %v4727 = vadd.f32 %v4578, %v4676
        %v4728 = vadd.f32 %v4579, %v4678
        %v4729 = vadd.f32 %v4580, %v4681
        %v4730 = vadd.f32 %v4581, %v4683
        %v4731 = vadd.f32 %v4582, %v4686
        %v4732 = vadd.f32 %v4583, %v4688
        %v4733 = vadd.f32 %v4584, %v4691
        %v4734 = vadd.f32 %v4585, %v4693
        %v4735 = vadd.f32 %v4586, %v4696
        %v4736 = vadd.f32 %v4587, %v4698
        %v4737 = vadd.f32 %v4588, %v4701
        %v4738 = vadd.f32 %v4589, %v4703
        %v4739 = vadd.f32 %v4590, %v4706
        %v4740 = vadd.f32 %v4591, %v4708
        %v4741 = vmax.f32 %v4725, 0.0
        %v4742 = vmax.f32 %v4726, 0.0
        %v4743 = vmax.f32 %v4727, 0.0
        %v4744 = vmax.f32 %v4728, 0.0
        %v4745 = vmax.f32 %v4729, 0.0
        %v4746 = vmax.f32 %v4730, 0.0
        %v4747 = vmax.f32 %v4731, 0.0
        %v4748 = vmax.f32 %v4732, 0.0
        %v4749 = vmax.f32 %v4733, 0.0
        %v4750 = vmax.f32 %v4734, 0.0
        %v4751 = vmax.f32 %v4735, 0.0
        %v4752 = vmax.f32 %v4736, 0.0
        %v4753 = vmax.f32 %v4737, 0.0
        %v4754 = vmax.f32 %v4738, 0.0
        %v4755 = vmax.f32 %v4739, 0.0
        %v4756 = vmax.f32 %v4740, 0.0
        %4757 = vst [vmem:[%s389] sm:$0xff] %v4741
        %4758 = vst [vmem:[%s389 + $0x8] sm:$0xff] %v4742
        %4759 = vst [vmem:[%s389 + $0x10] sm:$0xff] %v4743
        %4760 = vst [vmem:[%s389 + $0x18] sm:$0xff] %v4744
        %4761 = vst [vmem:[%s389 + $0x20] sm:$0xff] %v4745
        %4762 = vst [vmem:[%s389 + $0x28] sm:$0xff] %v4746
        %4763 = vst [vmem:[%s389 + $0x30] sm:$0xff] %v4747
        %4764 = vst [vmem:[%s389 + $0x38] sm:$0xff] %v4748
        %4765 = vst [vmem:[%s389 + $0x40] sm:$0xff] %v4749
        %4766 = vst [vmem:[%s389 + $0x48] sm:$0xff] %v4750
        %4767 = vst [vmem:[%s389 + $0x50] sm:$0xff] %v4751
        %4768 = vst [vmem:[%s389 + $0x58] sm:$0xff] %v4752
        %4769 = vst [vmem:[%s389 + $0x60] sm:$0xff] %v4753
        %4770 = vst [vmem:[%s389 + $0x68] sm:$0xff] %v4754
        %4771 = vst [vmem:[%s389 + $0x70] sm:$0xff] %v4755
        %4772 = vst [vmem:[%s389 + $0x78] sm:$0xff] %v4756
        %s4773 = sand.u32 %s201, 1
        %s4774 = scalar_lea.sflag [#allocation5], %s4773
        %s4775 = sand.u32 %s201, 1
        %s4776 = smul.addr %s4775, 128
        %s4777 = scalar_lea.vmem [#allocation15], %s4776
        // Predicated region
        $region77: #{tpu_custom_call.1} parent=47 // pred_check
          %p4778 = pneg %p211
        $region78: #{tpu_custom_call.1} parent=47 // pred_check_branch
          %4780 = sbr.rel (%p4778) target = $region80
        $region79: #{tpu_custom_call.1} parent=47 // pred_region
          %s4781 = smul.u32 8, %s32
          %s4783 = ssub.s32 2048, 2048
          %4784 = vsyncadd %s4774, %s4783
          %s4785 = smul.addr %s4781, 2
          %s4786 = smul.addr %s31, 32
          %s4787 = sadd.s32 %s4785, %s4786
          %s4788 = smul.addr %s4787, 128
          %s4789 = scalar_lea.hbm %s7, %s4788
          %s4790 = sshll.u32 %s4777, 4
          %s4791 = int_to_ptr.vmem [resolvable:$true] %s4790
          %4796 = dma.vmem_to_hbm [thread:$0]  %s4791, 2048, %s4789, %s4774, 128, 128, 8
        $region80: #{tpu_custom_call.1} parent=47 // pred_fallthru
          _
      $region48: #{tpu_custom_call.1} parent=5 // pred_fallthru
        _
      %p4797 = scmp.le.s32.totalorder 2, %s22
      // Predicated region
      $region81: #{tpu_custom_call.1} parent=5 // pred_check
        %p4798 = pneg %p4797
      $region82: #{tpu_custom_call.1} parent=5 // pred_check_branch
        %4800 = sbr.rel (%p4798) target = $region84
      $region83: #{tpu_custom_call.1} parent=5 // pred_region
        %s4801 = ssub.s32 %s22, 2
        // Predicated region
        $region85: #{tpu_custom_call.1} parent=83 // pred_check
          %p4802 = pneg %p217
        $region86: #{tpu_custom_call.1} parent=83 // pred_check_branch
          %4804 = sbr.rel (%p4802) target = $region88
        $region87: #{tpu_custom_call.1} parent=83 // pred_region
          %s4805 = sand.u32 %s202, 1
          %s4806 = scalar_lea.sflag [#allocation5], %s4805
          %s4807 = sand.u32 %s202, 1
          %s4808 = smul.addr %s4807, 128
          %s4809 = scalar_lea.vmem [#allocation15], %s4808
          %4810 = dma.done %s4806, 2048
        $region88: #{tpu_custom_call.1} parent=83 // pred_fallthru
          _
      $region84: #{tpu_custom_call.1} parent=5 // pred_fallthru
        _
    $region6: #{tpu_custom_call.1} parent=1 // loop_footer
      %s26 = sadd.s32 1, %s22
    $region7: #{tpu_custom_call.1} parent=1 // loop_footer_branch
      %21 = sbr.rel target = $region3
    $region8: #{tpu_custom_call.1} parent=1 // loop_exit
      _
    %4811 = vsyncpa [#allocation4], 1
    %s4812 = scalar_lea.sflag [#allocation4], 1
    %4813 = vsyncpa %s4812, 1
    %4814 = vsyncpa [#allocation7], 1
    %4815 = vsyncpa [#allocation10], 1
    %4816 = vsyncpa [#allocation13], 1
    %4817 = vsyncpa [#allocation5], 1
    %s4818 = scalar_lea.sflag [#allocation5], 1
    %4819 = vsyncpa %s4818, 1

</llo_original>
